<compile_context>
chip_gen: v5e
topology: v5e:2x2
jax: 0.10.0
libtpu: 0.0.40
codegen_flags: <defaults>
</compile_context>

<pallas_src>
import functools

import jax
import jax.numpy as jnp
from jax.experimental import pallas as pl
from jax.experimental.pallas import tpu as pltpu

EPS = 1e-5
_LANE = 128
_WIDTHS = (1024, 512, 256, 128, 64, 1)

# Memo: does this jax install accept pipeline_mode=pl.Buffered(1) on resident
# blocks?  (1 = yes/single-buffered weights, 2 = no/default double buffering.)
_WEIGHT_BUFFER_MEMO = None


def _round_up(n, m):
    return ((n + m - 1) // m) * m


def _cdiv(a, b):
    return -(-a // b)


# --------------------------------------------------------------------------
# Kernel: one batch tile, all 6 (BN-folded) layers fused.
# --------------------------------------------------------------------------
def _mlp_kernel(x_ref,
                w1_ref, c1_ref, w2_ref, c2_ref, w3_ref, c3_ref,
                w4_ref, c4_ref, w5_ref, c5_ref, w6_ref, c6_ref,
                o_ref):
    def layer(h, w_ref, c_ref):
        # MXU matmul with f32 accumulation; bias/shift kept in f32.
        a = jnp.dot(h, w_ref[...], preferred_element_type=jnp.float32)
        a = a + c_ref[...]
        # ReLU, then cast back to the compute dtype for the next matmul.
        return jnp.maximum(a, 0.0).astype(w_ref.dtype)

    h = layer(x_ref[...], w1_ref, c1_ref)   # fc1 + BN1 + ReLU
    h = layer(h, w2_ref, c2_ref)            # fc2 + BN2 + ReLU
    h = layer(h, w3_ref, c3_ref)            # fc3 + BN3 + ReLU
    h = layer(h, w4_ref, c4_ref)            # fc4 + BN4 + ReLU
    h = layer(h, w5_ref, c5_ref)            # fc5 + BN5 + ReLU (out padded to 128)

    # fc6 PRE-activation, stored as a lane-dense (TB, 128) f32 slab (unmasked
    # vst).  The final ReLU + Sigmoid only concern column 0 and are applied in
    # the wrapper after the slice -> no per-tile exp over 128 padded lanes.
    o_ref[...] = (jnp.dot(h, w6_ref[...], preferred_element_type=jnp.float32)
                  + c6_ref[...])


# --------------------------------------------------------------------------
# BN folding
# --------------------------------------------------------------------------
def _fold_bn_into_linear(w, b, gamma, beta, mean, var):
    """y = (xW + b - mean)/sqrt(var+eps)*gamma + beta  ==  x(W*s) + c."""
    s = gamma / jnp.sqrt(var + EPS)
    w_folded = w * s[None, :]
    c = (b - mean) * s + beta
    return w_folded, c


# --------------------------------------------------------------------------
# Generation-aware VMEM / tile sizing
# --------------------------------------------------------------------------
def _device_budget():
    """(vmem_budget_bytes, default_batch_tile, want_even_tile_count)."""
    try:
        kind = jax.devices()[0].device_kind.lower()
    except Exception:  # pragma: no cover - no devices visible
        kind = ""
    if "7x" in kind or "v7" in kind:
        # v7x: 64 MiB VMEM *per TensorCore*; the "parallel" grid replicates
        # the resident weights into both cores' VMEM -> budget per-TC.
        return 48 << 20, 1024, True
    if "v5" in kind or "v6" in kind:
        # v5e/v5p/v6e: 128 MiB physical VMEM per core.
        return 100 << 20, 2048, False
    # Unknown / older generation: conservative.
    return 32 << 20, 512, False


def _select_config(B, D_pad, itemsize, block_b, weight_buffers):
    """Pick (batch_tile, num_tiles, vmem_limit_bytes)."""
    budget, default_tb, want_even = _device_budget()

    dims = (D_pad, 1024, 512, 256, 128, _LANE, _LANE)
    resident = weight_buffers * itemsize * sum(
        dims[i] * dims[i + 1] for i in range(6))
    resident += 2 * 4 * sum(dims[1:])          # f32 bias rows (tiny)

    per_row = (2 * D_pad * itemsize            # x tile (double-buffered DMA)
               + 2 * _LANE * 4                 # out tile (double-buffered DMA)
               + (1024 + 512 + 256) * 4        # f32 pre-activations in flight
               + (1024 + 512) * itemsize)      # compute-dtype activations
    headroom = 4 << 20

    avail = budget - headroom - resident
    if avail < 8 * per_row:
        # Resident fc1 almost fills the budget (very large input_dim).
        # TODO(synk): K-tile fc1 here; for now use the smallest legal tile.
        tb_cap = 8
    else:
        tb_cap = max(8, (avail // per_row) // 8 * 8)

    block_b = default_tb if block_b is None else block_b
    block_b = max(8, min(_round_up(block_b, 8), tb_cap))

    # Near-equal tiles (no mostly-padded tail tile for awkward batch sizes).
    n_tiles = _cdiv(B, block_b)
    if want_even:
        if n_tiles == 1 and B >= 16:
            n_tiles = 2                       # give both v7x TCs work
        elif n_tiles > 1 and n_tiles % 2 == 1:
            n_tiles += 1                      # balanced megacore split
    tb = _round_up(_cdiv(B, n_tiles), 8)
    return tb, n_tiles, budget


# --------------------------------------------------------------------------
# Jitted forward implementation
# --------------------------------------------------------------------------
@functools.partial(
    jax.jit,
    static_argnames=("tb", "n_tiles", "compute_dtype", "vmem_limit_bytes",
                     "weight_buffers"))
def _forward_impl(x, params, *, tb, n_tiles, compute_dtype, vmem_limit_bytes,
                  weight_buffers):
    B, D = x.shape
    f32 = jnp.float32

    # ---- fold eval-mode BatchNorm into the first five linear layers ----
    ws, cs = [], []
    for i in range(1, 6):
        w_f, c_f = _fold_bn_into_linear(
            params[f"w{i}"], params[f"b{i}"],
            params[f"bn{i}_gamma"], params[f"bn{i}_beta"],
            params[f"bn{i}_mean"], params[f"bn{i}_var"])
        ws.append(w_f)
        cs.append(c_f)
    ws.append(params["w6"])
    cs.append(params["b6"])

    # ---- pad fc1 K-dim (input features) to a lane multiple ----
    D_pad = _round_up(D, _LANE)
    if D_pad != D:
        ws[0] = jnp.pad(ws[0], ((0, D_pad - D), (0, 0)))
        x = jnp.pad(x, ((0, 0), (0, D_pad - D)))

    # ---- pad fc5 output / fc6 to full 128-lane width (lane-dense store) ----
    h5 = ws[4].shape[1]                       # 64
    h5_pad = _round_up(h5, _LANE)             # 128
    ws[4] = jnp.pad(ws[4], ((0, 0), (0, h5_pad - h5)))
    cs[4] = jnp.pad(cs[4], ((0, h5_pad - h5),))
    ws[5] = jnp.pad(ws[5], ((0, h5_pad - h5), (0, _LANE - ws[5].shape[1])))
    cs[5] = jnp.pad(cs[5], ((0, _LANE - cs[5].shape[0]),))

    # ---- batch padding to tb * n_tiles ----
    B_pad = tb * n_tiles
    if B_pad != B:
        x = jnp.pad(x, ((0, B_pad - B), (0, 0)))

    # ---- dtypes: matmul operands in compute_dtype, bias/shift in f32 ----
    x = x.astype(compute_dtype)
    ws = [w.astype(compute_dtype) for w in ws]
    cs = [c.reshape(1, -1).astype(f32) for c in cs]

    # ---- specs: x / out tiled over the batch grid, weights resident ----
    def resident(arr):
        if weight_buffers == 1:
            # Block index never changes -> a single VMEM buffer is enough.
            return pl.BlockSpec(arr.shape, lambda i: (0, 0),
                                pipeline_mode=pl.Buffered(1))
        return pl.BlockSpec(arr.shape, lambda i: (0, 0))

    in_specs = [pl.BlockSpec((tb, D_pad), lambda i: (i, 0))]
    operands = [x]
    for w, c in zip(ws, cs):
        in_specs += [resident(w), resident(c)]
        operands += [w, c]
    out_spec = pl.BlockSpec((tb, _LANE), lambda i: (i, 0))

    # ---- advisory cost estimate ----
    dims = (D_pad, 1024, 512, 256, 128, h5_pad, _LANE)
    flops = 2 * B_pad * sum(dims[i] * dims[i + 1] for i in range(6))
    bytes_accessed = (x.size * x.dtype.itemsize
                      + B_pad * _LANE * 4
                      + sum(w.size * w.dtype.itemsize for w in ws)
                      + sum(c.size * 4 for c in cs))

    out = pl.pallas_call(
        _mlp_kernel,
        out_shape=jax.ShapeDtypeStruct((B_pad, _LANE), f32),
        grid=(n_tiles,),
        in_specs=in_specs,
        out_specs=out_spec,
        compiler_params=pltpu.CompilerParams(
            dimension_semantics=("parallel",),   # megacore shards the batch
            vmem_limit_bytes=vmem_limit_bytes,
        ),
        cost_estimate=pl.CostEstimate(
            flops=flops,
            transcendentals=0,
            bytes_accessed=bytes_accessed,
        ),
    )(*operands)

    # Drop padded rows / padded output lanes, then apply the final
    # ReLU + Sigmoid on the single live column (fused into the slice by XLA).
    logits = out[:B, :1]
    return jax.nn.sigmoid(jnp.maximum(logits, 0.0))


# --------------------------------------------------------------------------
# Public wrapper (picks tiling per TPU generation, handles Buffered(1) fallback)
# --------------------------------------------------------------------------
def baseline_large_forward(x, params, *, block_b=None,
                           compute_dtype=jnp.bfloat16):
    """x: (B, D) float32.  Returns (B, 1) float32 (sigmoid probabilities).

    compute_dtype defaults to bf16: the MXU is bf16-native on v5e, v6e and
    v7x, doubling matmul throughput and halving resident-weight VMEM / x DMA
    versus f32 (accumulation stays f32).  Pass jnp.float32 for bit-tight
    results.
    """
    global _WEIGHT_BUFFER_MEMO
    B, D = x.shape
    itemsize = jnp.dtype(compute_dtype).itemsize

    order = (1, 2) if _WEIGHT_BUFFER_MEMO is None else (_WEIGHT_BUFFER_MEMO,)
    last_err = None
    for wb in order:
        tb, n_tiles, vmem_limit = _select_config(
            B, _round_up(D, _LANE), itemsize, block_b, wb)
        try:
            out = _forward_impl(x, params, tb=tb, n_tiles=n_tiles,
                                compute_dtype=compute_dtype,
                                vmem_limit_bytes=vmem_limit,
                                weight_buffers=wb)
            _WEIGHT_BUFFER_MEMO = wb
            return out
        except Exception as e:  # pl.Buffered(1) unsupported -> default buffering
            last_err = e
    raise last_err


# --------------------------------------------------------------------------
# Synthetic parameters matching the PyTorch module's shapes / init scheme.
# Linear: xavier_normal_ (gain=1), bias zero.  BN running stats are given
# nontrivial synthetic values to exercise the folding.
# --------------------------------------------------------------------------
def init_params(key, input_dim):
    dims = (input_dim,) + _WIDTHS
    keys = jax.random.split(key, 16)
    params = {}
    ki = 0
    for i in range(6):
        fan_in, fan_out = dims[i], dims[i + 1]
        std = (2.0 / (fan_in + fan_out)) ** 0.5
        params[f"w{i + 1}"] = std * jax.random.normal(
            keys[ki], (fan_in, fan_out), dtype=jnp.float32)
        params[f"b{i + 1}"] = jnp.zeros((fan_out,), jnp.float32)
        ki += 1
    for i in range(5):
        n = dims[i + 1]
        kg, kb, km, kv = jax.random.split(keys[ki], 4)
        ki += 1
        params[f"bn{i + 1}_gamma"] = 1.0 + 0.2 * jax.random.normal(kg, (n,), jnp.float32)
        params[f"bn{i + 1}_beta"] = 0.1 * jax.random.normal(kb, (n,), jnp.float32)
        params[f"bn{i + 1}_mean"] = 0.1 * jax.random.normal(km, (n,), jnp.float32)
        params[f"bn{i + 1}_var"] = 0.5 + jax.random.uniform(kv, (n,), jnp.float32)
    return params


def _reference(x, params):
    """Pure-JAX reference with the same eval-mode semantics."""
    def bn(h, i):
        return ((h - params[f"bn{i}_mean"]) / jnp.sqrt(params[f"bn{i}_var"] + EPS)
                * params[f"bn{i}_gamma"] + params[f"bn{i}_beta"])
    h = x
    for i in range(1, 6):
        h = jnp.maximum(bn(h @ params[f"w{i}"] + params[f"b{i}"], i), 0.0)
    h = jnp.maximum(h @ params["w6"] + params["b6"], 0.0)
    return jax.nn.sigmoid(h)


if __name__ == "__main__":
    key = jax.random.PRNGKey(0)
    kx, kp = jax.random.split(key)

    B, D = 8, 32  # small test shapes: batch=8, input_dim=32
    x = jax.random.normal(kx, (B, D), dtype=jnp.float32)
    params = init_params(kp, D)
    ref = _reference(x, params)

    # default bf16 compute path (v5e/v6e/v7x fast path), f32 accumulation
    out = jax.block_until_ready(baseline_large_forward(x, params))
    assert out.shape == (B, 1)
    assert jnp.allclose(out, ref, atol=3e-2, rtol=3e-2), (out, ref)

    # f32 path (tight correctness check)
    out_f32 = jax.block_until_ready(
        baseline_large_forward(x, params, compute_dtype=jnp.float32))
    assert out_f32.shape == (B, 1)
    assert jnp.allclose(out_f32, ref, atol=1e-4, rtol=1e-4), (out_f32, ref)

    # batch not a multiple of 8 -> exercises row padding / near-equal tiling
    x5 = x[:5]
    out5 = jax.block_until_ready(
        baseline_large_forward(x5, params, compute_dtype=jnp.float32))
    assert out5.shape == (5, 1)
    assert jnp.allclose(out5, _reference(x5, params), atol=1e-4, rtol=1e-4)

    print("KERNEL_OK")
</pallas_src>

<mosaic_0001>
module attributes {stable_mosaic.version = 11 : i64} {
  func.func @_mlp_kernel(%arg0: i32, %arg1: memref<8x128xbf16, #tpu.memory_space<vmem>>, %arg2: memref<128x1024xbf16, #tpu.memory_space<vmem>>, %arg3: memref<1x1024xf32, #tpu.memory_space<vmem>>, %arg4: memref<1024x512xbf16, #tpu.memory_space<vmem>>, %arg5: memref<1x512xf32, #tpu.memory_space<vmem>>, %arg6: memref<512x256xbf16, #tpu.memory_space<vmem>>, %arg7: memref<1x256xf32, #tpu.memory_space<vmem>>, %arg8: memref<256x128xbf16, #tpu.memory_space<vmem>>, %arg9: memref<1x128xf32, #tpu.memory_space<vmem>>, %arg10: memref<128x128xbf16, #tpu.memory_space<vmem>>, %arg11: memref<1x128xf32, #tpu.memory_space<vmem>>, %arg12: memref<128x128xbf16, #tpu.memory_space<vmem>>, %arg13: memref<1x128xf32, #tpu.memory_space<vmem>>, %arg14: memref<8x128xf32, #tpu.memory_space<vmem>>) attributes {dimension_semantics = [#tpu.dimension_semantics<parallel>], iteration_bounds = array<i64: 1>, scalar_prefetch = 0 : i64, scratch_operands = 0 : i64, tpu.core_type = #tpu.core_type<tc>, window_params = [{transform_indices = @transform_0, window_bounds = array<i64: 8, 128>}, {pipeline_mode = #tpu.pipeline_mode<synchronous>, transform_indices = @transform_1, window_bounds = array<i64: 128, 1024>}, {pipeline_mode = #tpu.pipeline_mode<synchronous>, transform_indices = @transform_2, window_bounds = array<i64: 1, 1024>}, {pipeline_mode = #tpu.pipeline_mode<synchronous>, transform_indices = @transform_3, window_bounds = array<i64: 1024, 512>}, {pipeline_mode = #tpu.pipeline_mode<synchronous>, transform_indices = @transform_4, window_bounds = array<i64: 1, 512>}, {pipeline_mode = #tpu.pipeline_mode<synchronous>, transform_indices = @transform_5, window_bounds = array<i64: 512, 256>}, {pipeline_mode = #tpu.pipeline_mode<synchronous>, transform_indices = @transform_6, window_bounds = array<i64: 1, 256>}, {pipeline_mode = #tpu.pipeline_mode<synchronous>, transform_indices = @transform_7, window_bounds = array<i64: 256, 128>}, {pipeline_mode = #tpu.pipeline_mode<synchronous>, transform_indices = @transform_8, window_bounds = array<i64: 1, 128>}, {pipeline_mode = #tpu.pipeline_mode<synchronous>, transform_indices = @transform_9, window_bounds = array<i64: 128, 128>}, {pipeline_mode = #tpu.pipeline_mode<synchronous>, transform_indices = @transform_10, window_bounds = array<i64: 1, 128>}, {pipeline_mode = #tpu.pipeline_mode<synchronous>, transform_indices = @transform_11, window_bounds = array<i64: 128, 128>}, {pipeline_mode = #tpu.pipeline_mode<synchronous>, transform_indices = @transform_12, window_bounds = array<i64: 1, 128>}, {transform_indices = @transform_13, window_bounds = array<i64: 8, 128>}]} {
    %c0 = arith.constant 0 : index
    %c0_0 = arith.constant 0 : index
    %0 = vector.load %arg1[%c0, %c0_0] : memref<8x128xbf16, #tpu.memory_space<vmem>>, vector<8x128xbf16>
    %c0_1 = arith.constant 0 : index
    %c0_2 = arith.constant 0 : index
    %1 = vector.load %arg2[%c0_1, %c0_2] : memref<128x1024xbf16, #tpu.memory_space<vmem>>, vector<128x1024xbf16>
    %cst = arith.constant dense<0.000000e+00> : vector<8x1024xf32>
    %2 = tpu.matmul %0, %1, %cst {dimension_numbers = #tpu.dot_dimension_numbers<[1], [0], [0], [1], [0, 0, 1, 1], [], []>} : vector<8x128xbf16>, vector<128x1024xbf16>, vector<8x1024xf32> -> vector<8x1024xf32>
    %c0_3 = arith.constant 0 : index
    %c0_4 = arith.constant 0 : index
    %3 = vector.load %arg3[%c0_3, %c0_4] : memref<1x1024xf32, #tpu.memory_space<vmem>>, vector<1x1024xf32>
    %4 = vector.broadcast %3 : vector<1x1024xf32> to vector<8x1024xf32>
    %5 = arith.addf %2, %4 : vector<8x1024xf32>
    %cst_5 = arith.constant 0.000000e+00 : f32
    %6 = vector.broadcast %cst_5 : f32 to vector<8x1024xf32>
    %7 = arith.maximumf %5, %6 : vector<8x1024xf32>
    %8 = arith.truncf %7 : vector<8x1024xf32> to vector<8x1024xbf16>
    %c0_6 = arith.constant 0 : index
    %c0_7 = arith.constant 0 : index
    %9 = vector.load %arg4[%c0_6, %c0_7] : memref<1024x512xbf16, #tpu.memory_space<vmem>>, vector<1024x512xbf16>
    %cst_8 = arith.constant dense<0.000000e+00> : vector<8x512xf32>
    %10 = tpu.matmul %8, %9, %cst_8 {dimension_numbers = #tpu.dot_dimension_numbers<[1], [0], [0], [1], [0, 0, 1, 1], [], []>} : vector<8x1024xbf16>, vector<1024x512xbf16>, vector<8x512xf32> -> vector<8x512xf32>
    %c0_9 = arith.constant 0 : index
    %c0_10 = arith.constant 0 : index
    %11 = vector.load %arg5[%c0_9, %c0_10] : memref<1x512xf32, #tpu.memory_space<vmem>>, vector<1x512xf32>
    %12 = vector.broadcast %11 : vector<1x512xf32> to vector<8x512xf32>
    %13 = arith.addf %10, %12 : vector<8x512xf32>
    %cst_11 = arith.constant 0.000000e+00 : f32
    %14 = vector.broadcast %cst_11 : f32 to vector<8x512xf32>
    %15 = arith.maximumf %13, %14 : vector<8x512xf32>
    %16 = arith.truncf %15 : vector<8x512xf32> to vector<8x512xbf16>
    %c0_12 = arith.constant 0 : index
    %c0_13 = arith.constant 0 : index
    %17 = vector.load %arg6[%c0_12, %c0_13] : memref<512x256xbf16, #tpu.memory_space<vmem>>, vector<512x256xbf16>
    %cst_14 = arith.constant dense<0.000000e+00> : vector<8x256xf32>
    %18 = tpu.matmul %16, %17, %cst_14 {dimension_numbers = #tpu.dot_dimension_numbers<[1], [0], [0], [1], [0, 0, 1, 1], [], []>} : vector<8x512xbf16>, vector<512x256xbf16>, vector<8x256xf32> -> vector<8x256xf32>
    %c0_15 = arith.constant 0 : index
    %c0_16 = arith.constant 0 : index
    %19 = vector.load %arg7[%c0_15, %c0_16] : memref<1x256xf32, #tpu.memory_space<vmem>>, vector<1x256xf32>
    %20 = vector.broadcast %19 : vector<1x256xf32> to vector<8x256xf32>
    %21 = arith.addf %18, %20 : vector<8x256xf32>
    %cst_17 = arith.constant 0.000000e+00 : f32
    %22 = vector.broadcast %cst_17 : f32 to vector<8x256xf32>
    %23 = arith.maximumf %21, %22 : vector<8x256xf32>
    %24 = arith.truncf %23 : vector<8x256xf32> to vector<8x256xbf16>
    %c0_18 = arith.constant 0 : index
    %c0_19 = arith.constant 0 : index
    %25 = vector.load %arg8[%c0_18, %c0_19] : memref<256x128xbf16, #tpu.memory_space<vmem>>, vector<256x128xbf16>
    %cst_20 = arith.constant dense<0.000000e+00> : vector<8x128xf32>
    %26 = tpu.matmul %24, %25, %cst_20 {dimension_numbers = #tpu.dot_dimension_numbers<[1], [0], [0], [1], [0, 0, 1, 1], [], []>} : vector<8x256xbf16>, vector<256x128xbf16>, vector<8x128xf32> -> vector<8x128xf32>
    %c0_21 = arith.constant 0 : index
    %c0_22 = arith.constant 0 : index
    %27 = vector.load %arg9[%c0_21, %c0_22] : memref<1x128xf32, #tpu.memory_space<vmem>>, vector<1x128xf32>
    %28 = vector.broadcast %27 : vector<1x128xf32> to vector<8x128xf32>
    %29 = arith.addf %26, %28 : vector<8x128xf32>
    %cst_23 = arith.constant 0.000000e+00 : f32
    %30 = vector.broadcast %cst_23 : f32 to vector<8x128xf32>
    %31 = arith.maximumf %29, %30 : vector<8x128xf32>
    %32 = arith.truncf %31 : vector<8x128xf32> to vector<8x128xbf16>
    %c0_24 = arith.constant 0 : index
    %c0_25 = arith.constant 0 : index
    %33 = vector.load %arg10[%c0_24, %c0_25] : memref<128x128xbf16, #tpu.memory_space<vmem>>, vector<128x128xbf16>
    %cst_26 = arith.constant dense<0.000000e+00> : vector<8x128xf32>
    %34 = tpu.matmul %32, %33, %cst_26 {dimension_numbers = #tpu.dot_dimension_numbers<[1], [0], [0], [1], [0, 0, 1, 1], [], []>} : vector<8x128xbf16>, vector<128x128xbf16>, vector<8x128xf32> -> vector<8x128xf32>
    %c0_27 = arith.constant 0 : index
    %c0_28 = arith.constant 0 : index
    %35 = vector.load %arg11[%c0_27, %c0_28] : memref<1x128xf32, #tpu.memory_space<vmem>>, vector<1x128xf32>
    %36 = vector.broadcast %35 : vector<1x128xf32> to vector<8x128xf32>
    %37 = arith.addf %34, %36 : vector<8x128xf32>
    %cst_29 = arith.constant 0.000000e+00 : f32
    %38 = vector.broadcast %cst_29 : f32 to vector<8x128xf32>
    %39 = arith.maximumf %37, %38 : vector<8x128xf32>
    %40 = arith.truncf %39 : vector<8x128xf32> to vector<8x128xbf16>
    %c0_30 = arith.constant 0 : index
    %c0_31 = arith.constant 0 : index
    %41 = vector.load %arg12[%c0_30, %c0_31] : memref<128x128xbf16, #tpu.memory_space<vmem>>, vector<128x128xbf16>
    %cst_32 = arith.constant dense<0.000000e+00> : vector<8x128xf32>
    %42 = tpu.matmul %40, %41, %cst_32 {dimension_numbers = #tpu.dot_dimension_numbers<[1], [0], [0], [1], [0, 0, 1, 1], [], []>} : vector<8x128xbf16>, vector<128x128xbf16>, vector<8x128xf32> -> vector<8x128xf32>
    %c0_33 = arith.constant 0 : index
    %c0_34 = arith.constant 0 : index
    %43 = vector.load %arg13[%c0_33, %c0_34] : memref<1x128xf32, #tpu.memory_space<vmem>>, vector<1x128xf32>
    %44 = vector.broadcast %43 : vector<1x128xf32> to vector<8x128xf32>
    %45 = arith.addf %42, %44 : vector<8x128xf32>
    %c0_35 = arith.constant 0 : index
    %c0_36 = arith.constant 0 : index
    %46 = vector.load %arg14[%c0_35, %c0_36] : memref<8x128xf32, #tpu.memory_space<vmem>>, vector<8x128xf32>
    tpu.vector_store %arg14[%c0_35, %c0_36], %45 {strides = array<i32>} : memref<8x128xf32, #tpu.memory_space<vmem>>, vector<8x128xf32>,
    return
  }
  func.func @transform_0(%arg0: i32) -> (i32, i32) {
    %c0_i32 = arith.constant 0 : i32
    %c0_i32_0 = arith.constant 0 : i32
    return %arg0, %c0_i32 : i32, i32
  }
  func.func @transform_1(%arg0: i32) -> (i32, i32) {
    %c0_i32 = arith.constant 0 : i32
    %c0_i32_0 = arith.constant 0 : i32
    %c0_i32_1 = arith.constant 0 : i32
    return %c0_i32, %c0_i32_0 : i32, i32
  }
  func.func @transform_2(%arg0: i32) -> (i32, i32) {
    %c0_i32 = arith.constant 0 : i32
    %c0_i32_0 = arith.constant 0 : i32
    %c0_i32_1 = arith.constant 0 : i32
    return %c0_i32, %c0_i32_0 : i32, i32
  }
  func.func @transform_3(%arg0: i32) -> (i32, i32) {
    %c0_i32 = arith.constant 0 : i32
    %c0_i32_0 = arith.constant 0 : i32
    %c0_i32_1 = arith.constant 0 : i32
    return %c0_i32, %c0_i32_0 : i32, i32
  }
  func.func @transform_4(%arg0: i32) -> (i32, i32) {
    %c0_i32 = arith.constant 0 : i32
    %c0_i32_0 = arith.constant 0 : i32
    %c0_i32_1 = arith.constant 0 : i32
    return %c0_i32, %c0_i32_0 : i32, i32
  }
  func.func @transform_5(%arg0: i32) -> (i32, i32) {
    %c0_i32 = arith.constant 0 : i32
    %c0_i32_0 = arith.constant 0 : i32
    %c0_i32_1 = arith.constant 0 : i32
    return %c0_i32, %c0_i32_0 : i32, i32
  }
  func.func @transform_6(%arg0: i32) -> (i32, i32) {
    %c0_i32 = arith.constant 0 : i32
    %c0_i32_0 = arith.constant 0 : i32
    %c0_i32_1 = arith.constant 0 : i32
    return %c0_i32, %c0_i32_0 : i32, i32
  }
  func.func @transform_7(%arg0: i32) -> (i32, i32) {
    %c0_i32 = arith.constant 0 : i32
    %c0_i32_0 = arith.constant 0 : i32
    %c0_i32_1 = arith.constant 0 : i32
    return %c0_i32, %c0_i32_0 : i32, i32
  }
  func.func @transform_8(%arg0: i32) -> (i32, i32) {
    %c0_i32 = arith.constant 0 : i32
    %c0_i32_0 = arith.constant 0 : i32
    %c0_i32_1 = arith.constant 0 : i32
    return %c0_i32, %c0_i32_0 : i32, i32
  }
  func.func @transform_9(%arg0: i32) -> (i32, i32) {
    %c0_i32 = arith.constant 0 : i32
    %c0_i32_0 = arith.constant 0 : i32
    %c0_i32_1 = arith.constant 0 : i32
    return %c0_i32, %c0_i32_0 : i32, i32
  }
  func.func @transform_10(%arg0: i32) -> (i32, i32) {
    %c0_i32 = arith.constant 0 : i32
    %c0_i32_0 = arith.constant 0 : i32
    %c0_i32_1 = arith.constant 0 : i32
    return %c0_i32, %c0_i32_0 : i32, i32
  }
  func.func @transform_11(%arg0: i32) -> (i32, i32) {
    %c0_i32 = arith.constant 0 : i32
    %c0_i32_0 = arith.constant 0 : i32
    %c0_i32_1 = arith.constant 0 : i32
    return %c0_i32, %c0_i32_0 : i32, i32
  }
  func.func @transform_12(%arg0: i32) -> (i32, i32) {
    %c0_i32 = arith.constant 0 : i32
    %c0_i32_0 = arith.constant 0 : i32
    %c0_i32_1 = arith.constant 0 : i32
    return %c0_i32, %c0_i32_0 : i32, i32
  }
  func.func @transform_13(%arg0: i32) -> (i32, i32) {
    %c0_i32 = arith.constant 0 : i32
    %c0_i32_0 = arith.constant 0 : i32
    return %arg0, %c0_i32 : i32, i32
  }
}

module attributes {stable_mosaic.version = 11 : i64} {
  func.func @_mlp_kernel(%arg0: i32, %arg1: memref<8x128xbf16, #tpu.memory_space<vmem>>, %arg2: memref<128x1024xbf16, #tpu.memory_space<vmem>>, %arg3: memref<1x1024xf32, #tpu.memory_space<vmem>>, %arg4: memref<1024x512xbf16, #tpu.memory_space<vmem>>, %arg5: memref<1x512xf32, #tpu.memory_space<vmem>>, %arg6: memref<512x256xbf16, #tpu.memory_space<vmem>>, %arg7: memref<1x256xf32, #tpu.memory_space<vmem>>, %arg8: memref<256x128xbf16, #tpu.memory_space<vmem>>, %arg9: memref<1x128xf32, #tpu.memory_space<vmem>>, %arg10: memref<128x128xbf16, #tpu.memory_space<vmem>>, %arg11: memref<1x128xf32, #tpu.memory_space<vmem>>, %arg12: memref<128x128xbf16, #tpu.memory_space<vmem>>, %arg13: memref<1x128xf32, #tpu.memory_space<vmem>>, %arg14: memref<8x128xf32, #tpu.memory_space<vmem>>) attributes {dimension_semantics = [#tpu.dimension_semantics<parallel>], iteration_bounds = array<i64: 1>, scalar_prefetch = 0 : i64, scratch_operands = 0 : i64, tpu.core_type = #tpu.core_type<tc>, window_params = [{transform_indices = @transform_0, window_bounds = array<i64: 8, 128>}, {pipeline_mode = #tpu.pipeline_mode<synchronous>, transform_indices = @transform_1, window_bounds = array<i64: 128, 1024>}, {pipeline_mode = #tpu.pipeline_mode<synchronous>, transform_indices = @transform_2, window_bounds = array<i64: 1, 1024>}, {pipeline_mode = #tpu.pipeline_mode<synchronous>, transform_indices = @transform_3, window_bounds = array<i64: 1024, 512>}, {pipeline_mode = #tpu.pipeline_mode<synchronous>, transform_indices = @transform_4, window_bounds = array<i64: 1, 512>}, {pipeline_mode = #tpu.pipeline_mode<synchronous>, transform_indices = @transform_5, window_bounds = array<i64: 512, 256>}, {pipeline_mode = #tpu.pipeline_mode<synchronous>, transform_indices = @transform_6, window_bounds = array<i64: 1, 256>}, {pipeline_mode = #tpu.pipeline_mode<synchronous>, transform_indices = @transform_7, window_bounds = array<i64: 256, 128>}, {pipeline_mode = #tpu.pipeline_mode<synchronous>, transform_indices = @transform_8, window_bounds = array<i64: 1, 128>}, {pipeline_mode = #tpu.pipeline_mode<synchronous>, transform_indices = @transform_9, window_bounds = array<i64: 128, 128>}, {pipeline_mode = #tpu.pipeline_mode<synchronous>, transform_indices = @transform_10, window_bounds = array<i64: 1, 128>}, {pipeline_mode = #tpu.pipeline_mode<synchronous>, transform_indices = @transform_11, window_bounds = array<i64: 128, 128>}, {pipeline_mode = #tpu.pipeline_mode<synchronous>, transform_indices = @transform_12, window_bounds = array<i64: 1, 128>}, {transform_indices = @transform_13, window_bounds = array<i64: 8, 128>}]} {
    %c0 = arith.constant 0 : index
    %c0_0 = arith.constant 0 : index
    %0 = vector.load %arg1[%c0, %c0_0] : memref<8x128xbf16, #tpu.memory_space<vmem>>, vector<8x128xbf16>
    %c0_1 = arith.constant 0 : index
    %c0_2 = arith.constant 0 : index
    %1 = vector.load %arg2[%c0_1, %c0_2] : memref<128x1024xbf16, #tpu.memory_space<vmem>>, vector<128x1024xbf16>
    %cst = arith.constant dense<0.000000e+00> : vector<8x1024xf32>
    %2 = tpu.matmul %0, %1, %cst {dimension_numbers = #tpu.dot_dimension_numbers<[1], [0], [0], [1], [0, 0, 1, 1], [], []>} : vector<8x128xbf16>, vector<128x1024xbf16>, vector<8x1024xf32> -> vector<8x1024xf32>
    %c0_3 = arith.constant 0 : index
    %c0_4 = arith.constant 0 : index
    %3 = vector.load %arg3[%c0_3, %c0_4] : memref<1x1024xf32, #tpu.memory_space<vmem>>, vector<1x1024xf32>
    %4 = vector.broadcast %3 : vector<1x1024xf32> to vector<8x1024xf32>
    %5 = arith.addf %2, %4 : vector<8x1024xf32>
    %cst_5 = arith.constant 0.000000e+00 : f32
    %6 = vector.broadcast %cst_5 : f32 to vector<8x1024xf32>
    %7 = arith.maximumf %5, %6 : vector<8x1024xf32>
    %8 = arith.truncf %7 : vector<8x1024xf32> to vector<8x1024xbf16>
    %c0_6 = arith.constant 0 : index
    %c0_7 = arith.constant 0 : index
    %9 = vector.load %arg4[%c0_6, %c0_7] : memref<1024x512xbf16, #tpu.memory_space<vmem>>, vector<1024x512xbf16>
    %cst_8 = arith.constant dense<0.000000e+00> : vector<8x512xf32>
    %10 = tpu.matmul %8, %9, %cst_8 {dimension_numbers = #tpu.dot_dimension_numbers<[1], [0], [0], [1], [0, 0, 1, 1], [], []>} : vector<8x1024xbf16>, vector<1024x512xbf16>, vector<8x512xf32> -> vector<8x512xf32>
    %c0_9 = arith.constant 0 : index
    %c0_10 = arith.constant 0 : index
    %11 = vector.load %arg5[%c0_9, %c0_10] : memref<1x512xf32, #tpu.memory_space<vmem>>, vector<1x512xf32>
    %12 = vector.broadcast %11 : vector<1x512xf32> to vector<8x512xf32>
    %13 = arith.addf %10, %12 : vector<8x512xf32>
    %cst_11 = arith.constant 0.000000e+00 : f32
    %14 = vector.broadcast %cst_11 : f32 to vector<8x512xf32>
    %15 = arith.maximumf %13, %14 : vector<8x512xf32>
    %16 = arith.truncf %15 : vector<8x512xf32> to vector<8x512xbf16>
    %c0_12 = arith.constant 0 : index
    %c0_13 = arith.constant 0 : index
    %17 = vector.load %arg6[%c0_12, %c0_13] : memref<512x256xbf16, #tpu.memory_space<vmem>>, vector<512x256xbf16>
    %cst_14 = arith.constant dense<0.000000e+00> : vector<8x256xf32>
    %18 = tpu.matmul %16, %17, %cst_14 {dimension_numbers = #tpu.dot_dimension_numbers<[1], [0], [0], [1], [0, 0, 1, 1], [], []>} : vector<8x512xbf16>, vector<512x256xbf16>, vector<8x256xf32> -> vector<8x256xf32>
    %c0_15 = arith.constant 0 : index
    %c0_16 = arith.constant 0 : index
    %19 = vector.load %arg7[%c0_15, %c0_16] : memref<1x256xf32, #tpu.memory_space<vmem>>, vector<1x256xf32>
    %20 = vector.broadcast %19 : vector<1x256xf32> to vector<8x256xf32>
    %21 = arith.addf %18, %20 : vector<8x256xf32>
    %cst_17 = arith.constant 0.000000e+00 : f32
    %22 = vector.broadcast %cst_17 : f32 to vector<8x256xf32>
    %23 = arith.maximumf %21, %22 : vector<8x256xf32>
    %24 = arith.truncf %23 : vector<8x256xf32> to vector<8x256xbf16>
    %c0_18 = arith.constant 0 : index
    %c0_19 = arith.constant 0 : index
    %25 = vector.load %arg8[%c0_18, %c0_19] : memref<256x128xbf16, #tpu.memory_space<vmem>>, vector<256x128xbf16>
    %cst_20 = arith.constant dense<0.000000e+00> : vector<8x128xf32>
    %26 = tpu.matmul %24, %25, %cst_20 {dimension_numbers = #tpu.dot_dimension_numbers<[1], [0], [0], [1], [0, 0, 1, 1], [], []>} : vector<8x256xbf16>, vector<256x128xbf16>, vector<8x128xf32> -> vector<8x128xf32>
    %c0_21 = arith.constant 0 : index
    %c0_22 = arith.constant 0 : index
    %27 = vector.load %arg9[%c0_21, %c0_22] : memref<1x128xf32, #tpu.memory_space<vmem>>, vector<1x128xf32>
    %28 = vector.broadcast %27 : vector<1x128xf32> to vector<8x128xf32>
    %29 = arith.addf %26, %28 : vector<8x128xf32>
    %cst_23 = arith.constant 0.000000e+00 : f32
    %30 = vector.broadcast %cst_23 : f32 to vector<8x128xf32>
    %31 = arith.maximumf %29, %30 : vector<8x128xf32>
    %32 = arith.truncf %31 : vector<8x128xf32> to vector<8x128xbf16>
    %c0_24 = arith.constant 0 : index
    %c0_25 = arith.constant 0 : index
    %33 = vector.load %arg10[%c0_24, %c0_25] : memref<128x128xbf16, #tpu.memory_space<vmem>>, vector<128x128xbf16>
    %cst_26 = arith.constant dense<0.000000e+00> : vector<8x128xf32>
    %34 = tpu.matmul %32, %33, %cst_26 {dimension_numbers = #tpu.dot_dimension_numbers<[1], [0], [0], [1], [0, 0, 1, 1], [], []>} : vector<8x128xbf16>, vector<128x128xbf16>, vector<8x128xf32> -> vector<8x128xf32>
    %c0_27 = arith.constant 0 : index
    %c0_28 = arith.constant 0 : index
    %35 = vector.load %arg11[%c0_27, %c0_28] : memref<1x128xf32, #tpu.memory_space<vmem>>, vector<1x128xf32>
    %36 = vector.broadcast %35 : vector<1x128xf32> to vector<8x128xf32>
    %37 = arith.addf %34, %36 : vector<8x128xf32>
    %cst_29 = arith.constant 0.000000e+00 : f32
    %38 = vector.broadcast %cst_29 : f32 to vector<8x128xf32>
    %39 = arith.maximumf %37, %38 : vector<8x128xf32>
    %40 = arith.truncf %39 : vector<8x128xf32> to vector<8x128xbf16>
    %c0_30 = arith.constant 0 : index
    %c0_31 = arith.constant 0 : index
    %41 = vector.load %arg12[%c0_30, %c0_31] : memref<128x128xbf16, #tpu.memory_space<vmem>>, vector<128x128xbf16>
    %cst_32 = arith.constant dense<0.000000e+00> : vector<8x128xf32>
    %42 = tpu.matmul %40, %41, %cst_32 {dimension_numbers = #tpu.dot_dimension_numbers<[1], [0], [0], [1], [0, 0, 1, 1], [], []>} : vector<8x128xbf16>, vector<128x128xbf16>, vector<8x128xf32> -> vector<8x128xf32>
    %c0_33 = arith.constant 0 : index
    %c0_34 = arith.constant 0 : index
    %43 = vector.load %arg13[%c0_33, %c0_34] : memref<1x128xf32, #tpu.memory_space<vmem>>, vector<1x128xf32>
    %44 = vector.broadcast %43 : vector<1x128xf32> to vector<8x128xf32>
    %45 = arith.addf %42, %44 : vector<8x128xf32>
    %c0_35 = arith.constant 0 : index
    %c0_36 = arith.constant 0 : index
    %46 = vector.load %arg14[%c0_35, %c0_36] : memref<8x128xf32, #tpu.memory_space<vmem>>, vector<8x128xf32>
    tpu.vector_store %arg14[%c0_35, %c0_36], %45 {strides = array<i32>} : memref<8x128xf32, #tpu.memory_space<vmem>>, vector<8x128xf32>,
    return
  }
  func.func @transform_0(%arg0: i32) -> (i32, i32) {
    %c0_i32 = arith.constant 0 : i32
    %c0_i32_0 = arith.constant 0 : i32
    return %arg0, %c0_i32 : i32, i32
  }
  func.func @transform_1(%arg0: i32) -> (i32, i32) {
    %c0_i32 = arith.constant 0 : i32
    %c0_i32_0 = arith.constant 0 : i32
    %c0_i32_1 = arith.constant 0 : i32
    return %c0_i32, %c0_i32_0 : i32, i32
  }
  func.func @transform_2(%arg0: i32) -> (i32, i32) {
    %c0_i32 = arith.constant 0 : i32
    %c0_i32_0 = arith.constant 0 : i32
    %c0_i32_1 = arith.constant 0 : i32
    return %c0_i32, %c0_i32_0 : i32, i32
  }
  func.func @transform_3(%arg0: i32) -> (i32, i32) {
    %c0_i32 = arith.constant 0 : i32
    %c0_i32_0 = arith.constant 0 : i32
    %c0_i32_1 = arith.constant 0 : i32
    return %c0_i32, %c0_i32_0 : i32, i32
  }
  func.func @transform_4(%arg0: i32) -> (i32, i32) {
    %c0_i32 = arith.constant 0 : i32
    %c0_i32_0 = arith.constant 0 : i32
    %c0_i32_1 = arith.constant 0 : i32
    return %c0_i32, %c0_i32_0 : i32, i32
  }
  func.func @transform_5(%arg0: i32) -> (i32, i32) {
    %c0_i32 = arith.constant 0 : i32
    %c0_i32_0 = arith.constant 0 : i32
    %c0_i32_1 = arith.constant 0 : i32
    return %c0_i32, %c0_i32_0 : i32, i32
  }
  func.func @transform_6(%arg0: i32) -> (i32, i32) {
    %c0_i32 = arith.constant 0 : i32
    %c0_i32_0 = arith.constant 0 : i32
    %c0_i32_1 = arith.constant 0 : i32
    return %c0_i32, %c0_i32_0 : i32, i32
  }
  func.func @transform_7(%arg0: i32) -> (i32, i32) {
    %c0_i32 = arith.constant 0 : i32
    %c0_i32_0 = arith.constant 0 : i32
    %c0_i32_1 = arith.constant 0 : i32
    return %c0_i32, %c0_i32_0 : i32, i32
  }
  func.func @transform_8(%arg0: i32) -> (i32, i32) {
    %c0_i32 = arith.constant 0 : i32
    %c0_i32_0 = arith.constant 0 : i32
    %c0_i32_1 = arith.constant 0 : i32
    return %c0_i32, %c0_i32_0 : i32, i32
  }
  func.func @transform_9(%arg0: i32) -> (i32, i32) {
    %c0_i32 = arith.constant 0 : i32
    %c0_i32_0 = arith.constant 0 : i32
    %c0_i32_1 = arith.constant 0 : i32
    return %c0_i32, %c0_i32_0 : i32, i32
  }
  func.func @transform_10(%arg0: i32) -> (i32, i32) {
    %c0_i32 = arith.constant 0 : i32
    %c0_i32_0 = arith.constant 0 : i32
    %c0_i32_1 = arith.constant 0 : i32
    return %c0_i32, %c0_i32_0 : i32, i32
  }
  func.func @transform_11(%arg0: i32) -> (i32, i32) {
    %c0_i32 = arith.constant 0 : i32
    %c0_i32_0 = arith.constant 0 : i32
    %c0_i32_1 = arith.constant 0 : i32
    return %c0_i32, %c0_i32_0 : i32, i32
  }
  func.func @transform_12(%arg0: i32) -> (i32, i32) {
    %c0_i32 = arith.constant 0 : i32
    %c0_i32_0 = arith.constant 0 : i32
    %c0_i32_1 = arith.constant 0 : i32
    return %c0_i32, %c0_i32_0 : i32, i32
  }
  func.func @transform_13(%arg0: i32) -> (i32, i32) {
    %c0_i32 = arith.constant 0 : i32
    %c0_i32_0 = arith.constant 0 : i32
    return %arg0, %c0_i32 : i32, i32
  }
}

</mosaic_0001>

<llo_original>
// kernel: _forward_impl.1
$region0: #{_forward_impl.1}
  #allocation0 [shape = 'u32[]', space=smem, size = 0x4, offset = 0x4, fixed_abs, tag = 'smem constant byte address 0x4 - core index']
  #allocation1 [shape = 'u32[72,128]{1,0:T(1,128)}', space=vmem, size = 0x9000, scoped, tag = 'internal scratch']
  %s0 = inlined_call_operand.vmem [shape: bf16[8,128], index: 0, kind: input, shape index: {}]
  %s1 = inlined_call_operand.vmem [shape: bf16[128,1024], index: 1, kind: input, shape index: {}]
  %s2 = inlined_call_operand.vmem [shape: f32[1,1024], index: 2, kind: input, shape index: {}]
  %s3 = inlined_call_operand.vmem [shape: bf16[1024,512], index: 3, kind: input, shape index: {}]
  %s4 = inlined_call_operand.vmem [shape: f32[1,512], index: 4, kind: input, shape index: {}]
  %s5 = inlined_call_operand.vmem [shape: bf16[512,256], index: 5, kind: input, shape index: {}]
  %s6 = inlined_call_operand.vmem [shape: f32[1,256], index: 6, kind: input, shape index: {}]
  %s7 = inlined_call_operand.vmem [shape: bf16[256,128], index: 7, kind: input, shape index: {}]
  %s8 = inlined_call_operand.vmem [shape: f32[1,128], index: 8, kind: input, shape index: {}]
  %s9 = inlined_call_operand.vmem [shape: bf16[128,128], index: 9, kind: input, shape index: {}]
  %s10 = inlined_call_operand.vmem [shape: f32[1,128], index: 10, kind: input, shape index: {}]
  %s11 = inlined_call_operand.vmem [shape: bf16[128,128], index: 11, kind: input, shape index: {}]
  %s12 = inlined_call_operand.vmem [shape: f32[1,128], index: 12, kind: input, shape index: {}]
  %s13 = inlined_call_operand.vmem [shape: f32[8,128], index: 13, kind: output, shape index: {}]
  %s14 = sld [smem:[#allocation0]]
  $region62: #{_forward_impl.1} parent=0
    _
  %s16 = ssub.s32 1, %s14
  %s17 = scalar_select 0, %s16, %s14
  // Predicated region
  $region2: #{_forward_impl.1} parent=0 // pred_check
    _
  $region3: #{_forward_impl.1} parent=0 // pred_check_branch
    %19 = sbr.rel (0) target = $region5
  $region4: #{_forward_impl.1} parent=0 // pred_region
    _
  $region5: #{_forward_impl.1} parent=0 // pred_fallthru
    _
  // Predicated region
  $region6: #{_forward_impl.1} parent=0 // pred_check
    _
  $region7: #{_forward_impl.1} parent=0 // pred_check_branch
    %21 = sbr.rel (0) target = $region9
  $region8: #{_forward_impl.1} parent=0 // pred_region
    _
  $region9: #{_forward_impl.1} parent=0 // pred_fallthru
    _
  // Predicated region
  $region10: #{_forward_impl.1} parent=0 // pred_check
    _
  $region11: #{_forward_impl.1} parent=0 // pred_check_branch
    %23 = sbr.rel (0) target = $region13
  $region12: #{_forward_impl.1} parent=0 // pred_region
    _
  $region13: #{_forward_impl.1} parent=0 // pred_fallthru
    _
  // Predicated region
  $region14: #{_forward_impl.1} parent=0 // pred_check
    _
  $region15: #{_forward_impl.1} parent=0 // pred_check_branch
    %25 = sbr.rel (0) target = $region17
  $region16: #{_forward_impl.1} parent=0 // pred_region
    _
  $region17: #{_forward_impl.1} parent=0 // pred_fallthru
    _
  // Predicated region
  $region18: #{_forward_impl.1} parent=0 // pred_check
    _
  $region19: #{_forward_impl.1} parent=0 // pred_check_branch
    %27 = sbr.rel (0) target = $region21
  $region20: #{_forward_impl.1} parent=0 // pred_region
    _
  $region21: #{_forward_impl.1} parent=0 // pred_fallthru
    _
  // Predicated region
  $region22: #{_forward_impl.1} parent=0 // pred_check
    _
  $region23: #{_forward_impl.1} parent=0 // pred_check_branch
    %29 = sbr.rel (0) target = $region25
  $region24: #{_forward_impl.1} parent=0 // pred_region
    _
  $region25: #{_forward_impl.1} parent=0 // pred_fallthru
    _
  // Predicated region
  $region26: #{_forward_impl.1} parent=0 // pred_check
    _
  $region27: #{_forward_impl.1} parent=0 // pred_check_branch
    %31 = sbr.rel (0) target = $region29
  $region28: #{_forward_impl.1} parent=0 // pred_region
    _
  $region29: #{_forward_impl.1} parent=0 // pred_fallthru
    _
  // Predicated region
  $region30: #{_forward_impl.1} parent=0 // pred_check
    _
  $region31: #{_forward_impl.1} parent=0 // pred_check_branch
    %33 = sbr.rel (0) target = $region33
  $region32: #{_forward_impl.1} parent=0 // pred_region
    _
  $region33: #{_forward_impl.1} parent=0 // pred_fallthru
    _
  // Predicated region
  $region34: #{_forward_impl.1} parent=0 // pred_check
    _
  $region35: #{_forward_impl.1} parent=0 // pred_check_branch
    %35 = sbr.rel (0) target = $region37
  $region36: #{_forward_impl.1} parent=0 // pred_region
    _
  $region37: #{_forward_impl.1} parent=0 // pred_fallthru
    _
  // Predicated region
  $region38: #{_forward_impl.1} parent=0 // pred_check
    _
  $region39: #{_forward_impl.1} parent=0 // pred_check_branch
    %37 = sbr.rel (0) target = $region41
  $region40: #{_forward_impl.1} parent=0 // pred_region
    _
  $region41: #{_forward_impl.1} parent=0 // pred_fallthru
    _
  // Predicated region
  $region42: #{_forward_impl.1} parent=0 // pred_check
    _
  $region43: #{_forward_impl.1} parent=0 // pred_check_branch
    %39 = sbr.rel (0) target = $region45
  $region44: #{_forward_impl.1} parent=0 // pred_region
    _
  $region45: #{_forward_impl.1} parent=0 // pred_fallthru
    _
  // Predicated region
  $region46: #{_forward_impl.1} parent=0 // pred_check
    _
  $region47: #{_forward_impl.1} parent=0 // pred_check_branch
    %41 = sbr.rel (0) target = $region49
  $region48: #{_forward_impl.1} parent=0 // pred_region
    _
  $region49: #{_forward_impl.1} parent=0 // pred_fallthru
    _
  // Predicated region
  $region50: #{_forward_impl.1} parent=0 // pred_check
    _
  $region51: #{_forward_impl.1} parent=0 // pred_check_branch
    %43 = sbr.rel (0) target = $region53
  $region52: #{_forward_impl.1} parent=0 // pred_region
    _
  $region53: #{_forward_impl.1} parent=0 // pred_fallthru
    _
  %v44 = vld [vmem:[%s0] sm:$0xf]
  %v45 = vld [vmem:[%s1] sm:$0xff]
  %v46 = vld [vmem:[%s1 + $0x8] sm:$0xff]
  %v47 = vld [vmem:[%s1 + $0x10] sm:$0xff]
  %v48 = vld [vmem:[%s1 + $0x18] sm:$0xff]
  %v49 = vld [vmem:[%s1 + $0x20] sm:$0xff]
  %v50 = vld [vmem:[%s1 + $0x28] sm:$0xff]
  %v51 = vld [vmem:[%s1 + $0x30] sm:$0xff]
  %v52 = vld [vmem:[%s1 + $0x38] sm:$0xff]
  %v53 = vld [vmem:[%s1 + $0x40] sm:$0xff]
  %v54 = vld [vmem:[%s1 + $0x48] sm:$0xff]
  %v55 = vld [vmem:[%s1 + $0x50] sm:$0xff]
  %v56 = vld [vmem:[%s1 + $0x58] sm:$0xff]
  %v57 = vld [vmem:[%s1 + $0x60] sm:$0xff]
  %v58 = vld [vmem:[%s1 + $0x68] sm:$0xff]
  %v59 = vld [vmem:[%s1 + $0x70] sm:$0xff]
  %v60 = vld [vmem:[%s1 + $0x78] sm:$0xff]
  %v61 = vld [vmem:[%s1 + $0x80] sm:$0xff]
  %v62 = vld [vmem:[%s1 + $0x88] sm:$0xff]
  %v63 = vld [vmem:[%s1 + $0x90] sm:$0xff]
  %v64 = vld [vmem:[%s1 + $0x98] sm:$0xff]
  %v65 = vld [vmem:[%s1 + $0xa0] sm:$0xff]
  %v66 = vld [vmem:[%s1 + $0xa8] sm:$0xff]
  %v67 = vld [vmem:[%s1 + $0xb0] sm:$0xff]
  %v68 = vld [vmem:[%s1 + $0xb8] sm:$0xff]
  %v69 = vld [vmem:[%s1 + $0xc0] sm:$0xff]
  %v70 = vld [vmem:[%s1 + $0xc8] sm:$0xff]
  %v71 = vld [vmem:[%s1 + $0xd0] sm:$0xff]
  %v72 = vld [vmem:[%s1 + $0xd8] sm:$0xff]
  %v73 = vld [vmem:[%s1 + $0xe0] sm:$0xff]
  %v74 = vld [vmem:[%s1 + $0xe8] sm:$0xff]
  %v75 = vld [vmem:[%s1 + $0xf0] sm:$0xff]
  %v76 = vld [vmem:[%s1 + $0xf8] sm:$0xff]
  %v77 = vld [vmem:[%s1 + $0x100] sm:$0xff]
  %v78 = vld [vmem:[%s1 + $0x108] sm:$0xff]
  %v79 = vld [vmem:[%s1 + $0x110] sm:$0xff]
  %v80 = vld [vmem:[%s1 + $0x118] sm:$0xff]
  %v81 = vld [vmem:[%s1 + $0x120] sm:$0xff]
  %v82 = vld [vmem:[%s1 + $0x128] sm:$0xff]
  %v83 = vld [vmem:[%s1 + $0x130] sm:$0xff]
  %v84 = vld [vmem:[%s1 + $0x138] sm:$0xff]
  %v85 = vld [vmem:[%s1 + $0x140] sm:$0xff]
  %v86 = vld [vmem:[%s1 + $0x148] sm:$0xff]
  %v87 = vld [vmem:[%s1 + $0x150] sm:$0xff]
  %v88 = vld [vmem:[%s1 + $0x158] sm:$0xff]
  %v89 = vld [vmem:[%s1 + $0x160] sm:$0xff]
  %v90 = vld [vmem:[%s1 + $0x168] sm:$0xff]
  %v91 = vld [vmem:[%s1 + $0x170] sm:$0xff]
  %v92 = vld [vmem:[%s1 + $0x178] sm:$0xff]
  %v93 = vld [vmem:[%s1 + $0x180] sm:$0xff]
  %v94 = vld [vmem:[%s1 + $0x188] sm:$0xff]
  %v95 = vld [vmem:[%s1 + $0x190] sm:$0xff]
  %v96 = vld [vmem:[%s1 + $0x198] sm:$0xff]
  %v97 = vld [vmem:[%s1 + $0x1a0] sm:$0xff]
  %v98 = vld [vmem:[%s1 + $0x1a8] sm:$0xff]
  %v99 = vld [vmem:[%s1 + $0x1b0] sm:$0xff]
  %v100 = vld [vmem:[%s1 + $0x1b8] sm:$0xff]
  %v101 = vld [vmem:[%s1 + $0x1c0] sm:$0xff]
  %v102 = vld [vmem:[%s1 + $0x1c8] sm:$0xff]
  %v103 = vld [vmem:[%s1 + $0x1d0] sm:$0xff]
  %v104 = vld [vmem:[%s1 + $0x1d8] sm:$0xff]
  %v105 = vld [vmem:[%s1 + $0x1e0] sm:$0xff]
  %v106 = vld [vmem:[%s1 + $0x1e8] sm:$0xff]
  %v107 = vld [vmem:[%s1 + $0x1f0] sm:$0xff]
  %v108 = vld [vmem:[%s1 + $0x1f8] sm:$0xff]
  %v109 = vld [vmem:[%s2] sm:$0xff]
  %v111 = vperm.slane %v109, 0
  %v112 = vperm.slane %v109, 1
  %v113 = vperm.slane %v109, 2
  %v114 = vperm.slane %v109, 3
  %v115 = vperm.slane %v109, 4
  %v116 = vperm.slane %v109, 5
  %v117 = vperm.slane %v109, 6
  %v118 = vperm.slane %v109, 7
  %v191 = vunpack.c.l.b16 %v45
  %v192 = vunpack.c.h.b16 %v45
  %v193 = vunpack.c.l.b16 %v46
  %v194 = vunpack.c.h.b16 %v46
  %v195 = vunpack.c.l.b16 %v47
  %v196 = vunpack.c.h.b16 %v47
  %v197 = vunpack.c.l.b16 %v48
  %v198 = vunpack.c.h.b16 %v48
  %v199 = vunpack.c.l.b16 %v49
  %v200 = vunpack.c.h.b16 %v49
  %v201 = vunpack.c.l.b16 %v50
  %v202 = vunpack.c.h.b16 %v50
  %v203 = vunpack.c.l.b16 %v51
  %v204 = vunpack.c.h.b16 %v51
  %v205 = vunpack.c.l.b16 %v52
  %v206 = vunpack.c.h.b16 %v52
  %v207 = vunpack.c.l.b16 %v53
  %v208 = vunpack.c.h.b16 %v53
  %v209 = vunpack.c.l.b16 %v54
  %v210 = vunpack.c.h.b16 %v54
  %v211 = vunpack.c.l.b16 %v55
  %v212 = vunpack.c.h.b16 %v55
  %v213 = vunpack.c.l.b16 %v56
  %v214 = vunpack.c.h.b16 %v56
  %v215 = vunpack.c.l.b16 %v57
  %v216 = vunpack.c.h.b16 %v57
  %v217 = vunpack.c.l.b16 %v58
  %v218 = vunpack.c.h.b16 %v58
  %v219 = vunpack.c.l.b16 %v59
  %v220 = vunpack.c.h.b16 %v59
  %v221 = vunpack.c.l.b16 %v60
  %v222 = vunpack.c.h.b16 %v60
  %v223 = vunpack.c.l.b16 %v61
  %v224 = vunpack.c.h.b16 %v61
  %v225 = vunpack.c.l.b16 %v62
  %v226 = vunpack.c.h.b16 %v62
  %v227 = vunpack.c.l.b16 %v63
  %v228 = vunpack.c.h.b16 %v63
  %v229 = vunpack.c.l.b16 %v64
  %v230 = vunpack.c.h.b16 %v64
  %v231 = vunpack.c.l.b16 %v65
  %v232 = vunpack.c.h.b16 %v65
  %v233 = vunpack.c.l.b16 %v66
  %v234 = vunpack.c.h.b16 %v66
  %v235 = vunpack.c.l.b16 %v67
  %v236 = vunpack.c.h.b16 %v67
  %v237 = vunpack.c.l.b16 %v68
  %v238 = vunpack.c.h.b16 %v68
  %v239 = vunpack.c.l.b16 %v69
  %v240 = vunpack.c.h.b16 %v69
  %v241 = vunpack.c.l.b16 %v70
  %v242 = vunpack.c.h.b16 %v70
  %v243 = vunpack.c.l.b16 %v71
  %v244 = vunpack.c.h.b16 %v71
  %v245 = vunpack.c.l.b16 %v72
  %v246 = vunpack.c.h.b16 %v72
  %v247 = vunpack.c.l.b16 %v73
  %v248 = vunpack.c.h.b16 %v73
  %v249 = vunpack.c.l.b16 %v74
  %v250 = vunpack.c.h.b16 %v74
  %v251 = vunpack.c.l.b16 %v75
  %v252 = vunpack.c.h.b16 %v75
  %v253 = vunpack.c.l.b16 %v76
  %v254 = vunpack.c.h.b16 %v76
  %v255 = vunpack.c.l.b16 %v77
  %v256 = vunpack.c.h.b16 %v77
  %v257 = vunpack.c.l.b16 %v78
  %v258 = vunpack.c.h.b16 %v78
  %v259 = vunpack.c.l.b16 %v79
  %v260 = vunpack.c.h.b16 %v79
  %v261 = vunpack.c.l.b16 %v80
  %v262 = vunpack.c.h.b16 %v80
  %v263 = vunpack.c.l.b16 %v81
  %v264 = vunpack.c.h.b16 %v81
  %v265 = vunpack.c.l.b16 %v82
  %v266 = vunpack.c.h.b16 %v82
  %v267 = vunpack.c.l.b16 %v83
  %v268 = vunpack.c.h.b16 %v83
  %v269 = vunpack.c.l.b16 %v84
  %v270 = vunpack.c.h.b16 %v84
  %v271 = vunpack.c.l.b16 %v85
  %v272 = vunpack.c.h.b16 %v85
  %v273 = vunpack.c.l.b16 %v86
  %v274 = vunpack.c.h.b16 %v86
  %v275 = vunpack.c.l.b16 %v87
  %v276 = vunpack.c.h.b16 %v87
  %v277 = vunpack.c.l.b16 %v88
  %v278 = vunpack.c.h.b16 %v88
  %v279 = vunpack.c.l.b16 %v89
  %v280 = vunpack.c.h.b16 %v89
  %v281 = vunpack.c.l.b16 %v90
  %v282 = vunpack.c.h.b16 %v90
  %v283 = vunpack.c.l.b16 %v91
  %v284 = vunpack.c.h.b16 %v91
  %v285 = vunpack.c.l.b16 %v92
  %v286 = vunpack.c.h.b16 %v92
  %v287 = vunpack.c.l.b16 %v93
  %v288 = vunpack.c.h.b16 %v93
  %v289 = vunpack.c.l.b16 %v94
  %v290 = vunpack.c.h.b16 %v94
  %v291 = vunpack.c.l.b16 %v95
  %v292 = vunpack.c.h.b16 %v95
  %v293 = vunpack.c.l.b16 %v96
  %v294 = vunpack.c.h.b16 %v96
  %v295 = vunpack.c.l.b16 %v97
  %v296 = vunpack.c.h.b16 %v97
  %v297 = vunpack.c.l.b16 %v98
  %v298 = vunpack.c.h.b16 %v98
  %v299 = vunpack.c.l.b16 %v99
  %v300 = vunpack.c.h.b16 %v99
  %v301 = vunpack.c.l.b16 %v100
  %v302 = vunpack.c.h.b16 %v100
  %v303 = vunpack.c.l.b16 %v101
  %v304 = vunpack.c.h.b16 %v101
  %v305 = vunpack.c.l.b16 %v102
  %v306 = vunpack.c.h.b16 %v102
  %v307 = vunpack.c.l.b16 %v103
  %v308 = vunpack.c.h.b16 %v103
  %v309 = vunpack.c.l.b16 %v104
  %v310 = vunpack.c.h.b16 %v104
  %v311 = vunpack.c.l.b16 %v105
  %v312 = vunpack.c.h.b16 %v105
  %v313 = vunpack.c.l.b16 %v106
  %v314 = vunpack.c.h.b16 %v106
  %v315 = vunpack.c.l.b16 %v107
  %v316 = vunpack.c.h.b16 %v107
  %v317 = vunpack.c.l.b16 %v108
  %v318 = vunpack.c.h.b16 %v108
  %v319 = vpack.c.b16 %v199, %v191
  %v320 = vpack.c.b16 %v200, %v192
  %v321 = vpack.c.b16 %v201, %v193
  %v322 = vpack.c.b16 %v202, %v194
  %v323 = vpack.c.b16 %v203, %v195
  %v324 = vpack.c.b16 %v204, %v196
  %v325 = vpack.c.b16 %v205, %v197
  %v326 = vpack.c.b16 %v206, %v198
  %v327 = vpack.c.b16 %v215, %v207
  %v328 = vpack.c.b16 %v216, %v208
  %v329 = vpack.c.b16 %v217, %v209
  %v330 = vpack.c.b16 %v218, %v210
  %v331 = vpack.c.b16 %v219, %v211
  %v332 = vpack.c.b16 %v220, %v212
  %v333 = vpack.c.b16 %v221, %v213
  %v334 = vpack.c.b16 %v222, %v214
  %v335 = vpack.c.b16 %v231, %v223
  %v336 = vpack.c.b16 %v232, %v224
  %v337 = vpack.c.b16 %v233, %v225
  %v338 = vpack.c.b16 %v234, %v226
  %v339 = vpack.c.b16 %v235, %v227
  %v340 = vpack.c.b16 %v236, %v228
  %v341 = vpack.c.b16 %v237, %v229
  %v342 = vpack.c.b16 %v238, %v230
  %v343 = vpack.c.b16 %v247, %v239
  %v344 = vpack.c.b16 %v248, %v240
  %v345 = vpack.c.b16 %v249, %v241
  %v346 = vpack.c.b16 %v250, %v242
  %v347 = vpack.c.b16 %v251, %v243
  %v348 = vpack.c.b16 %v252, %v244
  %v349 = vpack.c.b16 %v253, %v245
  %v350 = vpack.c.b16 %v254, %v246
  %v351 = vpack.c.b16 %v263, %v255
  %v352 = vpack.c.b16 %v264, %v256
  %v353 = vpack.c.b16 %v265, %v257
  %v354 = vpack.c.b16 %v266, %v258
  %v355 = vpack.c.b16 %v267, %v259
  %v356 = vpack.c.b16 %v268, %v260
  %v357 = vpack.c.b16 %v269, %v261
  %v358 = vpack.c.b16 %v270, %v262
  %v359 = vpack.c.b16 %v279, %v271
  %v360 = vpack.c.b16 %v280, %v272
  %v361 = vpack.c.b16 %v281, %v273
  %v362 = vpack.c.b16 %v282, %v274
  %v363 = vpack.c.b16 %v283, %v275
  %v364 = vpack.c.b16 %v284, %v276
  %v365 = vpack.c.b16 %v285, %v277
  %v366 = vpack.c.b16 %v286, %v278
  %v367 = vpack.c.b16 %v295, %v287
  %v368 = vpack.c.b16 %v296, %v288
  %v369 = vpack.c.b16 %v297, %v289
  %v370 = vpack.c.b16 %v298, %v290
  %v371 = vpack.c.b16 %v299, %v291
  %v372 = vpack.c.b16 %v300, %v292
  %v373 = vpack.c.b16 %v301, %v293
  %v374 = vpack.c.b16 %v302, %v294
  %v375 = vpack.c.b16 %v311, %v303
  %v376 = vpack.c.b16 %v312, %v304
  %v377 = vpack.c.b16 %v313, %v305
  %v378 = vpack.c.b16 %v314, %v306
  %v379 = vpack.c.b16 %v315, %v307
  %v380 = vpack.c.b16 %v316, %v308
  %v381 = vpack.c.b16 %v317, %v309
  %v382 = vpack.c.b16 %v318, %v310
  %447 = vmatpush.bf16.msra.mxu0 %v375
  %448 = vmatpush.bf16.msra.mxu0 %v367
  %449 = vmatpush.bf16.msra.mxu0 %v359
  %450 = vmatpush.bf16.msra.mxu0 %v351
  %451 = vmatpush.bf16.msra.mxu0 %v343
  %452 = vmatpush.bf16.msra.mxu0 %v335
  %453 = vmatpush.bf16.msra.mxu0 %v327
  %454 = vmatpush.bf16.msra.mxu0 %v319
  %455 = vmatmul.bf16.gmra.mxu0 %v44
  %v456 = vpop.f32.mrf.mxu0
  %v457 = vadd.f32 %v111, %v456
  %v458 = vpop.f32.mrf.mxu0
  %459 = vdwg.mxu0
  %460 = vmatpush.bf16.msra.mxu0 %v376
  %461 = vmatpush.bf16.msra.mxu0 %v368
  %462 = vmatpush.bf16.msra.mxu0 %v360
  %463 = vmatpush.bf16.msra.mxu0 %v352
  %464 = vmatpush.bf16.msra.mxu0 %v344
  %465 = vmatpush.bf16.msra.mxu0 %v336
  %466 = vmatpush.bf16.msra.mxu0 %v328
  %467 = vmatpush.bf16.msra.mxu0 %v320
  %468 = vmatmul.bf16.gmra.mxu0 %v44
  %v469 = vpop.f32.mrf.mxu0
  %v470 = vadd.f32 %v112, %v469
  %v471 = vpop.f32.mrf.mxu0
  %472 = vdwg.mxu0
  %473 = vmatpush.bf16.msra.mxu0 %v377
  %474 = vmatpush.bf16.msra.mxu0 %v369
  %475 = vmatpush.bf16.msra.mxu0 %v361
  %476 = vmatpush.bf16.msra.mxu0 %v353
  %477 = vmatpush.bf16.msra.mxu0 %v345
  %478 = vmatpush.bf16.msra.mxu0 %v337
  %479 = vmatpush.bf16.msra.mxu0 %v329
  %480 = vmatpush.bf16.msra.mxu0 %v321
  %481 = vmatmul.bf16.gmra.mxu0 %v44
  %v482 = vpop.f32.mrf.mxu0
  %v483 = vadd.f32 %v113, %v482
  %v484 = vpop.f32.mrf.mxu0
  %485 = vdwg.mxu0
  %486 = vmatpush.bf16.msra.mxu0 %v378
  %487 = vmatpush.bf16.msra.mxu0 %v370
  %488 = vmatpush.bf16.msra.mxu0 %v362
  %489 = vmatpush.bf16.msra.mxu0 %v354
  %490 = vmatpush.bf16.msra.mxu0 %v346
  %491 = vmatpush.bf16.msra.mxu0 %v338
  %492 = vmatpush.bf16.msra.mxu0 %v330
  %493 = vmatpush.bf16.msra.mxu0 %v322
  %494 = vmatmul.bf16.gmra.mxu0 %v44
  %v495 = vpop.f32.mrf.mxu0
  %v496 = vadd.f32 %v114, %v495
  %v497 = vpop.f32.mrf.mxu0
  %498 = vdwg.mxu0
  %499 = vmatpush.bf16.msra.mxu0 %v379
  %500 = vmatpush.bf16.msra.mxu0 %v371
  %501 = vmatpush.bf16.msra.mxu0 %v363
  %502 = vmatpush.bf16.msra.mxu0 %v355
  %503 = vmatpush.bf16.msra.mxu0 %v347
  %504 = vmatpush.bf16.msra.mxu0 %v339
  %505 = vmatpush.bf16.msra.mxu0 %v331
  %506 = vmatpush.bf16.msra.mxu0 %v323
  %507 = vmatmul.bf16.gmra.mxu0 %v44
  %v508 = vpop.f32.mrf.mxu0
  %v509 = vadd.f32 %v115, %v508
  %v510 = vpop.f32.mrf.mxu0
  %511 = vdwg.mxu0
  %512 = vmatpush.bf16.msra.mxu0 %v380
  %513 = vmatpush.bf16.msra.mxu0 %v372
  %514 = vmatpush.bf16.msra.mxu0 %v364
  %515 = vmatpush.bf16.msra.mxu0 %v356
  %516 = vmatpush.bf16.msra.mxu0 %v348
  %517 = vmatpush.bf16.msra.mxu0 %v340
  %518 = vmatpush.bf16.msra.mxu0 %v332
  %519 = vmatpush.bf16.msra.mxu0 %v324
  %520 = vmatmul.bf16.gmra.mxu0 %v44
  %v521 = vpop.f32.mrf.mxu0
  %v522 = vadd.f32 %v116, %v521
  %v523 = vpop.f32.mrf.mxu0
  %524 = vdwg.mxu0
  %525 = vmatpush.bf16.msra.mxu0 %v381
  %526 = vmatpush.bf16.msra.mxu0 %v373
  %527 = vmatpush.bf16.msra.mxu0 %v365
  %528 = vmatpush.bf16.msra.mxu0 %v357
  %529 = vmatpush.bf16.msra.mxu0 %v349
  %530 = vmatpush.bf16.msra.mxu0 %v341
  %531 = vmatpush.bf16.msra.mxu0 %v333
  %532 = vmatpush.bf16.msra.mxu0 %v325
  %533 = vmatmul.bf16.gmra.mxu0 %v44
  %v534 = vpop.f32.mrf.mxu0
  %v535 = vadd.f32 %v117, %v534
  %v536 = vpop.f32.mrf.mxu0
  %537 = vdwg.mxu0
  %538 = vmatpush.bf16.msra.mxu0 %v382
  %539 = vmatpush.bf16.msra.mxu0 %v374
  %540 = vmatpush.bf16.msra.mxu0 %v366
  %541 = vmatpush.bf16.msra.mxu0 %v358
  %542 = vmatpush.bf16.msra.mxu0 %v350
  %543 = vmatpush.bf16.msra.mxu0 %v342
  %544 = vmatpush.bf16.msra.mxu0 %v334
  %545 = vmatpush.bf16.msra.mxu0 %v326
  %546 = vmatmul.bf16.gmra.mxu0 %v44
  %v547 = vpop.f32.mrf.mxu0
  %v548 = vadd.f32 %v118, %v547
  %v549 = vpop.f32.mrf.mxu0
  %550 = vdwg.mxu0
  %v551 = vmax.f32 %v457, 0.0
  %v552 = vmax.f32 %v470, 0.0
  %v553 = vmax.f32 %v483, 0.0
  %v554 = vmax.f32 %v496, 0.0
  %v555 = vmax.f32 %v509, 0.0
  %v556 = vmax.f32 %v522, 0.0
  %v557 = vmax.f32 %v535, 0.0
  %v558 = vmax.f32 %v548, 0.0
  %v559 = vpack.c.bf16 %v551, %v551
  %v560 = vpack.c.bf16 %v552, %v552
  %v561 = vpack.c.bf16 %v553, %v553
  %v562 = vpack.c.bf16 %v554, %v554
  %v563 = vpack.c.bf16 %v555, %v555
  %v564 = vpack.c.bf16 %v556, %v556
  %v565 = vpack.c.bf16 %v557, %v557
  %v566 = vpack.c.bf16 %v558, %v558
  %v567 = vld [vmem:[%s3] sm:$0xff]
  %v568 = vld [vmem:[%s3 + $0x8] sm:$0xff]
  %v569 = vld [vmem:[%s3 + $0x10] sm:$0xff]
  %v570 = vld [vmem:[%s3 + $0x18] sm:$0xff]
  %v571 = vld [vmem:[%s3 + $0x20] sm:$0xff]
  %v572 = vld [vmem:[%s3 + $0x28] sm:$0xff]
  %v573 = vld [vmem:[%s3 + $0x30] sm:$0xff]
  %v574 = vld [vmem:[%s3 + $0x38] sm:$0xff]
  %v575 = vld [vmem:[%s3 + $0x40] sm:$0xff]
  %v576 = vld [vmem:[%s3 + $0x48] sm:$0xff]
  %v577 = vld [vmem:[%s3 + $0x50] sm:$0xff]
  %v578 = vld [vmem:[%s3 + $0x58] sm:$0xff]
  %v579 = vld [vmem:[%s3 + $0x60] sm:$0xff]
  %v580 = vld [vmem:[%s3 + $0x68] sm:$0xff]
  %v581 = vld [vmem:[%s3 + $0x70] sm:$0xff]
  %v582 = vld [vmem:[%s3 + $0x78] sm:$0xff]
  %v583 = vld [vmem:[%s3 + $0x80] sm:$0xff]
  %v584 = vld [vmem:[%s3 + $0x88] sm:$0xff]
  %v585 = vld [vmem:[%s3 + $0x90] sm:$0xff]
  %v586 = vld [vmem:[%s3 + $0x98] sm:$0xff]
  %v587 = vld [vmem:[%s3 + $0xa0] sm:$0xff]
  %v588 = vld [vmem:[%s3 + $0xa8] sm:$0xff]
  %v589 = vld [vmem:[%s3 + $0xb0] sm:$0xff]
  %v590 = vld [vmem:[%s3 + $0xb8] sm:$0xff]
  %v591 = vld [vmem:[%s3 + $0xc0] sm:$0xff]
  %v592 = vld [vmem:[%s3 + $0xc8] sm:$0xff]
  %v593 = vld [vmem:[%s3 + $0xd0] sm:$0xff]
  %v594 = vld [vmem:[%s3 + $0xd8] sm:$0xff]
  %v595 = vld [vmem:[%s3 + $0xe0] sm:$0xff]
  %v596 = vld [vmem:[%s3 + $0xe8] sm:$0xff]
  %v597 = vld [vmem:[%s3 + $0xf0] sm:$0xff]
  %v598 = vld [vmem:[%s3 + $0xf8] sm:$0xff]
  %v599 = vld [vmem:[%s3 + $0x100] sm:$0xff]
  %v600 = vld [vmem:[%s3 + $0x108] sm:$0xff]
  %v601 = vld [vmem:[%s3 + $0x110] sm:$0xff]
  %v602 = vld [vmem:[%s3 + $0x118] sm:$0xff]
  %v603 = vld [vmem:[%s3 + $0x120] sm:$0xff]
  %v604 = vld [vmem:[%s3 + $0x128] sm:$0xff]
  %v605 = vld [vmem:[%s3 + $0x130] sm:$0xff]
  %v606 = vld [vmem:[%s3 + $0x138] sm:$0xff]
  %v607 = vld [vmem:[%s3 + $0x140] sm:$0xff]
  %v608 = vld [vmem:[%s3 + $0x148] sm:$0xff]
  %v609 = vld [vmem:[%s3 + $0x150] sm:$0xff]
  %v610 = vld [vmem:[%s3 + $0x158] sm:$0xff]
  %v611 = vld [vmem:[%s3 + $0x160] sm:$0xff]
  %v612 = vld [vmem:[%s3 + $0x168] sm:$0xff]
  %v613 = vld [vmem:[%s3 + $0x170] sm:$0xff]
  %v614 = vld [vmem:[%s3 + $0x178] sm:$0xff]
  %v615 = vld [vmem:[%s3 + $0x180] sm:$0xff]
  %v616 = vld [vmem:[%s3 + $0x188] sm:$0xff]
  %v617 = vld [vmem:[%s3 + $0x190] sm:$0xff]
  %v618 = vld [vmem:[%s3 + $0x198] sm:$0xff]
  %v619 = vld [vmem:[%s3 + $0x1a0] sm:$0xff]
  %v620 = vld [vmem:[%s3 + $0x1a8] sm:$0xff]
  %v621 = vld [vmem:[%s3 + $0x1b0] sm:$0xff]
  %v622 = vld [vmem:[%s3 + $0x1b8] sm:$0xff]
  %v623 = vld [vmem:[%s3 + $0x1c0] sm:$0xff]
  %v624 = vld [vmem:[%s3 + $0x1c8] sm:$0xff]
  %v625 = vld [vmem:[%s3 + $0x1d0] sm:$0xff]
  %v626 = vld [vmem:[%s3 + $0x1d8] sm:$0xff]
  %v627 = vld [vmem:[%s3 + $0x1e0] sm:$0xff]
  %v628 = vld [vmem:[%s3 + $0x1e8] sm:$0xff]
  %v629 = vld [vmem:[%s3 + $0x1f0] sm:$0xff]
  %v630 = vld [vmem:[%s3 + $0x1f8] sm:$0xff]
  %v631 = vld [vmem:[%s3 + $0x200] sm:$0xff]
  %v632 = vld [vmem:[%s3 + $0x208] sm:$0xff]
  %v633 = vld [vmem:[%s3 + $0x210] sm:$0xff]
  %v634 = vld [vmem:[%s3 + $0x218] sm:$0xff]
  %v635 = vld [vmem:[%s3 + $0x220] sm:$0xff]
  %v636 = vld [vmem:[%s3 + $0x228] sm:$0xff]
  %v637 = vld [vmem:[%s3 + $0x230] sm:$0xff]
  %v638 = vld [vmem:[%s3 + $0x238] sm:$0xff]
  %v639 = vld [vmem:[%s3 + $0x240] sm:$0xff]
  %v640 = vld [vmem:[%s3 + $0x248] sm:$0xff]
  %v641 = vld [vmem:[%s3 + $0x250] sm:$0xff]
  %v642 = vld [vmem:[%s3 + $0x258] sm:$0xff]
  %v643 = vld [vmem:[%s3 + $0x260] sm:$0xff]
  %v644 = vld [vmem:[%s3 + $0x268] sm:$0xff]
  %v645 = vld [vmem:[%s3 + $0x270] sm:$0xff]
  %v646 = vld [vmem:[%s3 + $0x278] sm:$0xff]
  %v647 = vld [vmem:[%s3 + $0x280] sm:$0xff]
  %v648 = vld [vmem:[%s3 + $0x288] sm:$0xff]
  %v649 = vld [vmem:[%s3 + $0x290] sm:$0xff]
  %v650 = vld [vmem:[%s3 + $0x298] sm:$0xff]
  %v651 = vld [vmem:[%s3 + $0x2a0] sm:$0xff]
  %v652 = vld [vmem:[%s3 + $0x2a8] sm:$0xff]
  %v653 = vld [vmem:[%s3 + $0x2b0] sm:$0xff]
  %v654 = vld [vmem:[%s3 + $0x2b8] sm:$0xff]
  %v655 = vld [vmem:[%s3 + $0x2c0] sm:$0xff]
  %v656 = vld [vmem:[%s3 + $0x2c8] sm:$0xff]
  %v657 = vld [vmem:[%s3 + $0x2d0] sm:$0xff]
  %v658 = vld [vmem:[%s3 + $0x2d8] sm:$0xff]
  %v659 = vld [vmem:[%s3 + $0x2e0] sm:$0xff]
  %v660 = vld [vmem:[%s3 + $0x2e8] sm:$0xff]
  %v661 = vld [vmem:[%s3 + $0x2f0] sm:$0xff]
  %v662 = vld [vmem:[%s3 + $0x2f8] sm:$0xff]
  %v663 = vld [vmem:[%s3 + $0x300] sm:$0xff]
  %v664 = vld [vmem:[%s3 + $0x308] sm:$0xff]
  %v665 = vld [vmem:[%s3 + $0x310] sm:$0xff]
  %v666 = vld [vmem:[%s3 + $0x318] sm:$0xff]
  %v667 = vld [vmem:[%s3 + $0x320] sm:$0xff]
  %v668 = vld [vmem:[%s3 + $0x328] sm:$0xff]
  %v669 = vld [vmem:[%s3 + $0x330] sm:$0xff]
  %v670 = vld [vmem:[%s3 + $0x338] sm:$0xff]
  %v671 = vld [vmem:[%s3 + $0x340] sm:$0xff]
  %v672 = vld [vmem:[%s3 + $0x348] sm:$0xff]
  %v673 = vld [vmem:[%s3 + $0x350] sm:$0xff]
  %v674 = vld [vmem:[%s3 + $0x358] sm:$0xff]
  %v675 = vld [vmem:[%s3 + $0x360] sm:$0xff]
  %v676 = vld [vmem:[%s3 + $0x368] sm:$0xff]
  %v677 = vld [vmem:[%s3 + $0x370] sm:$0xff]
  %v678 = vld [vmem:[%s3 + $0x378] sm:$0xff]
  %v679 = vld [vmem:[%s3 + $0x380] sm:$0xff]
  %v680 = vld [vmem:[%s3 + $0x388] sm:$0xff]
  %v681 = vld [vmem:[%s3 + $0x390] sm:$0xff]
  %v682 = vld [vmem:[%s3 + $0x398] sm:$0xff]
  %v683 = vld [vmem:[%s3 + $0x3a0] sm:$0xff]
  %v684 = vld [vmem:[%s3 + $0x3a8] sm:$0xff]
  %v685 = vld [vmem:[%s3 + $0x3b0] sm:$0xff]
  %v686 = vld [vmem:[%s3 + $0x3b8] sm:$0xff]
  %v687 = vld [vmem:[%s3 + $0x3c0] sm:$0xff]
  %v688 = vld [vmem:[%s3 + $0x3c8] sm:$0xff]
  %v689 = vld [vmem:[%s3 + $0x3d0] sm:$0xff]
  %v690 = vld [vmem:[%s3 + $0x3d8] sm:$0xff]
  %v691 = vld [vmem:[%s3 + $0x3e0] sm:$0xff]
  %v692 = vld [vmem:[%s3 + $0x3e8] sm:$0xff]
  %v693 = vld [vmem:[%s3 + $0x3f0] sm:$0xff]
  %v694 = vld [vmem:[%s3 + $0x3f8] sm:$0xff]
  %v695 = vld [vmem:[%s3 + $0x400] sm:$0xff]
  %v696 = vld [vmem:[%s3 + $0x408] sm:$0xff]
  %v697 = vld [vmem:[%s3 + $0x410] sm:$0xff]
  %v698 = vld [vmem:[%s3 + $0x418] sm:$0xff]
  %v699 = vld [vmem:[%s3 + $0x420] sm:$0xff]
  %v700 = vld [vmem:[%s3 + $0x428] sm:$0xff]
  %v701 = vld [vmem:[%s3 + $0x430] sm:$0xff]
  %v702 = vld [vmem:[%s3 + $0x438] sm:$0xff]
  %v703 = vld [vmem:[%s3 + $0x440] sm:$0xff]
  %v704 = vld [vmem:[%s3 + $0x448] sm:$0xff]
  %v705 = vld [vmem:[%s3 + $0x450] sm:$0xff]
  %v706 = vld [vmem:[%s3 + $0x458] sm:$0xff]
  %v707 = vld [vmem:[%s3 + $0x460] sm:$0xff]
  %v708 = vld [vmem:[%s3 + $0x468] sm:$0xff]
  %v709 = vld [vmem:[%s3 + $0x470] sm:$0xff]
  %v710 = vld [vmem:[%s3 + $0x478] sm:$0xff]
  %v711 = vld [vmem:[%s3 + $0x480] sm:$0xff]
  %v712 = vld [vmem:[%s3 + $0x488] sm:$0xff]
  %v713 = vld [vmem:[%s3 + $0x490] sm:$0xff]
  %v714 = vld [vmem:[%s3 + $0x498] sm:$0xff]
  %v715 = vld [vmem:[%s3 + $0x4a0] sm:$0xff]
  %v716 = vld [vmem:[%s3 + $0x4a8] sm:$0xff]
  %v717 = vld [vmem:[%s3 + $0x4b0] sm:$0xff]
  %v718 = vld [vmem:[%s3 + $0x4b8] sm:$0xff]
  %v719 = vld [vmem:[%s3 + $0x4c0] sm:$0xff]
  %v720 = vld [vmem:[%s3 + $0x4c8] sm:$0xff]
  %v721 = vld [vmem:[%s3 + $0x4d0] sm:$0xff]
  %v722 = vld [vmem:[%s3 + $0x4d8] sm:$0xff]
  %v723 = vld [vmem:[%s3 + $0x4e0] sm:$0xff]
  %v724 = vld [vmem:[%s3 + $0x4e8] sm:$0xff]
  %v725 = vld [vmem:[%s3 + $0x4f0] sm:$0xff]
  %v726 = vld [vmem:[%s3 + $0x4f8] sm:$0xff]
  %v727 = vld [vmem:[%s3 + $0x500] sm:$0xff]
  %v728 = vld [vmem:[%s3 + $0x508] sm:$0xff]
  %v729 = vld [vmem:[%s3 + $0x510] sm:$0xff]
  %v730 = vld [vmem:[%s3 + $0x518] sm:$0xff]
  %v731 = vld [vmem:[%s3 + $0x520] sm:$0xff]
  %v732 = vld [vmem:[%s3 + $0x528] sm:$0xff]
  %v733 = vld [vmem:[%s3 + $0x530] sm:$0xff]
  %v734 = vld [vmem:[%s3 + $0x538] sm:$0xff]
  %v735 = vld [vmem:[%s3 + $0x540] sm:$0xff]
  %v736 = vld [vmem:[%s3 + $0x548] sm:$0xff]
  %v737 = vld [vmem:[%s3 + $0x550] sm:$0xff]
  %v738 = vld [vmem:[%s3 + $0x558] sm:$0xff]
  %v739 = vld [vmem:[%s3 + $0x560] sm:$0xff]
  %v740 = vld [vmem:[%s3 + $0x568] sm:$0xff]
  %v741 = vld [vmem:[%s3 + $0x570] sm:$0xff]
  %v742 = vld [vmem:[%s3 + $0x578] sm:$0xff]
  %v743 = vld [vmem:[%s3 + $0x580] sm:$0xff]
  %v744 = vld [vmem:[%s3 + $0x588] sm:$0xff]
  %v745 = vld [vmem:[%s3 + $0x590] sm:$0xff]
  %v746 = vld [vmem:[%s3 + $0x598] sm:$0xff]
  %v747 = vld [vmem:[%s3 + $0x5a0] sm:$0xff]
  %v748 = vld [vmem:[%s3 + $0x5a8] sm:$0xff]
  %v749 = vld [vmem:[%s3 + $0x5b0] sm:$0xff]
  %v750 = vld [vmem:[%s3 + $0x5b8] sm:$0xff]
  %v751 = vld [vmem:[%s3 + $0x5c0] sm:$0xff]
  %v752 = vld [vmem:[%s3 + $0x5c8] sm:$0xff]
  %v753 = vld [vmem:[%s3 + $0x5d0] sm:$0xff]
  %v754 = vld [vmem:[%s3 + $0x5d8] sm:$0xff]
  %v755 = vld [vmem:[%s3 + $0x5e0] sm:$0xff]
  %v756 = vld [vmem:[%s3 + $0x5e8] sm:$0xff]
  %v757 = vld [vmem:[%s3 + $0x5f0] sm:$0xff]
  %v758 = vld [vmem:[%s3 + $0x5f8] sm:$0xff]
  %v759 = vld [vmem:[%s3 + $0x600] sm:$0xff]
  %v760 = vld [vmem:[%s3 + $0x608] sm:$0xff]
  %v761 = vld [vmem:[%s3 + $0x610] sm:$0xff]
  %v762 = vld [vmem:[%s3 + $0x618] sm:$0xff]
  %v763 = vld [vmem:[%s3 + $0x620] sm:$0xff]
  %v764 = vld [vmem:[%s3 + $0x628] sm:$0xff]
  %v765 = vld [vmem:[%s3 + $0x630] sm:$0xff]
  %v766 = vld [vmem:[%s3 + $0x638] sm:$0xff]
  %v767 = vld [vmem:[%s3 + $0x640] sm:$0xff]
  %v768 = vld [vmem:[%s3 + $0x648] sm:$0xff]
  %v769 = vld [vmem:[%s3 + $0x650] sm:$0xff]
  %v770 = vld [vmem:[%s3 + $0x658] sm:$0xff]
  %v771 = vld [vmem:[%s3 + $0x660] sm:$0xff]
  %v772 = vld [vmem:[%s3 + $0x668] sm:$0xff]
  %v773 = vld [vmem:[%s3 + $0x670] sm:$0xff]
  %v774 = vld [vmem:[%s3 + $0x678] sm:$0xff]
  %v775 = vld [vmem:[%s3 + $0x680] sm:$0xff]
  %v776 = vld [vmem:[%s3 + $0x688] sm:$0xff]
  %v777 = vld [vmem:[%s3 + $0x690] sm:$0xff]
  %v778 = vld [vmem:[%s3 + $0x698] sm:$0xff]
  %v779 = vld [vmem:[%s3 + $0x6a0] sm:$0xff]
  %v780 = vld [vmem:[%s3 + $0x6a8] sm:$0xff]
  %v781 = vld [vmem:[%s3 + $0x6b0] sm:$0xff]
  %v782 = vld [vmem:[%s3 + $0x6b8] sm:$0xff]
  %v783 = vld [vmem:[%s3 + $0x6c0] sm:$0xff]
  %v784 = vld [vmem:[%s3 + $0x6c8] sm:$0xff]
  %v785 = vld [vmem:[%s3 + $0x6d0] sm:$0xff]
  %v786 = vld [vmem:[%s3 + $0x6d8] sm:$0xff]
  %v787 = vld [vmem:[%s3 + $0x6e0] sm:$0xff]
  %v788 = vld [vmem:[%s3 + $0x6e8] sm:$0xff]
  %v789 = vld [vmem:[%s3 + $0x6f0] sm:$0xff]
  %v790 = vld [vmem:[%s3 + $0x6f8] sm:$0xff]
  %v791 = vld [vmem:[%s3 + $0x700] sm:$0xff]
  %v792 = vld [vmem:[%s3 + $0x708] sm:$0xff]
  %v793 = vld [vmem:[%s3 + $0x710] sm:$0xff]
  %v794 = vld [vmem:[%s3 + $0x718] sm:$0xff]
  %v795 = vld [vmem:[%s3 + $0x720] sm:$0xff]
  %v796 = vld [vmem:[%s3 + $0x728] sm:$0xff]
  %v797 = vld [vmem:[%s3 + $0x730] sm:$0xff]
  %v798 = vld [vmem:[%s3 + $0x738] sm:$0xff]
  %v799 = vld [vmem:[%s3 + $0x740] sm:$0xff]
  %v800 = vld [vmem:[%s3 + $0x748] sm:$0xff]
  %v801 = vld [vmem:[%s3 + $0x750] sm:$0xff]
  %v802 = vld [vmem:[%s3 + $0x758] sm:$0xff]
  %v803 = vld [vmem:[%s3 + $0x760] sm:$0xff]
  %v804 = vld [vmem:[%s3 + $0x768] sm:$0xff]
  %v805 = vld [vmem:[%s3 + $0x770] sm:$0xff]
  %v806 = vld [vmem:[%s3 + $0x778] sm:$0xff]
  %v807 = vld [vmem:[%s3 + $0x780] sm:$0xff]
  %v808 = vld [vmem:[%s3 + $0x788] sm:$0xff]
  %v809 = vld [vmem:[%s3 + $0x790] sm:$0xff]
  %v810 = vld [vmem:[%s3 + $0x798] sm:$0xff]
  %v811 = vld [vmem:[%s3 + $0x7a0] sm:$0xff]
  %v812 = vld [vmem:[%s3 + $0x7a8] sm:$0xff]
  %v813 = vld [vmem:[%s3 + $0x7b0] sm:$0xff]
  %v814 = vld [vmem:[%s3 + $0x7b8] sm:$0xff]
  %v815 = vld [vmem:[%s3 + $0x7c0] sm:$0xff]
  %v816 = vld [vmem:[%s3 + $0x7c8] sm:$0xff]
  %v817 = vld [vmem:[%s3 + $0x7d0] sm:$0xff]
  %v818 = vld [vmem:[%s3 + $0x7d8] sm:$0xff]
  %v819 = vld [vmem:[%s3 + $0x7e0] sm:$0xff]
  %v820 = vld [vmem:[%s3 + $0x7e8] sm:$0xff]
  %v821 = vld [vmem:[%s3 + $0x7f0] sm:$0xff]
  %v822 = vld [vmem:[%s3 + $0x7f8] sm:$0xff]
  %v823 = vld [vmem:[%s4] sm:$0xf]
  %v825 = vperm.slane %v823, 0
  %v826 = vperm.slane %v823, 1
  %v827 = vperm.slane %v823, 2
  %v828 = vperm.slane %v823, 3
  %v1089 = vunpack.c.l.b16 %v567
  %v1090 = vunpack.c.h.b16 %v567
  %v1091 = vunpack.c.l.b16 %v568
  %v1092 = vunpack.c.h.b16 %v568
  %v1093 = vunpack.c.l.b16 %v569
  %v1094 = vunpack.c.h.b16 %v569
  %v1095 = vunpack.c.l.b16 %v570
  %v1096 = vunpack.c.h.b16 %v570
  %v1097 = vunpack.c.l.b16 %v571
  %v1098 = vunpack.c.h.b16 %v571
  %v1099 = vunpack.c.l.b16 %v572
  %v1100 = vunpack.c.h.b16 %v572
  %v1101 = vunpack.c.l.b16 %v573
  %v1102 = vunpack.c.h.b16 %v573
  %v1103 = vunpack.c.l.b16 %v574
  %v1104 = vunpack.c.h.b16 %v574
  %v1105 = vunpack.c.l.b16 %v575
  %v1106 = vunpack.c.h.b16 %v575
  %v1107 = vunpack.c.l.b16 %v576
  %v1108 = vunpack.c.h.b16 %v576
  %v1109 = vunpack.c.l.b16 %v577
  %v1110 = vunpack.c.h.b16 %v577
  %v1111 = vunpack.c.l.b16 %v578
  %v1112 = vunpack.c.h.b16 %v578
  %v1113 = vunpack.c.l.b16 %v579
  %v1114 = vunpack.c.h.b16 %v579
  %v1115 = vunpack.c.l.b16 %v580
  %v1116 = vunpack.c.h.b16 %v580
  %v1117 = vunpack.c.l.b16 %v581
  %v1118 = vunpack.c.h.b16 %v581
  %v1119 = vunpack.c.l.b16 %v582
  %v1120 = vunpack.c.h.b16 %v582
  %v1121 = vunpack.c.l.b16 %v583
  %v1122 = vunpack.c.h.b16 %v583
  %v1123 = vunpack.c.l.b16 %v584
  %v1124 = vunpack.c.h.b16 %v584
  %v1125 = vunpack.c.l.b16 %v585
  %v1126 = vunpack.c.h.b16 %v585
  %v1127 = vunpack.c.l.b16 %v586
  %v1128 = vunpack.c.h.b16 %v586
  %v1129 = vunpack.c.l.b16 %v587
  %v1130 = vunpack.c.h.b16 %v587
  %v1131 = vunpack.c.l.b16 %v588
  %v1132 = vunpack.c.h.b16 %v588
  %v1133 = vunpack.c.l.b16 %v589
  %v1134 = vunpack.c.h.b16 %v589
  %v1135 = vunpack.c.l.b16 %v590
  %v1136 = vunpack.c.h.b16 %v590
  %v1137 = vunpack.c.l.b16 %v591
  %v1138 = vunpack.c.h.b16 %v591
  %v1139 = vunpack.c.l.b16 %v592
  %v1140 = vunpack.c.h.b16 %v592
  %v1141 = vunpack.c.l.b16 %v593
  %v1142 = vunpack.c.h.b16 %v593
  %v1143 = vunpack.c.l.b16 %v594
  %v1144 = vunpack.c.h.b16 %v594
  %v1145 = vunpack.c.l.b16 %v595
  %v1146 = vunpack.c.h.b16 %v595
  %v1147 = vunpack.c.l.b16 %v596
  %v1148 = vunpack.c.h.b16 %v596
  %v1149 = vunpack.c.l.b16 %v597
  %v1150 = vunpack.c.h.b16 %v597
  %v1151 = vunpack.c.l.b16 %v598
  %v1152 = vunpack.c.h.b16 %v598
  %v1153 = vunpack.c.l.b16 %v599
  %v1154 = vunpack.c.h.b16 %v599
  %v1155 = vunpack.c.l.b16 %v600
  %v1156 = vunpack.c.h.b16 %v600
  %v1157 = vunpack.c.l.b16 %v601
  %v1158 = vunpack.c.h.b16 %v601
  %v1159 = vunpack.c.l.b16 %v602
  %v1160 = vunpack.c.h.b16 %v602
  %v1161 = vunpack.c.l.b16 %v603
  %v1162 = vunpack.c.h.b16 %v603
  %v1163 = vunpack.c.l.b16 %v604
  %v1164 = vunpack.c.h.b16 %v604
  %v1165 = vunpack.c.l.b16 %v605
  %v1166 = vunpack.c.h.b16 %v605
  %v1167 = vunpack.c.l.b16 %v606
  %v1168 = vunpack.c.h.b16 %v606
  %v1169 = vunpack.c.l.b16 %v607
  %v1170 = vunpack.c.h.b16 %v607
  %v1171 = vunpack.c.l.b16 %v608
  %v1172 = vunpack.c.h.b16 %v608
  %v1173 = vunpack.c.l.b16 %v609
  %v1174 = vunpack.c.h.b16 %v609
  %v1175 = vunpack.c.l.b16 %v610
  %v1176 = vunpack.c.h.b16 %v610
  %v1177 = vunpack.c.l.b16 %v611
  %v1178 = vunpack.c.h.b16 %v611
  %v1179 = vunpack.c.l.b16 %v612
  %v1180 = vunpack.c.h.b16 %v612
  %v1181 = vunpack.c.l.b16 %v613
  %v1182 = vunpack.c.h.b16 %v613
  %v1183 = vunpack.c.l.b16 %v614
  %v1184 = vunpack.c.h.b16 %v614
  %v1185 = vunpack.c.l.b16 %v615
  %v1186 = vunpack.c.h.b16 %v615
  %v1187 = vunpack.c.l.b16 %v616
  %v1188 = vunpack.c.h.b16 %v616
  %v1189 = vunpack.c.l.b16 %v617
  %v1190 = vunpack.c.h.b16 %v617
  %v1191 = vunpack.c.l.b16 %v618
  %v1192 = vunpack.c.h.b16 %v618
  %v1193 = vunpack.c.l.b16 %v619
  %v1194 = vunpack.c.h.b16 %v619
  %v1195 = vunpack.c.l.b16 %v620
  %v1196 = vunpack.c.h.b16 %v620
  %v1197 = vunpack.c.l.b16 %v621
  %v1198 = vunpack.c.h.b16 %v621
  %v1199 = vunpack.c.l.b16 %v622
  %v1200 = vunpack.c.h.b16 %v622
  %v1201 = vunpack.c.l.b16 %v623
  %v1202 = vunpack.c.h.b16 %v623
  %v1203 = vunpack.c.l.b16 %v624
  %v1204 = vunpack.c.h.b16 %v624
  %v1205 = vunpack.c.l.b16 %v625
  %v1206 = vunpack.c.h.b16 %v625
  %v1207 = vunpack.c.l.b16 %v626
  %v1208 = vunpack.c.h.b16 %v626
  %v1209 = vunpack.c.l.b16 %v627
  %v1210 = vunpack.c.h.b16 %v627
  %v1211 = vunpack.c.l.b16 %v628
  %v1212 = vunpack.c.h.b16 %v628
  %v1213 = vunpack.c.l.b16 %v629
  %v1214 = vunpack.c.h.b16 %v629
  %v1215 = vunpack.c.l.b16 %v630
  %v1216 = vunpack.c.h.b16 %v630
  %v1217 = vunpack.c.l.b16 %v631
  %v1218 = vunpack.c.h.b16 %v631
  %v1219 = vunpack.c.l.b16 %v632
  %v1220 = vunpack.c.h.b16 %v632
  %v1221 = vunpack.c.l.b16 %v633
  %v1222 = vunpack.c.h.b16 %v633
  %v1223 = vunpack.c.l.b16 %v634
  %v1224 = vunpack.c.h.b16 %v634
  %v1225 = vunpack.c.l.b16 %v635
  %v1226 = vunpack.c.h.b16 %v635
  %v1227 = vunpack.c.l.b16 %v636
  %v1228 = vunpack.c.h.b16 %v636
  %v1229 = vunpack.c.l.b16 %v637
  %v1230 = vunpack.c.h.b16 %v637
  %v1231 = vunpack.c.l.b16 %v638
  %v1232 = vunpack.c.h.b16 %v638
  %v1233 = vunpack.c.l.b16 %v639
  %v1234 = vunpack.c.h.b16 %v639
  %v1235 = vunpack.c.l.b16 %v640
  %v1236 = vunpack.c.h.b16 %v640
  %v1237 = vunpack.c.l.b16 %v641
  %v1238 = vunpack.c.h.b16 %v641
  %v1239 = vunpack.c.l.b16 %v642
  %v1240 = vunpack.c.h.b16 %v642
  %v1241 = vunpack.c.l.b16 %v643
  %v1242 = vunpack.c.h.b16 %v643
  %v1243 = vunpack.c.l.b16 %v644
  %v1244 = vunpack.c.h.b16 %v644
  %v1245 = vunpack.c.l.b16 %v645
  %v1246 = vunpack.c.h.b16 %v645
  %v1247 = vunpack.c.l.b16 %v646
  %v1248 = vunpack.c.h.b16 %v646
  %v1249 = vunpack.c.l.b16 %v647
  %v1250 = vunpack.c.h.b16 %v647
  %v1251 = vunpack.c.l.b16 %v648
  %v1252 = vunpack.c.h.b16 %v648
  %v1253 = vunpack.c.l.b16 %v649
  %v1254 = vunpack.c.h.b16 %v649
  %v1255 = vunpack.c.l.b16 %v650
  %v1256 = vunpack.c.h.b16 %v650
  %v1257 = vunpack.c.l.b16 %v651
  %v1258 = vunpack.c.h.b16 %v651
  %v1259 = vunpack.c.l.b16 %v652
  %v1260 = vunpack.c.h.b16 %v652
  %v1261 = vunpack.c.l.b16 %v653
  %v1262 = vunpack.c.h.b16 %v653
  %v1263 = vunpack.c.l.b16 %v654
  %v1264 = vunpack.c.h.b16 %v654
  %v1265 = vunpack.c.l.b16 %v655
  %v1266 = vunpack.c.h.b16 %v655
  %v1267 = vunpack.c.l.b16 %v656
  %v1268 = vunpack.c.h.b16 %v656
  %v1269 = vunpack.c.l.b16 %v657
  %v1270 = vunpack.c.h.b16 %v657
  %v1271 = vunpack.c.l.b16 %v658
  %v1272 = vunpack.c.h.b16 %v658
  %v1273 = vunpack.c.l.b16 %v659
  %v1274 = vunpack.c.h.b16 %v659
  %v1275 = vunpack.c.l.b16 %v660
  %v1276 = vunpack.c.h.b16 %v660
  %v1277 = vunpack.c.l.b16 %v661
  %v1278 = vunpack.c.h.b16 %v661
  %v1279 = vunpack.c.l.b16 %v662
  %v1280 = vunpack.c.h.b16 %v662
  %v1281 = vunpack.c.l.b16 %v663
  %v1282 = vunpack.c.h.b16 %v663
  %v1283 = vunpack.c.l.b16 %v664
  %v1284 = vunpack.c.h.b16 %v664
  %v1285 = vunpack.c.l.b16 %v665
  %v1286 = vunpack.c.h.b16 %v665
  %v1287 = vunpack.c.l.b16 %v666
  %v1288 = vunpack.c.h.b16 %v666
  %v1289 = vunpack.c.l.b16 %v667
  %v1290 = vunpack.c.h.b16 %v667
  %v1291 = vunpack.c.l.b16 %v668
  %v1292 = vunpack.c.h.b16 %v668
  %v1293 = vunpack.c.l.b16 %v669
  %v1294 = vunpack.c.h.b16 %v669
  %v1295 = vunpack.c.l.b16 %v670
  %v1296 = vunpack.c.h.b16 %v670
  %v1297 = vunpack.c.l.b16 %v671
  %v1298 = vunpack.c.h.b16 %v671
  %v1299 = vunpack.c.l.b16 %v672
  %v1300 = vunpack.c.h.b16 %v672
  %v1301 = vunpack.c.l.b16 %v673
  %v1302 = vunpack.c.h.b16 %v673
  %v1303 = vunpack.c.l.b16 %v674
  %v1304 = vunpack.c.h.b16 %v674
  %v1305 = vunpack.c.l.b16 %v675
  %v1306 = vunpack.c.h.b16 %v675
  %v1307 = vunpack.c.l.b16 %v676
  %v1308 = vunpack.c.h.b16 %v676
  %v1309 = vunpack.c.l.b16 %v677
  %v1310 = vunpack.c.h.b16 %v677
  %v1311 = vunpack.c.l.b16 %v678
  %v1312 = vunpack.c.h.b16 %v678
  %v1313 = vunpack.c.l.b16 %v679
  %v1314 = vunpack.c.h.b16 %v679
  %v1315 = vunpack.c.l.b16 %v680
  %v1316 = vunpack.c.h.b16 %v680
  %v1317 = vunpack.c.l.b16 %v681
  %v1318 = vunpack.c.h.b16 %v681
  %v1319 = vunpack.c.l.b16 %v682
  %v1320 = vunpack.c.h.b16 %v682
  %v1321 = vunpack.c.l.b16 %v683
  %v1322 = vunpack.c.h.b16 %v683
  %v1323 = vunpack.c.l.b16 %v684
  %v1324 = vunpack.c.h.b16 %v684
  %v1325 = vunpack.c.l.b16 %v685
  %v1326 = vunpack.c.h.b16 %v685
  %v1327 = vunpack.c.l.b16 %v686
  %v1328 = vunpack.c.h.b16 %v686
  %v1329 = vunpack.c.l.b16 %v687
  %v1330 = vunpack.c.h.b16 %v687
  %v1331 = vunpack.c.l.b16 %v688
  %v1332 = vunpack.c.h.b16 %v688
  %v1333 = vunpack.c.l.b16 %v689
  %v1334 = vunpack.c.h.b16 %v689
  %v1335 = vunpack.c.l.b16 %v690
  %v1336 = vunpack.c.h.b16 %v690
  %v1337 = vunpack.c.l.b16 %v691
  %v1338 = vunpack.c.h.b16 %v691
  %v1339 = vunpack.c.l.b16 %v692
  %v1340 = vunpack.c.h.b16 %v692
  %v1341 = vunpack.c.l.b16 %v693
  %v1342 = vunpack.c.h.b16 %v693
  %v1343 = vunpack.c.l.b16 %v694
  %v1344 = vunpack.c.h.b16 %v694
  %v1345 = vunpack.c.l.b16 %v695
  %v1346 = vunpack.c.h.b16 %v695
  %v1347 = vunpack.c.l.b16 %v696
  %v1348 = vunpack.c.h.b16 %v696
  %v1349 = vunpack.c.l.b16 %v697
  %v1350 = vunpack.c.h.b16 %v697
  %v1351 = vunpack.c.l.b16 %v698
  %v1352 = vunpack.c.h.b16 %v698
  %v1353 = vunpack.c.l.b16 %v699
  %v1354 = vunpack.c.h.b16 %v699
  %v1355 = vunpack.c.l.b16 %v700
  %v1356 = vunpack.c.h.b16 %v700
  %v1357 = vunpack.c.l.b16 %v701
  %v1358 = vunpack.c.h.b16 %v701
  %v1359 = vunpack.c.l.b16 %v702
  %v1360 = vunpack.c.h.b16 %v702
  %v1361 = vunpack.c.l.b16 %v703
  %v1362 = vunpack.c.h.b16 %v703
  %v1363 = vunpack.c.l.b16 %v704
  %v1364 = vunpack.c.h.b16 %v704
  %v1365 = vunpack.c.l.b16 %v705
  %v1366 = vunpack.c.h.b16 %v705
  %v1367 = vunpack.c.l.b16 %v706
  %v1368 = vunpack.c.h.b16 %v706
  %v1369 = vunpack.c.l.b16 %v707
  %v1370 = vunpack.c.h.b16 %v707
  %v1371 = vunpack.c.l.b16 %v708
  %v1372 = vunpack.c.h.b16 %v708
  %v1373 = vunpack.c.l.b16 %v709
  %v1374 = vunpack.c.h.b16 %v709
  %v1375 = vunpack.c.l.b16 %v710
  %v1376 = vunpack.c.h.b16 %v710
  %v1377 = vunpack.c.l.b16 %v711
  %v1378 = vunpack.c.h.b16 %v711
  %v1379 = vunpack.c.l.b16 %v712
  %v1380 = vunpack.c.h.b16 %v712
  %v1381 = vunpack.c.l.b16 %v713
  %v1382 = vunpack.c.h.b16 %v713
  %v1383 = vunpack.c.l.b16 %v714
  %v1384 = vunpack.c.h.b16 %v714
  %v1385 = vunpack.c.l.b16 %v715
  %v1386 = vunpack.c.h.b16 %v715
  %v1387 = vunpack.c.l.b16 %v716
  %v1388 = vunpack.c.h.b16 %v716
  %v1389 = vunpack.c.l.b16 %v717
  %v1390 = vunpack.c.h.b16 %v717
  %v1391 = vunpack.c.l.b16 %v718
  %v1392 = vunpack.c.h.b16 %v718
  %v1393 = vunpack.c.l.b16 %v719
  %v1394 = vunpack.c.h.b16 %v719
  %v1395 = vunpack.c.l.b16 %v720
  %v1396 = vunpack.c.h.b16 %v720
  %v1397 = vunpack.c.l.b16 %v721
  %v1398 = vunpack.c.h.b16 %v721
  %v1399 = vunpack.c.l.b16 %v722
  %v1400 = vunpack.c.h.b16 %v722
  %v1401 = vunpack.c.l.b16 %v723
  %v1402 = vunpack.c.h.b16 %v723
  %v1403 = vunpack.c.l.b16 %v724
  %v1404 = vunpack.c.h.b16 %v724
  %v1405 = vunpack.c.l.b16 %v725
  %v1406 = vunpack.c.h.b16 %v725
  %v1407 = vunpack.c.l.b16 %v726
  %v1408 = vunpack.c.h.b16 %v726
  %v1409 = vunpack.c.l.b16 %v727
  %v1410 = vunpack.c.h.b16 %v727
  %v1411 = vunpack.c.l.b16 %v728
  %v1412 = vunpack.c.h.b16 %v728
  %v1413 = vunpack.c.l.b16 %v729
  %v1414 = vunpack.c.h.b16 %v729
  %v1415 = vunpack.c.l.b16 %v730
  %v1416 = vunpack.c.h.b16 %v730
  %v1417 = vunpack.c.l.b16 %v731
  %v1418 = vunpack.c.h.b16 %v731
  %v1419 = vunpack.c.l.b16 %v732
  %v1420 = vunpack.c.h.b16 %v732
  %v1421 = vunpack.c.l.b16 %v733
  %v1422 = vunpack.c.h.b16 %v733
  %v1423 = vunpack.c.l.b16 %v734
  %v1424 = vunpack.c.h.b16 %v734
  %v1425 = vunpack.c.l.b16 %v735
  %v1426 = vunpack.c.h.b16 %v735
  %v1427 = vunpack.c.l.b16 %v736
  %v1428 = vunpack.c.h.b16 %v736
  %v1429 = vunpack.c.l.b16 %v737
  %v1430 = vunpack.c.h.b16 %v737
  %v1431 = vunpack.c.l.b16 %v738
  %v1432 = vunpack.c.h.b16 %v738
  %v1433 = vunpack.c.l.b16 %v739
  %v1434 = vunpack.c.h.b16 %v739
  %v1435 = vunpack.c.l.b16 %v740
  %v1436 = vunpack.c.h.b16 %v740
  %v1437 = vunpack.c.l.b16 %v741
  %v1438 = vunpack.c.h.b16 %v741
  %v1439 = vunpack.c.l.b16 %v742
  %v1440 = vunpack.c.h.b16 %v742
  %v1441 = vunpack.c.l.b16 %v743
  %v1442 = vunpack.c.h.b16 %v743
  %v1443 = vunpack.c.l.b16 %v744
  %v1444 = vunpack.c.h.b16 %v744
  %v1445 = vunpack.c.l.b16 %v745
  %v1446 = vunpack.c.h.b16 %v745
  %v1447 = vunpack.c.l.b16 %v746
  %v1448 = vunpack.c.h.b16 %v746
  %v1449 = vunpack.c.l.b16 %v747
  %v1450 = vunpack.c.h.b16 %v747
  %v1451 = vunpack.c.l.b16 %v748
  %v1452 = vunpack.c.h.b16 %v748
  %v1453 = vunpack.c.l.b16 %v749
  %v1454 = vunpack.c.h.b16 %v749
  %v1455 = vunpack.c.l.b16 %v750
  %v1456 = vunpack.c.h.b16 %v750
  %v1457 = vunpack.c.l.b16 %v751
  %v1458 = vunpack.c.h.b16 %v751
  %v1459 = vunpack.c.l.b16 %v752
  %v1460 = vunpack.c.h.b16 %v752
  %v1461 = vunpack.c.l.b16 %v753
  %v1462 = vunpack.c.h.b16 %v753
  %v1463 = vunpack.c.l.b16 %v754
  %v1464 = vunpack.c.h.b16 %v754
  %v1465 = vunpack.c.l.b16 %v755
  %v1466 = vunpack.c.h.b16 %v755
  %v1467 = vunpack.c.l.b16 %v756
  %v1468 = vunpack.c.h.b16 %v756
  %v1469 = vunpack.c.l.b16 %v757
  %v1470 = vunpack.c.h.b16 %v757
  %v1471 = vunpack.c.l.b16 %v758
  %v1472 = vunpack.c.h.b16 %v758
  %v1473 = vunpack.c.l.b16 %v759
  %v1474 = vunpack.c.h.b16 %v759
  %v1475 = vunpack.c.l.b16 %v760
  %v1476 = vunpack.c.h.b16 %v760
  %v1477 = vunpack.c.l.b16 %v761
  %v1478 = vunpack.c.h.b16 %v761
  %v1479 = vunpack.c.l.b16 %v762
  %v1480 = vunpack.c.h.b16 %v762
  %v1481 = vunpack.c.l.b16 %v763
  %v1482 = vunpack.c.h.b16 %v763
  %v1483 = vunpack.c.l.b16 %v764
  %v1484 = vunpack.c.h.b16 %v764
  %v1485 = vunpack.c.l.b16 %v765
  %v1486 = vunpack.c.h.b16 %v765
  %v1487 = vunpack.c.l.b16 %v766
  %v1488 = vunpack.c.h.b16 %v766
  %v1489 = vunpack.c.l.b16 %v767
  %v1490 = vunpack.c.h.b16 %v767
  %v1491 = vunpack.c.l.b16 %v768
  %v1492 = vunpack.c.h.b16 %v768
  %v1493 = vunpack.c.l.b16 %v769
  %v1494 = vunpack.c.h.b16 %v769
  %v1495 = vunpack.c.l.b16 %v770
  %v1496 = vunpack.c.h.b16 %v770
  %v1497 = vunpack.c.l.b16 %v771
  %v1498 = vunpack.c.h.b16 %v771
  %v1499 = vunpack.c.l.b16 %v772
  %v1500 = vunpack.c.h.b16 %v772
  %v1501 = vunpack.c.l.b16 %v773
  %v1502 = vunpack.c.h.b16 %v773
  %v1503 = vunpack.c.l.b16 %v774
  %v1504 = vunpack.c.h.b16 %v774
  %v1505 = vunpack.c.l.b16 %v775
  %v1506 = vunpack.c.h.b16 %v775
  %v1507 = vunpack.c.l.b16 %v776
  %v1508 = vunpack.c.h.b16 %v776
  %v1509 = vunpack.c.l.b16 %v777
  %v1510 = vunpack.c.h.b16 %v777
  %v1511 = vunpack.c.l.b16 %v778
  %v1512 = vunpack.c.h.b16 %v778
  %v1513 = vunpack.c.l.b16 %v779
  %v1514 = vunpack.c.h.b16 %v779
  %v1515 = vunpack.c.l.b16 %v780
  %v1516 = vunpack.c.h.b16 %v780
  %v1517 = vunpack.c.l.b16 %v781
  %v1518 = vunpack.c.h.b16 %v781
  %v1519 = vunpack.c.l.b16 %v782
  %v1520 = vunpack.c.h.b16 %v782
  %v1521 = vunpack.c.l.b16 %v783
  %v1522 = vunpack.c.h.b16 %v783
  %v1523 = vunpack.c.l.b16 %v784
  %v1524 = vunpack.c.h.b16 %v784
  %v1525 = vunpack.c.l.b16 %v785
  %v1526 = vunpack.c.h.b16 %v785
  %v1527 = vunpack.c.l.b16 %v786
  %v1528 = vunpack.c.h.b16 %v786
  %v1529 = vunpack.c.l.b16 %v787
  %v1530 = vunpack.c.h.b16 %v787
  %v1531 = vunpack.c.l.b16 %v788
  %v1532 = vunpack.c.h.b16 %v788
  %v1533 = vunpack.c.l.b16 %v789
  %v1534 = vunpack.c.h.b16 %v789
  %v1535 = vunpack.c.l.b16 %v790
  %v1536 = vunpack.c.h.b16 %v790
  %v1537 = vunpack.c.l.b16 %v791
  %v1538 = vunpack.c.h.b16 %v791
  %v1539 = vunpack.c.l.b16 %v792
  %v1540 = vunpack.c.h.b16 %v792
  %v1541 = vunpack.c.l.b16 %v793
  %v1542 = vunpack.c.h.b16 %v793
  %v1543 = vunpack.c.l.b16 %v794
  %v1544 = vunpack.c.h.b16 %v794
  %v1545 = vunpack.c.l.b16 %v795
  %v1546 = vunpack.c.h.b16 %v795
  %v1547 = vunpack.c.l.b16 %v796
  %v1548 = vunpack.c.h.b16 %v796
  %v1549 = vunpack.c.l.b16 %v797
  %v1550 = vunpack.c.h.b16 %v797
  %v1551 = vunpack.c.l.b16 %v798
  %v1552 = vunpack.c.h.b16 %v798
  %v1553 = vunpack.c.l.b16 %v799
  %v1554 = vunpack.c.h.b16 %v799
  %v1555 = vunpack.c.l.b16 %v800
  %v1556 = vunpack.c.h.b16 %v800
  %v1557 = vunpack.c.l.b16 %v801
  %v1558 = vunpack.c.h.b16 %v801
  %v1559 = vunpack.c.l.b16 %v802
  %v1560 = vunpack.c.h.b16 %v802
  %v1561 = vunpack.c.l.b16 %v803
  %v1562 = vunpack.c.h.b16 %v803
  %v1563 = vunpack.c.l.b16 %v804
  %v1564 = vunpack.c.h.b16 %v804
  %v1565 = vunpack.c.l.b16 %v805
  %v1566 = vunpack.c.h.b16 %v805
  %v1567 = vunpack.c.l.b16 %v806
  %v1568 = vunpack.c.h.b16 %v806
  %v1569 = vunpack.c.l.b16 %v807
  %v1570 = vunpack.c.h.b16 %v807
  %v1571 = vunpack.c.l.b16 %v808
  %v1572 = vunpack.c.h.b16 %v808
  %v1573 = vunpack.c.l.b16 %v809
  %v1574 = vunpack.c.h.b16 %v809
  %v1575 = vunpack.c.l.b16 %v810
  %v1576 = vunpack.c.h.b16 %v810
  %v1577 = vunpack.c.l.b16 %v811
  %v1578 = vunpack.c.h.b16 %v811
  %v1579 = vunpack.c.l.b16 %v812
  %v1580 = vunpack.c.h.b16 %v812
  %v1581 = vunpack.c.l.b16 %v813
  %v1582 = vunpack.c.h.b16 %v813
  %v1583 = vunpack.c.l.b16 %v814
  %v1584 = vunpack.c.h.b16 %v814
  %v1585 = vunpack.c.l.b16 %v815
  %v1586 = vunpack.c.h.b16 %v815
  %v1587 = vunpack.c.l.b16 %v816
  %v1588 = vunpack.c.h.b16 %v816
  %v1589 = vunpack.c.l.b16 %v817
  %v1590 = vunpack.c.h.b16 %v817
  %v1591 = vunpack.c.l.b16 %v818
  %v1592 = vunpack.c.h.b16 %v818
  %v1593 = vunpack.c.l.b16 %v819
  %v1594 = vunpack.c.h.b16 %v819
  %v1595 = vunpack.c.l.b16 %v820
  %v1596 = vunpack.c.h.b16 %v820
  %v1597 = vunpack.c.l.b16 %v821
  %v1598 = vunpack.c.h.b16 %v821
  %v1599 = vunpack.c.l.b16 %v822
  %v1600 = vunpack.c.h.b16 %v822
  %v1601 = vpack.c.b16 %v1093, %v1089
  %v1602 = vpack.c.b16 %v1094, %v1090
  %v1603 = vpack.c.b16 %v1095, %v1091
  %v1604 = vpack.c.b16 %v1096, %v1092
  %v1605 = vpack.c.b16 %v1101, %v1097
  %v1606 = vpack.c.b16 %v1102, %v1098
  %v1607 = vpack.c.b16 %v1103, %v1099
  %v1608 = vpack.c.b16 %v1104, %v1100
  %v1609 = vpack.c.b16 %v1109, %v1105
  %v1610 = vpack.c.b16 %v1110, %v1106
  %v1611 = vpack.c.b16 %v1111, %v1107
  %v1612 = vpack.c.b16 %v1112, %v1108
  %v1613 = vpack.c.b16 %v1117, %v1113
  %v1614 = vpack.c.b16 %v1118, %v1114
  %v1615 = vpack.c.b16 %v1119, %v1115
  %v1616 = vpack.c.b16 %v1120, %v1116
  %v1617 = vpack.c.b16 %v1125, %v1121
  %v1618 = vpack.c.b16 %v1126, %v1122
  %v1619 = vpack.c.b16 %v1127, %v1123
  %v1620 = vpack.c.b16 %v1128, %v1124
  %v1621 = vpack.c.b16 %v1133, %v1129
  %v1622 = vpack.c.b16 %v1134, %v1130
  %v1623 = vpack.c.b16 %v1135, %v1131
  %v1624 = vpack.c.b16 %v1136, %v1132
  %v1625 = vpack.c.b16 %v1141, %v1137
  %v1626 = vpack.c.b16 %v1142, %v1138
  %v1627 = vpack.c.b16 %v1143, %v1139
  %v1628 = vpack.c.b16 %v1144, %v1140
  %v1629 = vpack.c.b16 %v1149, %v1145
  %v1630 = vpack.c.b16 %v1150, %v1146
  %v1631 = vpack.c.b16 %v1151, %v1147
  %v1632 = vpack.c.b16 %v1152, %v1148
  %v1633 = vpack.c.b16 %v1157, %v1153
  %v1634 = vpack.c.b16 %v1158, %v1154
  %v1635 = vpack.c.b16 %v1159, %v1155
  %v1636 = vpack.c.b16 %v1160, %v1156
  %v1637 = vpack.c.b16 %v1165, %v1161
  %v1638 = vpack.c.b16 %v1166, %v1162
  %v1639 = vpack.c.b16 %v1167, %v1163
  %v1640 = vpack.c.b16 %v1168, %v1164
  %v1641 = vpack.c.b16 %v1173, %v1169
  %v1642 = vpack.c.b16 %v1174, %v1170
  %v1643 = vpack.c.b16 %v1175, %v1171
  %v1644 = vpack.c.b16 %v1176, %v1172
  %v1645 = vpack.c.b16 %v1181, %v1177
  %v1646 = vpack.c.b16 %v1182, %v1178
  %v1647 = vpack.c.b16 %v1183, %v1179
  %v1648 = vpack.c.b16 %v1184, %v1180
  %v1649 = vpack.c.b16 %v1189, %v1185
  %v1650 = vpack.c.b16 %v1190, %v1186
  %v1651 = vpack.c.b16 %v1191, %v1187
  %v1652 = vpack.c.b16 %v1192, %v1188
  %v1653 = vpack.c.b16 %v1197, %v1193
  %v1654 = vpack.c.b16 %v1198, %v1194
  %v1655 = vpack.c.b16 %v1199, %v1195
  %v1656 = vpack.c.b16 %v1200, %v1196
  %v1657 = vpack.c.b16 %v1205, %v1201
  %v1658 = vpack.c.b16 %v1206, %v1202
  %v1659 = vpack.c.b16 %v1207, %v1203
  %v1660 = vpack.c.b16 %v1208, %v1204
  %v1661 = vpack.c.b16 %v1213, %v1209
  %v1662 = vpack.c.b16 %v1214, %v1210
  %v1663 = vpack.c.b16 %v1215, %v1211
  %v1664 = vpack.c.b16 %v1216, %v1212
  %v1665 = vpack.c.b16 %v1221, %v1217
  %v1666 = vpack.c.b16 %v1222, %v1218
  %v1667 = vpack.c.b16 %v1223, %v1219
  %v1668 = vpack.c.b16 %v1224, %v1220
  %v1669 = vpack.c.b16 %v1229, %v1225
  %v1670 = vpack.c.b16 %v1230, %v1226
  %v1671 = vpack.c.b16 %v1231, %v1227
  %v1672 = vpack.c.b16 %v1232, %v1228
  %v1673 = vpack.c.b16 %v1237, %v1233
  %v1674 = vpack.c.b16 %v1238, %v1234
  %v1675 = vpack.c.b16 %v1239, %v1235
  %v1676 = vpack.c.b16 %v1240, %v1236
  %v1677 = vpack.c.b16 %v1245, %v1241
  %v1678 = vpack.c.b16 %v1246, %v1242
  %v1679 = vpack.c.b16 %v1247, %v1243
  %v1680 = vpack.c.b16 %v1248, %v1244
  %v1681 = vpack.c.b16 %v1253, %v1249
  %v1682 = vpack.c.b16 %v1254, %v1250
  %v1683 = vpack.c.b16 %v1255, %v1251
  %v1684 = vpack.c.b16 %v1256, %v1252
  %v1685 = vpack.c.b16 %v1261, %v1257
  %v1686 = vpack.c.b16 %v1262, %v1258
  %v1687 = vpack.c.b16 %v1263, %v1259
  %v1688 = vpack.c.b16 %v1264, %v1260
  %v1689 = vpack.c.b16 %v1269, %v1265
  %v1690 = vpack.c.b16 %v1270, %v1266
  %v1691 = vpack.c.b16 %v1271, %v1267
  %v1692 = vpack.c.b16 %v1272, %v1268
  %v1693 = vpack.c.b16 %v1277, %v1273
  %v1694 = vpack.c.b16 %v1278, %v1274
  %v1695 = vpack.c.b16 %v1279, %v1275
  %v1696 = vpack.c.b16 %v1280, %v1276
  %v1697 = vpack.c.b16 %v1285, %v1281
  %v1698 = vpack.c.b16 %v1286, %v1282
  %v1699 = vpack.c.b16 %v1287, %v1283
  %v1700 = vpack.c.b16 %v1288, %v1284
  %v1701 = vpack.c.b16 %v1293, %v1289
  %v1702 = vpack.c.b16 %v1294, %v1290
  %v1703 = vpack.c.b16 %v1295, %v1291
  %v1704 = vpack.c.b16 %v1296, %v1292
  %v1705 = vpack.c.b16 %v1301, %v1297
  %v1706 = vpack.c.b16 %v1302, %v1298
  %v1707 = vpack.c.b16 %v1303, %v1299
  %v1708 = vpack.c.b16 %v1304, %v1300
  %v1709 = vpack.c.b16 %v1309, %v1305
  %v1710 = vpack.c.b16 %v1310, %v1306
  %v1711 = vpack.c.b16 %v1311, %v1307
  %v1712 = vpack.c.b16 %v1312, %v1308
  %v1713 = vpack.c.b16 %v1317, %v1313
  %v1714 = vpack.c.b16 %v1318, %v1314
  %v1715 = vpack.c.b16 %v1319, %v1315
  %v1716 = vpack.c.b16 %v1320, %v1316
  %v1717 = vpack.c.b16 %v1325, %v1321
  %v1718 = vpack.c.b16 %v1326, %v1322
  %v1719 = vpack.c.b16 %v1327, %v1323
  %v1720 = vpack.c.b16 %v1328, %v1324
  %v1721 = vpack.c.b16 %v1333, %v1329
  %v1722 = vpack.c.b16 %v1334, %v1330
  %v1723 = vpack.c.b16 %v1335, %v1331
  %v1724 = vpack.c.b16 %v1336, %v1332
  %v1725 = vpack.c.b16 %v1341, %v1337
  %v1726 = vpack.c.b16 %v1342, %v1338
  %v1727 = vpack.c.b16 %v1343, %v1339
  %v1728 = vpack.c.b16 %v1344, %v1340
  %v1729 = vpack.c.b16 %v1349, %v1345
  %v1730 = vpack.c.b16 %v1350, %v1346
  %v1731 = vpack.c.b16 %v1351, %v1347
  %v1732 = vpack.c.b16 %v1352, %v1348
  %v1733 = vpack.c.b16 %v1357, %v1353
  %v1734 = vpack.c.b16 %v1358, %v1354
  %v1735 = vpack.c.b16 %v1359, %v1355
  %v1736 = vpack.c.b16 %v1360, %v1356
  %v1737 = vpack.c.b16 %v1365, %v1361
  %v1738 = vpack.c.b16 %v1366, %v1362
  %v1739 = vpack.c.b16 %v1367, %v1363
  %v1740 = vpack.c.b16 %v1368, %v1364
  %v1741 = vpack.c.b16 %v1373, %v1369
  %v1742 = vpack.c.b16 %v1374, %v1370
  %v1743 = vpack.c.b16 %v1375, %v1371
  %v1744 = vpack.c.b16 %v1376, %v1372
  %v1745 = vpack.c.b16 %v1381, %v1377
  %v1746 = vpack.c.b16 %v1382, %v1378
  %v1747 = vpack.c.b16 %v1383, %v1379
  %v1748 = vpack.c.b16 %v1384, %v1380
  %v1749 = vpack.c.b16 %v1389, %v1385
  %v1750 = vpack.c.b16 %v1390, %v1386
  %v1751 = vpack.c.b16 %v1391, %v1387
  %v1752 = vpack.c.b16 %v1392, %v1388
  %v1753 = vpack.c.b16 %v1397, %v1393
  %v1754 = vpack.c.b16 %v1398, %v1394
  %v1755 = vpack.c.b16 %v1399, %v1395
  %v1756 = vpack.c.b16 %v1400, %v1396
  %v1757 = vpack.c.b16 %v1405, %v1401
  %v1758 = vpack.c.b16 %v1406, %v1402
  %v1759 = vpack.c.b16 %v1407, %v1403
  %v1760 = vpack.c.b16 %v1408, %v1404
  %v1761 = vpack.c.b16 %v1413, %v1409
  %v1762 = vpack.c.b16 %v1414, %v1410
  %v1763 = vpack.c.b16 %v1415, %v1411
  %v1764 = vpack.c.b16 %v1416, %v1412
  %v1765 = vpack.c.b16 %v1421, %v1417
  %v1766 = vpack.c.b16 %v1422, %v1418
  %v1767 = vpack.c.b16 %v1423, %v1419
  %v1768 = vpack.c.b16 %v1424, %v1420
  %v1769 = vpack.c.b16 %v1429, %v1425
  %v1770 = vpack.c.b16 %v1430, %v1426
  %v1771 = vpack.c.b16 %v1431, %v1427
  %v1772 = vpack.c.b16 %v1432, %v1428
  %v1773 = vpack.c.b16 %v1437, %v1433
  %v1774 = vpack.c.b16 %v1438, %v1434
  %v1775 = vpack.c.b16 %v1439, %v1435
  %v1776 = vpack.c.b16 %v1440, %v1436
  %v1777 = vpack.c.b16 %v1445, %v1441
  %v1778 = vpack.c.b16 %v1446, %v1442
  %v1779 = vpack.c.b16 %v1447, %v1443
  %v1780 = vpack.c.b16 %v1448, %v1444
  %v1781 = vpack.c.b16 %v1453, %v1449
  %v1782 = vpack.c.b16 %v1454, %v1450
  %v1783 = vpack.c.b16 %v1455, %v1451
  %v1784 = vpack.c.b16 %v1456, %v1452
  %v1785 = vpack.c.b16 %v1461, %v1457
  %v1786 = vpack.c.b16 %v1462, %v1458
  %v1787 = vpack.c.b16 %v1463, %v1459
  %v1788 = vpack.c.b16 %v1464, %v1460
  %v1789 = vpack.c.b16 %v1469, %v1465
  %v1790 = vpack.c.b16 %v1470, %v1466
  %v1791 = vpack.c.b16 %v1471, %v1467
  %v1792 = vpack.c.b16 %v1472, %v1468
  %v1793 = vpack.c.b16 %v1477, %v1473
  %v1794 = vpack.c.b16 %v1478, %v1474
  %v1795 = vpack.c.b16 %v1479, %v1475
  %v1796 = vpack.c.b16 %v1480, %v1476
  %v1797 = vpack.c.b16 %v1485, %v1481
  %v1798 = vpack.c.b16 %v1486, %v1482
  %v1799 = vpack.c.b16 %v1487, %v1483
  %v1800 = vpack.c.b16 %v1488, %v1484
  %v1801 = vpack.c.b16 %v1493, %v1489
  %v1802 = vpack.c.b16 %v1494, %v1490
  %v1803 = vpack.c.b16 %v1495, %v1491
  %v1804 = vpack.c.b16 %v1496, %v1492
  %v1805 = vpack.c.b16 %v1501, %v1497
  %v1806 = vpack.c.b16 %v1502, %v1498
  %v1807 = vpack.c.b16 %v1503, %v1499
  %v1808 = vpack.c.b16 %v1504, %v1500
  %v1809 = vpack.c.b16 %v1509, %v1505
  %v1810 = vpack.c.b16 %v1510, %v1506
  %v1811 = vpack.c.b16 %v1511, %v1507
  %v1812 = vpack.c.b16 %v1512, %v1508
  %v1813 = vpack.c.b16 %v1517, %v1513
  %v1814 = vpack.c.b16 %v1518, %v1514
  %v1815 = vpack.c.b16 %v1519, %v1515
  %v1816 = vpack.c.b16 %v1520, %v1516
  %v1817 = vpack.c.b16 %v1525, %v1521
  %v1818 = vpack.c.b16 %v1526, %v1522
  %v1819 = vpack.c.b16 %v1527, %v1523
  %v1820 = vpack.c.b16 %v1528, %v1524
  %v1821 = vpack.c.b16 %v1533, %v1529
  %v1822 = vpack.c.b16 %v1534, %v1530
  %v1823 = vpack.c.b16 %v1535, %v1531
  %v1824 = vpack.c.b16 %v1536, %v1532
  %v1825 = vpack.c.b16 %v1541, %v1537
  %v1826 = vpack.c.b16 %v1542, %v1538
  %v1827 = vpack.c.b16 %v1543, %v1539
  %v1828 = vpack.c.b16 %v1544, %v1540
  %v1829 = vpack.c.b16 %v1549, %v1545
  %v1830 = vpack.c.b16 %v1550, %v1546
  %v1831 = vpack.c.b16 %v1551, %v1547
  %v1832 = vpack.c.b16 %v1552, %v1548
  %v1833 = vpack.c.b16 %v1557, %v1553
  %v1834 = vpack.c.b16 %v1558, %v1554
  %v1835 = vpack.c.b16 %v1559, %v1555
  %v1836 = vpack.c.b16 %v1560, %v1556
  %v1837 = vpack.c.b16 %v1565, %v1561
  %v1838 = vpack.c.b16 %v1566, %v1562
  %v1839 = vpack.c.b16 %v1567, %v1563
  %v1840 = vpack.c.b16 %v1568, %v1564
  %v1841 = vpack.c.b16 %v1573, %v1569
  %v1842 = vpack.c.b16 %v1574, %v1570
  %v1843 = vpack.c.b16 %v1575, %v1571
  %v1844 = vpack.c.b16 %v1576, %v1572
  %v1845 = vpack.c.b16 %v1581, %v1577
  %v1846 = vpack.c.b16 %v1582, %v1578
  %v1847 = vpack.c.b16 %v1583, %v1579
  %v1848 = vpack.c.b16 %v1584, %v1580
  %v1849 = vpack.c.b16 %v1589, %v1585
  %v1850 = vpack.c.b16 %v1590, %v1586
  %v1851 = vpack.c.b16 %v1591, %v1587
  %v1852 = vpack.c.b16 %v1592, %v1588
  %v1853 = vpack.c.b16 %v1597, %v1593
  %v1854 = vpack.c.b16 %v1598, %v1594
  %v1855 = vpack.c.b16 %v1599, %v1595
  %v1856 = vpack.c.b16 %v1600, %v1596
  %2113 = vmatpush.bf16.msra.mxu0 %v1629
  %2114 = vmatpush.bf16.msra.mxu0 %v1625
  %2115 = vmatpush.bf16.msra.mxu0 %v1621
  %2116 = vmatpush.bf16.msra.mxu0 %v1617
  %2117 = vmatpush.bf16.msra.mxu0 %v1613
  %2118 = vmatpush.bf16.msra.mxu0 %v1609
  %2119 = vmatpush.bf16.msra.mxu0 %v1605
  %2120 = vmatpush.bf16.msra.mxu0 %v1601
  %2121 = vmatmul.bf16.gmra.mxu0 %v559
  %v2122 = vpop.f32.mrf.mxu0
  %v2123 = vadd.f32 %v825, %v2122
  %v2124 = vpop.f32.mrf.mxu0
  %2125 = vdwg.mxu0
  %2126 = vmatpush.bf16.msra.mxu0 %v1661
  %2127 = vmatpush.bf16.msra.mxu0 %v1657
  %2128 = vmatpush.bf16.msra.mxu0 %v1653
  %2129 = vmatpush.bf16.msra.mxu0 %v1649
  %2130 = vmatpush.bf16.msra.mxu0 %v1645
  %2131 = vmatpush.bf16.msra.mxu0 %v1641
  %2132 = vmatpush.bf16.msra.mxu0 %v1637
  %2133 = vmatpush.bf16.msra.mxu0 %v1633
  %2134 = vmatmul.bf16.gmra.mxu0 %v560
  %v2135 = vpop.f32.mrf.mxu0
  %v2136 = vadd.f32 %v2123, %v2135
  %v2137 = vpop.f32.mrf.mxu0
  %2138 = vdwg.mxu0
  %2139 = vmatpush.bf16.msra.mxu0 %v1693
  %2140 = vmatpush.bf16.msra.mxu0 %v1689
  %2141 = vmatpush.bf16.msra.mxu0 %v1685
  %2142 = vmatpush.bf16.msra.mxu0 %v1681
  %2143 = vmatpush.bf16.msra.mxu0 %v1677
  %2144 = vmatpush.bf16.msra.mxu0 %v1673
  %2145 = vmatpush.bf16.msra.mxu0 %v1669
  %2146 = vmatpush.bf16.msra.mxu0 %v1665
  %2147 = vmatmul.bf16.gmra.mxu0 %v561
  %v2148 = vpop.f32.mrf.mxu0
  %v2149 = vadd.f32 %v2136, %v2148
  %v2150 = vpop.f32.mrf.mxu0
  %2151 = vdwg.mxu0
  %2152 = vmatpush.bf16.msra.mxu0 %v1725
  %2153 = vmatpush.bf16.msra.mxu0 %v1721
  %2154 = vmatpush.bf16.msra.mxu0 %v1717
  %2155 = vmatpush.bf16.msra.mxu0 %v1713
  %2156 = vmatpush.bf16.msra.mxu0 %v1709
  %2157 = vmatpush.bf16.msra.mxu0 %v1705
  %2158 = vmatpush.bf16.msra.mxu0 %v1701
  %2159 = vmatpush.bf16.msra.mxu0 %v1697
  %2160 = vmatmul.bf16.gmra.mxu0 %v562
  %v2161 = vpop.f32.mrf.mxu0
  %v2162 = vadd.f32 %v2149, %v2161
  %v2163 = vpop.f32.mrf.mxu0
  %2164 = vdwg.mxu0
  %2165 = vmatpush.bf16.msra.mxu0 %v1757
  %2166 = vmatpush.bf16.msra.mxu0 %v1753
  %2167 = vmatpush.bf16.msra.mxu0 %v1749
  %2168 = vmatpush.bf16.msra.mxu0 %v1745
  %2169 = vmatpush.bf16.msra.mxu0 %v1741
  %2170 = vmatpush.bf16.msra.mxu0 %v1737
  %2171 = vmatpush.bf16.msra.mxu0 %v1733
  %2172 = vmatpush.bf16.msra.mxu0 %v1729
  %2173 = vmatmul.bf16.gmra.mxu0 %v563
  %v2174 = vpop.f32.mrf.mxu0
  %v2175 = vadd.f32 %v2162, %v2174
  %v2176 = vpop.f32.mrf.mxu0
  %2177 = vdwg.mxu0
  %2178 = vmatpush.bf16.msra.mxu0 %v1789
  %2179 = vmatpush.bf16.msra.mxu0 %v1785
  %2180 = vmatpush.bf16.msra.mxu0 %v1781
  %2181 = vmatpush.bf16.msra.mxu0 %v1777
  %2182 = vmatpush.bf16.msra.mxu0 %v1773
  %2183 = vmatpush.bf16.msra.mxu0 %v1769
  %2184 = vmatpush.bf16.msra.mxu0 %v1765
  %2185 = vmatpush.bf16.msra.mxu0 %v1761
  %2186 = vmatmul.bf16.gmra.mxu0 %v564
  %v2187 = vpop.f32.mrf.mxu0
  %v2188 = vadd.f32 %v2175, %v2187
  %v2189 = vpop.f32.mrf.mxu0
  %2190 = vdwg.mxu0
  %2191 = vmatpush.bf16.msra.mxu0 %v1821
  %2192 = vmatpush.bf16.msra.mxu0 %v1817
  %2193 = vmatpush.bf16.msra.mxu0 %v1813
  %2194 = vmatpush.bf16.msra.mxu0 %v1809
  %2195 = vmatpush.bf16.msra.mxu0 %v1805
  %2196 = vmatpush.bf16.msra.mxu0 %v1801
  %2197 = vmatpush.bf16.msra.mxu0 %v1797
  %2198 = vmatpush.bf16.msra.mxu0 %v1793
  %2199 = vmatmul.bf16.gmra.mxu0 %v565
  %v2200 = vpop.f32.mrf.mxu0
  %v2201 = vadd.f32 %v2188, %v2200
  %v2202 = vpop.f32.mrf.mxu0
  %2203 = vdwg.mxu0
  %2204 = vmatpush.bf16.msra.mxu0 %v1853
  %2205 = vmatpush.bf16.msra.mxu0 %v1849
  %2206 = vmatpush.bf16.msra.mxu0 %v1845
  %2207 = vmatpush.bf16.msra.mxu0 %v1841
  %2208 = vmatpush.bf16.msra.mxu0 %v1837
  %2209 = vmatpush.bf16.msra.mxu0 %v1833
  %2210 = vmatpush.bf16.msra.mxu0 %v1829
  %2211 = vmatpush.bf16.msra.mxu0 %v1825
  %2212 = vmatmul.bf16.gmra.mxu0 %v566
  %v2213 = vpop.f32.mrf.mxu0
  %v2214 = vadd.f32 %v2201, %v2213
  %v2215 = vpop.f32.mrf.mxu0
  %2216 = vdwg.mxu0
  %2217 = vmatpush.bf16.msra.mxu0 %v1630
  %2218 = vmatpush.bf16.msra.mxu0 %v1626
  %2219 = vmatpush.bf16.msra.mxu0 %v1622
  %2220 = vmatpush.bf16.msra.mxu0 %v1618
  %2221 = vmatpush.bf16.msra.mxu0 %v1614
  %2222 = vmatpush.bf16.msra.mxu0 %v1610
  %2223 = vmatpush.bf16.msra.mxu0 %v1606
  %2224 = vmatpush.bf16.msra.mxu0 %v1602
  %2225 = vmatmul.bf16.gmra.mxu0 %v559
  %v2226 = vpop.f32.mrf.mxu0
  %v2227 = vadd.f32 %v826, %v2226
  %v2228 = vpop.f32.mrf.mxu0
  %2229 = vdwg.mxu0
  %2230 = vmatpush.bf16.msra.mxu0 %v1662
  %2231 = vmatpush.bf16.msra.mxu0 %v1658
  %2232 = vmatpush.bf16.msra.mxu0 %v1654
  %2233 = vmatpush.bf16.msra.mxu0 %v1650
  %2234 = vmatpush.bf16.msra.mxu0 %v1646
  %2235 = vmatpush.bf16.msra.mxu0 %v1642
  %2236 = vmatpush.bf16.msra.mxu0 %v1638
  %2237 = vmatpush.bf16.msra.mxu0 %v1634
  %2238 = vmatmul.bf16.gmra.mxu0 %v560
  %v2239 = vpop.f32.mrf.mxu0
  %v2240 = vadd.f32 %v2227, %v2239
  %v2241 = vpop.f32.mrf.mxu0
  %2242 = vdwg.mxu0
  %2243 = vmatpush.bf16.msra.mxu0 %v1694
  %2244 = vmatpush.bf16.msra.mxu0 %v1690
  %2245 = vmatpush.bf16.msra.mxu0 %v1686
  %2246 = vmatpush.bf16.msra.mxu0 %v1682
  %2247 = vmatpush.bf16.msra.mxu0 %v1678
  %2248 = vmatpush.bf16.msra.mxu0 %v1674
  %2249 = vmatpush.bf16.msra.mxu0 %v1670
  %2250 = vmatpush.bf16.msra.mxu0 %v1666
  %2251 = vmatmul.bf16.gmra.mxu0 %v561
  %v2252 = vpop.f32.mrf.mxu0
  %v2253 = vadd.f32 %v2240, %v2252
  %v2254 = vpop.f32.mrf.mxu0
  %2255 = vdwg.mxu0
  %2256 = vmatpush.bf16.msra.mxu0 %v1726
  %2257 = vmatpush.bf16.msra.mxu0 %v1722
  %2258 = vmatpush.bf16.msra.mxu0 %v1718
  %2259 = vmatpush.bf16.msra.mxu0 %v1714
  %2260 = vmatpush.bf16.msra.mxu0 %v1710
  %2261 = vmatpush.bf16.msra.mxu0 %v1706
  %2262 = vmatpush.bf16.msra.mxu0 %v1702
  %2263 = vmatpush.bf16.msra.mxu0 %v1698
  %2264 = vmatmul.bf16.gmra.mxu0 %v562
  %v2265 = vpop.f32.mrf.mxu0
  %v2266 = vadd.f32 %v2253, %v2265
  %v2267 = vpop.f32.mrf.mxu0
  %2268 = vdwg.mxu0
  %2269 = vmatpush.bf16.msra.mxu0 %v1758
  %2270 = vmatpush.bf16.msra.mxu0 %v1754
  %2271 = vmatpush.bf16.msra.mxu0 %v1750
  %2272 = vmatpush.bf16.msra.mxu0 %v1746
  %2273 = vmatpush.bf16.msra.mxu0 %v1742
  %2274 = vmatpush.bf16.msra.mxu0 %v1738
  %2275 = vmatpush.bf16.msra.mxu0 %v1734
  %2276 = vmatpush.bf16.msra.mxu0 %v1730
  %2277 = vmatmul.bf16.gmra.mxu0 %v563
  %v2278 = vpop.f32.mrf.mxu0
  %v2279 = vadd.f32 %v2266, %v2278
  %v2280 = vpop.f32.mrf.mxu0
  %2281 = vdwg.mxu0
  %2282 = vmatpush.bf16.msra.mxu0 %v1790
  %2283 = vmatpush.bf16.msra.mxu0 %v1786
  %2284 = vmatpush.bf16.msra.mxu0 %v1782
  %2285 = vmatpush.bf16.msra.mxu0 %v1778
  %2286 = vmatpush.bf16.msra.mxu0 %v1774
  %2287 = vmatpush.bf16.msra.mxu0 %v1770
  %2288 = vmatpush.bf16.msra.mxu0 %v1766
  %2289 = vmatpush.bf16.msra.mxu0 %v1762
  %2290 = vmatmul.bf16.gmra.mxu0 %v564
  %v2291 = vpop.f32.mrf.mxu0
  %v2292 = vadd.f32 %v2279, %v2291
  %v2293 = vpop.f32.mrf.mxu0
  %2294 = vdwg.mxu0
  %2295 = vmatpush.bf16.msra.mxu0 %v1822
  %2296 = vmatpush.bf16.msra.mxu0 %v1818
  %2297 = vmatpush.bf16.msra.mxu0 %v1814
  %2298 = vmatpush.bf16.msra.mxu0 %v1810
  %2299 = vmatpush.bf16.msra.mxu0 %v1806
  %2300 = vmatpush.bf16.msra.mxu0 %v1802
  %2301 = vmatpush.bf16.msra.mxu0 %v1798
  %2302 = vmatpush.bf16.msra.mxu0 %v1794
  %2303 = vmatmul.bf16.gmra.mxu0 %v565
  %v2304 = vpop.f32.mrf.mxu0
  %v2305 = vadd.f32 %v2292, %v2304
  %v2306 = vpop.f32.mrf.mxu0
  %2307 = vdwg.mxu0
  %2308 = vmatpush.bf16.msra.mxu0 %v1854
  %2309 = vmatpush.bf16.msra.mxu0 %v1850
  %2310 = vmatpush.bf16.msra.mxu0 %v1846
  %2311 = vmatpush.bf16.msra.mxu0 %v1842
  %2312 = vmatpush.bf16.msra.mxu0 %v1838
  %2313 = vmatpush.bf16.msra.mxu0 %v1834
  %2314 = vmatpush.bf16.msra.mxu0 %v1830
  %2315 = vmatpush.bf16.msra.mxu0 %v1826
  %2316 = vmatmul.bf16.gmra.mxu0 %v566
  %v2317 = vpop.f32.mrf.mxu0
  %v2318 = vadd.f32 %v2305, %v2317
  %v2319 = vpop.f32.mrf.mxu0
  %2320 = vdwg.mxu0
  %2321 = vmatpush.bf16.msra.mxu0 %v1631
  %2322 = vmatpush.bf16.msra.mxu0 %v1627
  %2323 = vmatpush.bf16.msra.mxu0 %v1623
  %2324 = vmatpush.bf16.msra.mxu0 %v1619
  %2325 = vmatpush.bf16.msra.mxu0 %v1615
  %2326 = vmatpush.bf16.msra.mxu0 %v1611
  %2327 = vmatpush.bf16.msra.mxu0 %v1607
  %2328 = vmatpush.bf16.msra.mxu0 %v1603
  %2329 = vmatmul.bf16.gmra.mxu0 %v559
  %v2330 = vpop.f32.mrf.mxu0
  %v2331 = vadd.f32 %v827, %v2330
  %v2332 = vpop.f32.mrf.mxu0
  %2333 = vdwg.mxu0
  %2334 = vmatpush.bf16.msra.mxu0 %v1663
  %2335 = vmatpush.bf16.msra.mxu0 %v1659
  %2336 = vmatpush.bf16.msra.mxu0 %v1655
  %2337 = vmatpush.bf16.msra.mxu0 %v1651
  %2338 = vmatpush.bf16.msra.mxu0 %v1647
  %2339 = vmatpush.bf16.msra.mxu0 %v1643
  %2340 = vmatpush.bf16.msra.mxu0 %v1639
  %2341 = vmatpush.bf16.msra.mxu0 %v1635
  %2342 = vmatmul.bf16.gmra.mxu0 %v560
  %v2343 = vpop.f32.mrf.mxu0
  %v2344 = vadd.f32 %v2331, %v2343
  %v2345 = vpop.f32.mrf.mxu0
  %2346 = vdwg.mxu0
  %2347 = vmatpush.bf16.msra.mxu0 %v1695
  %2348 = vmatpush.bf16.msra.mxu0 %v1691
  %2349 = vmatpush.bf16.msra.mxu0 %v1687
  %2350 = vmatpush.bf16.msra.mxu0 %v1683
  %2351 = vmatpush.bf16.msra.mxu0 %v1679
  %2352 = vmatpush.bf16.msra.mxu0 %v1675
  %2353 = vmatpush.bf16.msra.mxu0 %v1671
  %2354 = vmatpush.bf16.msra.mxu0 %v1667
  %2355 = vmatmul.bf16.gmra.mxu0 %v561
  %v2356 = vpop.f32.mrf.mxu0
  %v2357 = vadd.f32 %v2344, %v2356
  %v2358 = vpop.f32.mrf.mxu0
  %2359 = vdwg.mxu0
  %2360 = vmatpush.bf16.msra.mxu0 %v1727
  %2361 = vmatpush.bf16.msra.mxu0 %v1723
  %2362 = vmatpush.bf16.msra.mxu0 %v1719
  %2363 = vmatpush.bf16.msra.mxu0 %v1715
  %2364 = vmatpush.bf16.msra.mxu0 %v1711
  %2365 = vmatpush.bf16.msra.mxu0 %v1707
  %2366 = vmatpush.bf16.msra.mxu0 %v1703
  %2367 = vmatpush.bf16.msra.mxu0 %v1699
  %2368 = vmatmul.bf16.gmra.mxu0 %v562
  %v2369 = vpop.f32.mrf.mxu0
  %v2370 = vadd.f32 %v2357, %v2369
  %v2371 = vpop.f32.mrf.mxu0
  %2372 = vdwg.mxu0
  %2373 = vmatpush.bf16.msra.mxu0 %v1759
  %2374 = vmatpush.bf16.msra.mxu0 %v1755
  %2375 = vmatpush.bf16.msra.mxu0 %v1751
  %2376 = vmatpush.bf16.msra.mxu0 %v1747
  %2377 = vmatpush.bf16.msra.mxu0 %v1743
  %2378 = vmatpush.bf16.msra.mxu0 %v1739
  %2379 = vmatpush.bf16.msra.mxu0 %v1735
  %2380 = vmatpush.bf16.msra.mxu0 %v1731
  %2381 = vmatmul.bf16.gmra.mxu0 %v563
  %v2382 = vpop.f32.mrf.mxu0
  %v2383 = vadd.f32 %v2370, %v2382
  %v2384 = vpop.f32.mrf.mxu0
  %2385 = vdwg.mxu0
  %2386 = vmatpush.bf16.msra.mxu0 %v1791
  %2387 = vmatpush.bf16.msra.mxu0 %v1787
  %2388 = vmatpush.bf16.msra.mxu0 %v1783
  %2389 = vmatpush.bf16.msra.mxu0 %v1779
  %2390 = vmatpush.bf16.msra.mxu0 %v1775
  %2391 = vmatpush.bf16.msra.mxu0 %v1771
  %2392 = vmatpush.bf16.msra.mxu0 %v1767
  %2393 = vmatpush.bf16.msra.mxu0 %v1763
  %2394 = vmatmul.bf16.gmra.mxu0 %v564
  %v2395 = vpop.f32.mrf.mxu0
  %v2396 = vadd.f32 %v2383, %v2395
  %v2397 = vpop.f32.mrf.mxu0
  %2398 = vdwg.mxu0
  %2399 = vmatpush.bf16.msra.mxu0 %v1823
  %2400 = vmatpush.bf16.msra.mxu0 %v1819
  %2401 = vmatpush.bf16.msra.mxu0 %v1815
  %2402 = vmatpush.bf16.msra.mxu0 %v1811
  %2403 = vmatpush.bf16.msra.mxu0 %v1807
  %2404 = vmatpush.bf16.msra.mxu0 %v1803
  %2405 = vmatpush.bf16.msra.mxu0 %v1799
  %2406 = vmatpush.bf16.msra.mxu0 %v1795
  %2407 = vmatmul.bf16.gmra.mxu0 %v565
  %v2408 = vpop.f32.mrf.mxu0
  %v2409 = vadd.f32 %v2396, %v2408
  %v2410 = vpop.f32.mrf.mxu0
  %2411 = vdwg.mxu0
  %2412 = vmatpush.bf16.msra.mxu0 %v1855
  %2413 = vmatpush.bf16.msra.mxu0 %v1851
  %2414 = vmatpush.bf16.msra.mxu0 %v1847
  %2415 = vmatpush.bf16.msra.mxu0 %v1843
  %2416 = vmatpush.bf16.msra.mxu0 %v1839
  %2417 = vmatpush.bf16.msra.mxu0 %v1835
  %2418 = vmatpush.bf16.msra.mxu0 %v1831
  %2419 = vmatpush.bf16.msra.mxu0 %v1827
  %2420 = vmatmul.bf16.gmra.mxu0 %v566
  %v2421 = vpop.f32.mrf.mxu0
  %v2422 = vadd.f32 %v2409, %v2421
  %v2423 = vpop.f32.mrf.mxu0
  %2424 = vdwg.mxu0
  %2425 = vmatpush.bf16.msra.mxu0 %v1632
  %2426 = vmatpush.bf16.msra.mxu0 %v1628
  %2427 = vmatpush.bf16.msra.mxu0 %v1624
  %2428 = vmatpush.bf16.msra.mxu0 %v1620
  %2429 = vmatpush.bf16.msra.mxu0 %v1616
  %2430 = vmatpush.bf16.msra.mxu0 %v1612
  %2431 = vmatpush.bf16.msra.mxu0 %v1608
  %2432 = vmatpush.bf16.msra.mxu0 %v1604
  %2433 = vmatmul.bf16.gmra.mxu0 %v559
  %v2434 = vpop.f32.mrf.mxu0
  %v2435 = vadd.f32 %v828, %v2434
  %v2436 = vpop.f32.mrf.mxu0
  %2437 = vdwg.mxu0
  %2438 = vmatpush.bf16.msra.mxu0 %v1664
  %2439 = vmatpush.bf16.msra.mxu0 %v1660
  %2440 = vmatpush.bf16.msra.mxu0 %v1656
  %2441 = vmatpush.bf16.msra.mxu0 %v1652
  %2442 = vmatpush.bf16.msra.mxu0 %v1648
  %2443 = vmatpush.bf16.msra.mxu0 %v1644
  %2444 = vmatpush.bf16.msra.mxu0 %v1640
  %2445 = vmatpush.bf16.msra.mxu0 %v1636
  %2446 = vmatmul.bf16.gmra.mxu0 %v560
  %v2447 = vpop.f32.mrf.mxu0
  %v2448 = vadd.f32 %v2435, %v2447
  %v2449 = vpop.f32.mrf.mxu0
  %2450 = vdwg.mxu0
  %2451 = vmatpush.bf16.msra.mxu0 %v1696
  %2452 = vmatpush.bf16.msra.mxu0 %v1692
  %2453 = vmatpush.bf16.msra.mxu0 %v1688
  %2454 = vmatpush.bf16.msra.mxu0 %v1684
  %2455 = vmatpush.bf16.msra.mxu0 %v1680
  %2456 = vmatpush.bf16.msra.mxu0 %v1676
  %2457 = vmatpush.bf16.msra.mxu0 %v1672
  %2458 = vmatpush.bf16.msra.mxu0 %v1668
  %2459 = vmatmul.bf16.gmra.mxu0 %v561
  %v2460 = vpop.f32.mrf.mxu0
  %v2461 = vadd.f32 %v2448, %v2460
  %v2462 = vpop.f32.mrf.mxu0
  %2463 = vdwg.mxu0
  %2464 = vmatpush.bf16.msra.mxu0 %v1728
  %2465 = vmatpush.bf16.msra.mxu0 %v1724
  %2466 = vmatpush.bf16.msra.mxu0 %v1720
  %2467 = vmatpush.bf16.msra.mxu0 %v1716
  %2468 = vmatpush.bf16.msra.mxu0 %v1712
  %2469 = vmatpush.bf16.msra.mxu0 %v1708
  %2470 = vmatpush.bf16.msra.mxu0 %v1704
  %2471 = vmatpush.bf16.msra.mxu0 %v1700
  %2472 = vmatmul.bf16.gmra.mxu0 %v562
  %v2473 = vpop.f32.mrf.mxu0
  %v2474 = vadd.f32 %v2461, %v2473
  %v2475 = vpop.f32.mrf.mxu0
  %2476 = vdwg.mxu0
  %2477 = vmatpush.bf16.msra.mxu0 %v1760
  %2478 = vmatpush.bf16.msra.mxu0 %v1756
  %2479 = vmatpush.bf16.msra.mxu0 %v1752
  %2480 = vmatpush.bf16.msra.mxu0 %v1748
  %2481 = vmatpush.bf16.msra.mxu0 %v1744
  %2482 = vmatpush.bf16.msra.mxu0 %v1740
  %2483 = vmatpush.bf16.msra.mxu0 %v1736
  %2484 = vmatpush.bf16.msra.mxu0 %v1732
  %2485 = vmatmul.bf16.gmra.mxu0 %v563
  %v2486 = vpop.f32.mrf.mxu0
  %v2487 = vadd.f32 %v2474, %v2486
  %v2488 = vpop.f32.mrf.mxu0
  %2489 = vdwg.mxu0
  %2490 = vmatpush.bf16.msra.mxu0 %v1792
  %2491 = vmatpush.bf16.msra.mxu0 %v1788
  %2492 = vmatpush.bf16.msra.mxu0 %v1784
  %2493 = vmatpush.bf16.msra.mxu0 %v1780
  %2494 = vmatpush.bf16.msra.mxu0 %v1776
  %2495 = vmatpush.bf16.msra.mxu0 %v1772
  %2496 = vmatpush.bf16.msra.mxu0 %v1768
  %2497 = vmatpush.bf16.msra.mxu0 %v1764
  %2498 = vmatmul.bf16.gmra.mxu0 %v564
  %v2499 = vpop.f32.mrf.mxu0
  %v2500 = vadd.f32 %v2487, %v2499
  %v2501 = vpop.f32.mrf.mxu0
  %2502 = vdwg.mxu0
  %2503 = vmatpush.bf16.msra.mxu0 %v1824
  %2504 = vmatpush.bf16.msra.mxu0 %v1820
  %2505 = vmatpush.bf16.msra.mxu0 %v1816
  %2506 = vmatpush.bf16.msra.mxu0 %v1812
  %2507 = vmatpush.bf16.msra.mxu0 %v1808
  %2508 = vmatpush.bf16.msra.mxu0 %v1804
  %2509 = vmatpush.bf16.msra.mxu0 %v1800
  %2510 = vmatpush.bf16.msra.mxu0 %v1796
  %2511 = vmatmul.bf16.gmra.mxu0 %v565
  %v2512 = vpop.f32.mrf.mxu0
  %v2513 = vadd.f32 %v2500, %v2512
  %v2514 = vpop.f32.mrf.mxu0
  %2515 = vdwg.mxu0
  %2516 = vmatpush.bf16.msra.mxu0 %v1856
  %2517 = vmatpush.bf16.msra.mxu0 %v1852
  %2518 = vmatpush.bf16.msra.mxu0 %v1848
  %2519 = vmatpush.bf16.msra.mxu0 %v1844
  %2520 = vmatpush.bf16.msra.mxu0 %v1840
  %2521 = vmatpush.bf16.msra.mxu0 %v1836
  %2522 = vmatpush.bf16.msra.mxu0 %v1832
  %2523 = vmatpush.bf16.msra.mxu0 %v1828
  %2524 = vmatmul.bf16.gmra.mxu0 %v566
  %v2525 = vpop.f32.mrf.mxu0
  %v2526 = vadd.f32 %v2513, %v2525
  %v2527 = vpop.f32.mrf.mxu0
  %2528 = vdwg.mxu0
  %v2529 = vmax.f32 %v2214, 0.0
  %v2530 = vmax.f32 %v2318, 0.0
  %v2531 = vmax.f32 %v2422, 0.0
  %v2532 = vmax.f32 %v2526, 0.0
  %v2533 = vpack.c.bf16 %v2529, %v2529
  %v2534 = vpack.c.bf16 %v2530, %v2530
  %v2535 = vpack.c.bf16 %v2531, %v2531
  %v2536 = vpack.c.bf16 %v2532, %v2532
  %v2537 = vld [vmem:[%s5] sm:$0xff]
  %v2538 = vld [vmem:[%s5 + $0x8] sm:$0xff]
  %v2539 = vld [vmem:[%s5 + $0x10] sm:$0xff]
  %v2540 = vld [vmem:[%s5 + $0x18] sm:$0xff]
  %v2541 = vld [vmem:[%s5 + $0x20] sm:$0xff]
  %v2542 = vld [vmem:[%s5 + $0x28] sm:$0xff]
  %v2543 = vld [vmem:[%s5 + $0x30] sm:$0xff]
  %v2544 = vld [vmem:[%s5 + $0x38] sm:$0xff]
  %v2545 = vld [vmem:[%s5 + $0x40] sm:$0xff]
  %v2546 = vld [vmem:[%s5 + $0x48] sm:$0xff]
  %v2547 = vld [vmem:[%s5 + $0x50] sm:$0xff]
  %v2548 = vld [vmem:[%s5 + $0x58] sm:$0xff]
  %v2549 = vld [vmem:[%s5 + $0x60] sm:$0xff]
  %v2550 = vld [vmem:[%s5 + $0x68] sm:$0xff]
  %v2551 = vld [vmem:[%s5 + $0x70] sm:$0xff]
  %v2552 = vld [vmem:[%s5 + $0x78] sm:$0xff]
  %v2553 = vld [vmem:[%s5 + $0x80] sm:$0xff]
  %v2554 = vld [vmem:[%s5 + $0x88] sm:$0xff]
  %v2555 = vld [vmem:[%s5 + $0x90] sm:$0xff]
  %v2556 = vld [vmem:[%s5 + $0x98] sm:$0xff]
  %v2557 = vld [vmem:[%s5 + $0xa0] sm:$0xff]
  %v2558 = vld [vmem:[%s5 + $0xa8] sm:$0xff]
  %v2559 = vld [vmem:[%s5 + $0xb0] sm:$0xff]
  %v2560 = vld [vmem:[%s5 + $0xb8] sm:$0xff]
  %v2561 = vld [vmem:[%s5 + $0xc0] sm:$0xff]
  %v2562 = vld [vmem:[%s5 + $0xc8] sm:$0xff]
  %v2563 = vld [vmem:[%s5 + $0xd0] sm:$0xff]
  %v2564 = vld [vmem:[%s5 + $0xd8] sm:$0xff]
  %v2565 = vld [vmem:[%s5 + $0xe0] sm:$0xff]
  %v2566 = vld [vmem:[%s5 + $0xe8] sm:$0xff]
  %v2567 = vld [vmem:[%s5 + $0xf0] sm:$0xff]
  %v2568 = vld [vmem:[%s5 + $0xf8] sm:$0xff]
  %v2569 = vld [vmem:[%s5 + $0x100] sm:$0xff]
  %v2570 = vld [vmem:[%s5 + $0x108] sm:$0xff]
  %v2571 = vld [vmem:[%s5 + $0x110] sm:$0xff]
  %v2572 = vld [vmem:[%s5 + $0x118] sm:$0xff]
  %v2573 = vld [vmem:[%s5 + $0x120] sm:$0xff]
  %v2574 = vld [vmem:[%s5 + $0x128] sm:$0xff]
  %v2575 = vld [vmem:[%s5 + $0x130] sm:$0xff]
  %v2576 = vld [vmem:[%s5 + $0x138] sm:$0xff]
  %v2577 = vld [vmem:[%s5 + $0x140] sm:$0xff]
  %v2578 = vld [vmem:[%s5 + $0x148] sm:$0xff]
  %v2579 = vld [vmem:[%s5 + $0x150] sm:$0xff]
  %v2580 = vld [vmem:[%s5 + $0x158] sm:$0xff]
  %v2581 = vld [vmem:[%s5 + $0x160] sm:$0xff]
  %v2582 = vld [vmem:[%s5 + $0x168] sm:$0xff]
  %v2583 = vld [vmem:[%s5 + $0x170] sm:$0xff]
  %v2584 = vld [vmem:[%s5 + $0x178] sm:$0xff]
  %v2585 = vld [vmem:[%s5 + $0x180] sm:$0xff]
  %v2586 = vld [vmem:[%s5 + $0x188] sm:$0xff]
  %v2587 = vld [vmem:[%s5 + $0x190] sm:$0xff]
  %v2588 = vld [vmem:[%s5 + $0x198] sm:$0xff]
  %v2589 = vld [vmem:[%s5 + $0x1a0] sm:$0xff]
  %v2590 = vld [vmem:[%s5 + $0x1a8] sm:$0xff]
  %v2591 = vld [vmem:[%s5 + $0x1b0] sm:$0xff]
  %v2592 = vld [vmem:[%s5 + $0x1b8] sm:$0xff]
  %v2593 = vld [vmem:[%s5 + $0x1c0] sm:$0xff]
  %v2594 = vld [vmem:[%s5 + $0x1c8] sm:$0xff]
  %v2595 = vld [vmem:[%s5 + $0x1d0] sm:$0xff]
  %v2596 = vld [vmem:[%s5 + $0x1d8] sm:$0xff]
  %v2597 = vld [vmem:[%s5 + $0x1e0] sm:$0xff]
  %v2598 = vld [vmem:[%s5 + $0x1e8] sm:$0xff]
  %v2599 = vld [vmem:[%s5 + $0x1f0] sm:$0xff]
  %v2600 = vld [vmem:[%s5 + $0x1f8] sm:$0xff]
  %v2601 = vld [vmem:[%s6] sm:$0x3]
  %v2603 = vperm.slane %v2601, 0
  %v2604 = vperm.slane %v2601, 1
  %v2671 = vunpack.c.l.b16 %v2537
  %v2672 = vunpack.c.h.b16 %v2537
  %v2673 = vunpack.c.l.b16 %v2538
  %v2674 = vunpack.c.h.b16 %v2538
  %v2675 = vunpack.c.l.b16 %v2539
  %v2676 = vunpack.c.h.b16 %v2539
  %v2677 = vunpack.c.l.b16 %v2540
  %v2678 = vunpack.c.h.b16 %v2540
  %v2679 = vunpack.c.l.b16 %v2541
  %v2680 = vunpack.c.h.b16 %v2541
  %v2681 = vunpack.c.l.b16 %v2542
  %v2682 = vunpack.c.h.b16 %v2542
  %v2683 = vunpack.c.l.b16 %v2543
  %v2684 = vunpack.c.h.b16 %v2543
  %v2685 = vunpack.c.l.b16 %v2544
  %v2686 = vunpack.c.h.b16 %v2544
  %v2687 = vunpack.c.l.b16 %v2545
  %v2688 = vunpack.c.h.b16 %v2545
  %v2689 = vunpack.c.l.b16 %v2546
  %v2690 = vunpack.c.h.b16 %v2546
  %v2691 = vunpack.c.l.b16 %v2547
  %v2692 = vunpack.c.h.b16 %v2547
  %v2693 = vunpack.c.l.b16 %v2548
  %v2694 = vunpack.c.h.b16 %v2548
  %v2695 = vunpack.c.l.b16 %v2549
  %v2696 = vunpack.c.h.b16 %v2549
  %v2697 = vunpack.c.l.b16 %v2550
  %v2698 = vunpack.c.h.b16 %v2550
  %v2699 = vunpack.c.l.b16 %v2551
  %v2700 = vunpack.c.h.b16 %v2551
  %v2701 = vunpack.c.l.b16 %v2552
  %v2702 = vunpack.c.h.b16 %v2552
  %v2703 = vunpack.c.l.b16 %v2553
  %v2704 = vunpack.c.h.b16 %v2553
  %v2705 = vunpack.c.l.b16 %v2554
  %v2706 = vunpack.c.h.b16 %v2554
  %v2707 = vunpack.c.l.b16 %v2555
  %v2708 = vunpack.c.h.b16 %v2555
  %v2709 = vunpack.c.l.b16 %v2556
  %v2710 = vunpack.c.h.b16 %v2556
  %v2711 = vunpack.c.l.b16 %v2557
  %v2712 = vunpack.c.h.b16 %v2557
  %v2713 = vunpack.c.l.b16 %v2558
  %v2714 = vunpack.c.h.b16 %v2558
  %v2715 = vunpack.c.l.b16 %v2559
  %v2716 = vunpack.c.h.b16 %v2559
  %v2717 = vunpack.c.l.b16 %v2560
  %v2718 = vunpack.c.h.b16 %v2560
  %v2719 = vunpack.c.l.b16 %v2561
  %v2720 = vunpack.c.h.b16 %v2561
  %v2721 = vunpack.c.l.b16 %v2562
  %v2722 = vunpack.c.h.b16 %v2562
  %v2723 = vunpack.c.l.b16 %v2563
  %v2724 = vunpack.c.h.b16 %v2563
  %v2725 = vunpack.c.l.b16 %v2564
  %v2726 = vunpack.c.h.b16 %v2564
  %v2727 = vunpack.c.l.b16 %v2565
  %v2728 = vunpack.c.h.b16 %v2565
  %v2729 = vunpack.c.l.b16 %v2566
  %v2730 = vunpack.c.h.b16 %v2566
  %v2731 = vunpack.c.l.b16 %v2567
  %v2732 = vunpack.c.h.b16 %v2567
  %v2733 = vunpack.c.l.b16 %v2568
  %v2734 = vunpack.c.h.b16 %v2568
  %v2735 = vunpack.c.l.b16 %v2569
  %v2736 = vunpack.c.h.b16 %v2569
  %v2737 = vunpack.c.l.b16 %v2570
  %v2738 = vunpack.c.h.b16 %v2570
  %v2739 = vunpack.c.l.b16 %v2571
  %v2740 = vunpack.c.h.b16 %v2571
  %v2741 = vunpack.c.l.b16 %v2572
  %v2742 = vunpack.c.h.b16 %v2572
  %v2743 = vunpack.c.l.b16 %v2573
  %v2744 = vunpack.c.h.b16 %v2573
  %v2745 = vunpack.c.l.b16 %v2574
  %v2746 = vunpack.c.h.b16 %v2574
  %v2747 = vunpack.c.l.b16 %v2575
  %v2748 = vunpack.c.h.b16 %v2575
  %v2749 = vunpack.c.l.b16 %v2576
  %v2750 = vunpack.c.h.b16 %v2576
  %v2751 = vunpack.c.l.b16 %v2577
  %v2752 = vunpack.c.h.b16 %v2577
  %v2753 = vunpack.c.l.b16 %v2578
  %v2754 = vunpack.c.h.b16 %v2578
  %v2755 = vunpack.c.l.b16 %v2579
  %v2756 = vunpack.c.h.b16 %v2579
  %v2757 = vunpack.c.l.b16 %v2580
  %v2758 = vunpack.c.h.b16 %v2580
  %v2759 = vunpack.c.l.b16 %v2581
  %v2760 = vunpack.c.h.b16 %v2581
  %v2761 = vunpack.c.l.b16 %v2582
  %v2762 = vunpack.c.h.b16 %v2582
  %v2763 = vunpack.c.l.b16 %v2583
  %v2764 = vunpack.c.h.b16 %v2583
  %v2765 = vunpack.c.l.b16 %v2584
  %v2766 = vunpack.c.h.b16 %v2584
  %v2767 = vunpack.c.l.b16 %v2585
  %v2768 = vunpack.c.h.b16 %v2585
  %v2769 = vunpack.c.l.b16 %v2586
  %v2770 = vunpack.c.h.b16 %v2586
  %v2771 = vunpack.c.l.b16 %v2587
  %v2772 = vunpack.c.h.b16 %v2587
  %v2773 = vunpack.c.l.b16 %v2588
  %v2774 = vunpack.c.h.b16 %v2588
  %v2775 = vunpack.c.l.b16 %v2589
  %v2776 = vunpack.c.h.b16 %v2589
  %v2777 = vunpack.c.l.b16 %v2590
  %v2778 = vunpack.c.h.b16 %v2590
  %v2779 = vunpack.c.l.b16 %v2591
  %v2780 = vunpack.c.h.b16 %v2591
  %v2781 = vunpack.c.l.b16 %v2592
  %v2782 = vunpack.c.h.b16 %v2592
  %v2783 = vunpack.c.l.b16 %v2593
  %v2784 = vunpack.c.h.b16 %v2593
  %v2785 = vunpack.c.l.b16 %v2594
  %v2786 = vunpack.c.h.b16 %v2594
  %v2787 = vunpack.c.l.b16 %v2595
  %v2788 = vunpack.c.h.b16 %v2595
  %v2789 = vunpack.c.l.b16 %v2596
  %v2790 = vunpack.c.h.b16 %v2596
  %v2791 = vunpack.c.l.b16 %v2597
  %v2792 = vunpack.c.h.b16 %v2597
  %v2793 = vunpack.c.l.b16 %v2598
  %v2794 = vunpack.c.h.b16 %v2598
  %v2795 = vunpack.c.l.b16 %v2599
  %v2796 = vunpack.c.h.b16 %v2599
  %v2797 = vunpack.c.l.b16 %v2600
  %v2798 = vunpack.c.h.b16 %v2600
  %v2799 = vpack.c.b16 %v2673, %v2671
  %v2800 = vpack.c.b16 %v2674, %v2672
  %v2801 = vpack.c.b16 %v2677, %v2675
  %v2802 = vpack.c.b16 %v2678, %v2676
  %v2803 = vpack.c.b16 %v2681, %v2679
  %v2804 = vpack.c.b16 %v2682, %v2680
  %v2805 = vpack.c.b16 %v2685, %v2683
  %v2806 = vpack.c.b16 %v2686, %v2684
  %v2807 = vpack.c.b16 %v2689, %v2687
  %v2808 = vpack.c.b16 %v2690, %v2688
  %v2809 = vpack.c.b16 %v2693, %v2691
  %v2810 = vpack.c.b16 %v2694, %v2692
  %v2811 = vpack.c.b16 %v2697, %v2695
  %v2812 = vpack.c.b16 %v2698, %v2696
  %v2813 = vpack.c.b16 %v2701, %v2699
  %v2814 = vpack.c.b16 %v2702, %v2700
  %v2815 = vpack.c.b16 %v2705, %v2703
  %v2816 = vpack.c.b16 %v2706, %v2704
  %v2817 = vpack.c.b16 %v2709, %v2707
  %v2818 = vpack.c.b16 %v2710, %v2708
  %v2819 = vpack.c.b16 %v2713, %v2711
  %v2820 = vpack.c.b16 %v2714, %v2712
  %v2821 = vpack.c.b16 %v2717, %v2715
  %v2822 = vpack.c.b16 %v2718, %v2716
  %v2823 = vpack.c.b16 %v2721, %v2719
  %v2824 = vpack.c.b16 %v2722, %v2720
  %v2825 = vpack.c.b16 %v2725, %v2723
  %v2826 = vpack.c.b16 %v2726, %v2724
  %v2827 = vpack.c.b16 %v2729, %v2727
  %v2828 = vpack.c.b16 %v2730, %v2728
  %v2829 = vpack.c.b16 %v2733, %v2731
  %v2830 = vpack.c.b16 %v2734, %v2732
  %v2831 = vpack.c.b16 %v2737, %v2735
  %v2832 = vpack.c.b16 %v2738, %v2736
  %v2833 = vpack.c.b16 %v2741, %v2739
  %v2834 = vpack.c.b16 %v2742, %v2740
  %v2835 = vpack.c.b16 %v2745, %v2743
  %v2836 = vpack.c.b16 %v2746, %v2744
  %v2837 = vpack.c.b16 %v2749, %v2747
  %v2838 = vpack.c.b16 %v2750, %v2748
  %v2839 = vpack.c.b16 %v2753, %v2751
  %v2840 = vpack.c.b16 %v2754, %v2752
  %v2841 = vpack.c.b16 %v2757, %v2755
  %v2842 = vpack.c.b16 %v2758, %v2756
  %v2843 = vpack.c.b16 %v2761, %v2759
  %v2844 = vpack.c.b16 %v2762, %v2760
  %v2845 = vpack.c.b16 %v2765, %v2763
  %v2846 = vpack.c.b16 %v2766, %v2764
  %v2847 = vpack.c.b16 %v2769, %v2767
  %v2848 = vpack.c.b16 %v2770, %v2768
  %v2849 = vpack.c.b16 %v2773, %v2771
  %v2850 = vpack.c.b16 %v2774, %v2772
  %v2851 = vpack.c.b16 %v2777, %v2775
  %v2852 = vpack.c.b16 %v2778, %v2776
  %v2853 = vpack.c.b16 %v2781, %v2779
  %v2854 = vpack.c.b16 %v2782, %v2780
  %v2855 = vpack.c.b16 %v2785, %v2783
  %v2856 = vpack.c.b16 %v2786, %v2784
  %v2857 = vpack.c.b16 %v2789, %v2787
  %v2858 = vpack.c.b16 %v2790, %v2788
  %v2859 = vpack.c.b16 %v2793, %v2791
  %v2860 = vpack.c.b16 %v2794, %v2792
  %v2861 = vpack.c.b16 %v2797, %v2795
  %v2862 = vpack.c.b16 %v2798, %v2796
  %2927 = vmatpush.bf16.msra.mxu0 %v2813
  %2928 = vmatpush.bf16.msra.mxu0 %v2811
  %2929 = vmatpush.bf16.msra.mxu0 %v2809
  %2930 = vmatpush.bf16.msra.mxu0 %v2807
  %2931 = vmatpush.bf16.msra.mxu0 %v2805
  %2932 = vmatpush.bf16.msra.mxu0 %v2803
  %2933 = vmatpush.bf16.msra.mxu0 %v2801
  %2934 = vmatpush.bf16.msra.mxu0 %v2799
  %2935 = vmatmul.bf16.gmra.mxu0 %v2533
  %v2936 = vpop.f32.mrf.mxu0
  %v2937 = vadd.f32 %v2603, %v2936
  %v2938 = vpop.f32.mrf.mxu0
  %2939 = vdwg.mxu0
  %2940 = vmatpush.bf16.msra.mxu0 %v2829
  %2941 = vmatpush.bf16.msra.mxu0 %v2827
  %2942 = vmatpush.bf16.msra.mxu0 %v2825
  %2943 = vmatpush.bf16.msra.mxu0 %v2823
  %2944 = vmatpush.bf16.msra.mxu0 %v2821
  %2945 = vmatpush.bf16.msra.mxu0 %v2819
  %2946 = vmatpush.bf16.msra.mxu0 %v2817
  %2947 = vmatpush.bf16.msra.mxu0 %v2815
  %2948 = vmatmul.bf16.gmra.mxu0 %v2534
  %v2949 = vpop.f32.mrf.mxu0
  %v2950 = vadd.f32 %v2937, %v2949
  %v2951 = vpop.f32.mrf.mxu0
  %2952 = vdwg.mxu0
  %2953 = vmatpush.bf16.msra.mxu0 %v2845
  %2954 = vmatpush.bf16.msra.mxu0 %v2843
  %2955 = vmatpush.bf16.msra.mxu0 %v2841
  %2956 = vmatpush.bf16.msra.mxu0 %v2839
  %2957 = vmatpush.bf16.msra.mxu0 %v2837
  %2958 = vmatpush.bf16.msra.mxu0 %v2835
  %2959 = vmatpush.bf16.msra.mxu0 %v2833
  %2960 = vmatpush.bf16.msra.mxu0 %v2831
  %2961 = vmatmul.bf16.gmra.mxu0 %v2535
  %v2962 = vpop.f32.mrf.mxu0
  %v2963 = vadd.f32 %v2950, %v2962
  %v2964 = vpop.f32.mrf.mxu0
  %2965 = vdwg.mxu0
  %2966 = vmatpush.bf16.msra.mxu0 %v2861
  %2967 = vmatpush.bf16.msra.mxu0 %v2859
  %2968 = vmatpush.bf16.msra.mxu0 %v2857
  %2969 = vmatpush.bf16.msra.mxu0 %v2855
  %2970 = vmatpush.bf16.msra.mxu0 %v2853
  %2971 = vmatpush.bf16.msra.mxu0 %v2851
  %2972 = vmatpush.bf16.msra.mxu0 %v2849
  %2973 = vmatpush.bf16.msra.mxu0 %v2847
  %2974 = vmatmul.bf16.gmra.mxu0 %v2536
  %v2975 = vpop.f32.mrf.mxu0
  %v2976 = vadd.f32 %v2963, %v2975
  %v2977 = vpop.f32.mrf.mxu0
  %2978 = vdwg.mxu0
  %2979 = vmatpush.bf16.msra.mxu0 %v2814
  %2980 = vmatpush.bf16.msra.mxu0 %v2812
  %2981 = vmatpush.bf16.msra.mxu0 %v2810
  %2982 = vmatpush.bf16.msra.mxu0 %v2808
  %2983 = vmatpush.bf16.msra.mxu0 %v2806
  %2984 = vmatpush.bf16.msra.mxu0 %v2804
  %2985 = vmatpush.bf16.msra.mxu0 %v2802
  %2986 = vmatpush.bf16.msra.mxu0 %v2800
  %2987 = vmatmul.bf16.gmra.mxu0 %v2533
  %v2988 = vpop.f32.mrf.mxu0
  %v2989 = vadd.f32 %v2604, %v2988
  %v2990 = vpop.f32.mrf.mxu0
  %2991 = vdwg.mxu0
  %2992 = vmatpush.bf16.msra.mxu0 %v2830
  %2993 = vmatpush.bf16.msra.mxu0 %v2828
  %2994 = vmatpush.bf16.msra.mxu0 %v2826
  %2995 = vmatpush.bf16.msra.mxu0 %v2824
  %2996 = vmatpush.bf16.msra.mxu0 %v2822
  %2997 = vmatpush.bf16.msra.mxu0 %v2820
  %2998 = vmatpush.bf16.msra.mxu0 %v2818
  %2999 = vmatpush.bf16.msra.mxu0 %v2816
  %3000 = vmatmul.bf16.gmra.mxu0 %v2534
  %v3001 = vpop.f32.mrf.mxu0
  %v3002 = vadd.f32 %v2989, %v3001
  %v3003 = vpop.f32.mrf.mxu0
  %3004 = vdwg.mxu0
  %3005 = vmatpush.bf16.msra.mxu0 %v2846
  %3006 = vmatpush.bf16.msra.mxu0 %v2844
  %3007 = vmatpush.bf16.msra.mxu0 %v2842
  %3008 = vmatpush.bf16.msra.mxu0 %v2840
  %3009 = vmatpush.bf16.msra.mxu0 %v2838
  %3010 = vmatpush.bf16.msra.mxu0 %v2836
  %3011 = vmatpush.bf16.msra.mxu0 %v2834
  %3012 = vmatpush.bf16.msra.mxu0 %v2832
  %3013 = vmatmul.bf16.gmra.mxu0 %v2535
  %v3014 = vpop.f32.mrf.mxu0
  %v3015 = vadd.f32 %v3002, %v3014
  %v3016 = vpop.f32.mrf.mxu0
  %3017 = vdwg.mxu0
  %3018 = vmatpush.bf16.msra.mxu0 %v2862
  %3019 = vmatpush.bf16.msra.mxu0 %v2860
  %3020 = vmatpush.bf16.msra.mxu0 %v2858
  %3021 = vmatpush.bf16.msra.mxu0 %v2856
  %3022 = vmatpush.bf16.msra.mxu0 %v2854
  %3023 = vmatpush.bf16.msra.mxu0 %v2852
  %3024 = vmatpush.bf16.msra.mxu0 %v2850
  %3025 = vmatpush.bf16.msra.mxu0 %v2848
  %3026 = vmatmul.bf16.gmra.mxu0 %v2536
  %v3027 = vpop.f32.mrf.mxu0
  %v3028 = vadd.f32 %v3015, %v3027
  %v3029 = vpop.f32.mrf.mxu0
  %3030 = vdwg.mxu0
  %v3031 = vmax.f32 %v2976, 0.0
  %v3032 = vmax.f32 %v3028, 0.0
  %v3033 = vpack.c.bf16 %v3031, %v3031
  %v3034 = vpack.c.bf16 %v3032, %v3032
  %v3035 = vld [vmem:[%s7] sm:$0xf]
  %v3036 = vld [vmem:[%s7 + $0x4] sm:$0xf]
  %v3037 = vld [vmem:[%s7 + $0x8] sm:$0xf]
  %v3038 = vld [vmem:[%s7 + $0xc] sm:$0xf]
  %v3039 = vld [vmem:[%s7 + $0x10] sm:$0xf]
  %v3040 = vld [vmem:[%s7 + $0x14] sm:$0xf]
  %v3041 = vld [vmem:[%s7 + $0x18] sm:$0xf]
  %v3042 = vld [vmem:[%s7 + $0x1c] sm:$0xf]
  %v3043 = vld [vmem:[%s7 + $0x20] sm:$0xf]
  %v3044 = vld [vmem:[%s7 + $0x24] sm:$0xf]
  %v3045 = vld [vmem:[%s7 + $0x28] sm:$0xf]
  %v3046 = vld [vmem:[%s7 + $0x2c] sm:$0xf]
  %v3047 = vld [vmem:[%s7 + $0x30] sm:$0xf]
  %v3048 = vld [vmem:[%s7 + $0x34] sm:$0xf]
  %v3049 = vld [vmem:[%s7 + $0x38] sm:$0xf]
  %v3050 = vld [vmem:[%s7 + $0x3c] sm:$0xf]
  %v3051 = vld [vmem:[%s7 + $0x40] sm:$0xf]
  %v3052 = vld [vmem:[%s7 + $0x44] sm:$0xf]
  %v3053 = vld [vmem:[%s7 + $0x48] sm:$0xf]
  %v3054 = vld [vmem:[%s7 + $0x4c] sm:$0xf]
  %v3055 = vld [vmem:[%s7 + $0x50] sm:$0xf]
  %v3056 = vld [vmem:[%s7 + $0x54] sm:$0xf]
  %v3057 = vld [vmem:[%s7 + $0x58] sm:$0xf]
  %v3058 = vld [vmem:[%s7 + $0x5c] sm:$0xf]
  %v3059 = vld [vmem:[%s7 + $0x60] sm:$0xf]
  %v3060 = vld [vmem:[%s7 + $0x64] sm:$0xf]
  %v3061 = vld [vmem:[%s7 + $0x68] sm:$0xf]
  %v3062 = vld [vmem:[%s7 + $0x6c] sm:$0xf]
  %v3063 = vld [vmem:[%s7 + $0x70] sm:$0xf]
  %v3064 = vld [vmem:[%s7 + $0x74] sm:$0xf]
  %v3065 = vld [vmem:[%s7 + $0x78] sm:$0xf]
  %v3066 = vld [vmem:[%s7 + $0x7c] sm:$0xf]
  %v3067 = vld [vmem:[%s8] sm:$0x1]
  %v3069 = vperm.slane %v3067, 0
  %v3103 = vunpack.c.l.b16 %v3035
  %v3104 = vunpack.c.l.b16 %v3036
  %v3105 = vunpack.c.l.b16 %v3037
  %v3106 = vunpack.c.l.b16 %v3038
  %v3107 = vunpack.c.l.b16 %v3039
  %v3108 = vunpack.c.l.b16 %v3040
  %v3109 = vunpack.c.l.b16 %v3041
  %v3110 = vunpack.c.l.b16 %v3042
  %v3111 = vunpack.c.l.b16 %v3043
  %v3112 = vunpack.c.l.b16 %v3044
  %v3113 = vunpack.c.l.b16 %v3045
  %v3114 = vunpack.c.l.b16 %v3046
  %v3115 = vunpack.c.l.b16 %v3047
  %v3116 = vunpack.c.l.b16 %v3048
  %v3117 = vunpack.c.l.b16 %v3049
  %v3118 = vunpack.c.l.b16 %v3050
  %v3119 = vunpack.c.l.b16 %v3051
  %v3120 = vunpack.c.l.b16 %v3052
  %v3121 = vunpack.c.l.b16 %v3053
  %v3122 = vunpack.c.l.b16 %v3054
  %v3123 = vunpack.c.l.b16 %v3055
  %v3124 = vunpack.c.l.b16 %v3056
  %v3125 = vunpack.c.l.b16 %v3057
  %v3126 = vunpack.c.l.b16 %v3058
  %v3127 = vunpack.c.l.b16 %v3059
  %v3128 = vunpack.c.l.b16 %v3060
  %v3129 = vunpack.c.l.b16 %v3061
  %v3130 = vunpack.c.l.b16 %v3062
  %v3131 = vunpack.c.l.b16 %v3063
  %v3132 = vunpack.c.l.b16 %v3064
  %v3133 = vunpack.c.l.b16 %v3065
  %v3134 = vunpack.c.l.b16 %v3066
  %v3135 = vpack.c.b16 %v3104, %v3103
  %v3136 = vpack.c.b16 %v3106, %v3105
  %v3137 = vpack.c.b16 %v3108, %v3107
  %v3138 = vpack.c.b16 %v3110, %v3109
  %v3139 = vpack.c.b16 %v3112, %v3111
  %v3140 = vpack.c.b16 %v3114, %v3113
  %v3141 = vpack.c.b16 %v3116, %v3115
  %v3142 = vpack.c.b16 %v3118, %v3117
  %v3143 = vpack.c.b16 %v3120, %v3119
  %v3144 = vpack.c.b16 %v3122, %v3121
  %v3145 = vpack.c.b16 %v3124, %v3123
  %v3146 = vpack.c.b16 %v3126, %v3125
  %v3147 = vpack.c.b16 %v3128, %v3127
  %v3148 = vpack.c.b16 %v3130, %v3129
  %v3149 = vpack.c.b16 %v3132, %v3131
  %v3150 = vpack.c.b16 %v3134, %v3133
  %3167 = vmatpush.bf16.msra.mxu0 %v3142
  %3168 = vmatpush.bf16.msra.mxu0 %v3141
  %3169 = vmatpush.bf16.msra.mxu0 %v3140
  %3170 = vmatpush.bf16.msra.mxu0 %v3139
  %3171 = vmatpush.bf16.msra.mxu0 %v3138
  %3172 = vmatpush.bf16.msra.mxu0 %v3137
  %3173 = vmatpush.bf16.msra.mxu0 %v3136
  %3174 = vmatpush.bf16.msra.mxu0 %v3135
  %3175 = vmatmul.bf16.gmra.mxu0 %v3033
  %v3176 = vpop.f32.mrf.mxu0
  %v3177 = vadd.f32 %v3069, %v3176
  %v3178 = vpop.f32.mrf.mxu0
  %3179 = vdwg.mxu0
  %3180 = vmatpush.bf16.msra.mxu0 %v3150
  %3181 = vmatpush.bf16.msra.mxu0 %v3149
  %3182 = vmatpush.bf16.msra.mxu0 %v3148
  %3183 = vmatpush.bf16.msra.mxu0 %v3147
  %3184 = vmatpush.bf16.msra.mxu0 %v3146
  %3185 = vmatpush.bf16.msra.mxu0 %v3145
  %3186 = vmatpush.bf16.msra.mxu0 %v3144
  %3187 = vmatpush.bf16.msra.mxu0 %v3143
  %3188 = vmatmul.bf16.gmra.mxu0 %v3034
  %v3189 = vpop.f32.mrf.mxu0
  %v3190 = vadd.f32 %v3177, %v3189
  %v3191 = vpop.f32.mrf.mxu0
  %3192 = vdwg.mxu0
  %v3193 = vmax.f32 %v3190, 0.0
  %v3194 = vpack.c.bf16 %v3193, %v3193
  %v3195 = vld [vmem:[%s9] sm:$0xf]
  %v3196 = vld [vmem:[%s9 + $0x4] sm:$0xf]
  %v3197 = vld [vmem:[%s9 + $0x8] sm:$0xf]
  %v3198 = vld [vmem:[%s9 + $0xc] sm:$0xf]
  %v3199 = vld [vmem:[%s9 + $0x10] sm:$0xf]
  %v3200 = vld [vmem:[%s9 + $0x14] sm:$0xf]
  %v3201 = vld [vmem:[%s9 + $0x18] sm:$0xf]
  %v3202 = vld [vmem:[%s9 + $0x1c] sm:$0xf]
  %v3203 = vld [vmem:[%s9 + $0x20] sm:$0xf]
  %v3204 = vld [vmem:[%s9 + $0x24] sm:$0xf]
  %v3205 = vld [vmem:[%s9 + $0x28] sm:$0xf]
  %v3206 = vld [vmem:[%s9 + $0x2c] sm:$0xf]
  %v3207 = vld [vmem:[%s9 + $0x30] sm:$0xf]
  %v3208 = vld [vmem:[%s9 + $0x34] sm:$0xf]
  %v3209 = vld [vmem:[%s9 + $0x38] sm:$0xf]
  %v3210 = vld [vmem:[%s9 + $0x3c] sm:$0xf]
  %v3211 = vld [vmem:[%s10] sm:$0x1]
  %v3213 = vperm.slane %v3211, 0
  %v3231 = vunpack.c.l.b16 %v3195
  %v3232 = vunpack.c.l.b16 %v3196
  %v3233 = vunpack.c.l.b16 %v3197
  %v3234 = vunpack.c.l.b16 %v3198
  %v3235 = vunpack.c.l.b16 %v3199
  %v3236 = vunpack.c.l.b16 %v3200
  %v3237 = vunpack.c.l.b16 %v3201
  %v3238 = vunpack.c.l.b16 %v3202
  %v3239 = vunpack.c.l.b16 %v3203
  %v3240 = vunpack.c.l.b16 %v3204
  %v3241 = vunpack.c.l.b16 %v3205
  %v3242 = vunpack.c.l.b16 %v3206
  %v3243 = vunpack.c.l.b16 %v3207
  %v3244 = vunpack.c.l.b16 %v3208
  %v3245 = vunpack.c.l.b16 %v3209
  %v3246 = vunpack.c.l.b16 %v3210
  %v3247 = vpack.c.b16 %v3232, %v3231
  %v3248 = vpack.c.b16 %v3234, %v3233
  %v3249 = vpack.c.b16 %v3236, %v3235
  %v3250 = vpack.c.b16 %v3238, %v3237
  %v3251 = vpack.c.b16 %v3240, %v3239
  %v3252 = vpack.c.b16 %v3242, %v3241
  %v3253 = vpack.c.b16 %v3244, %v3243
  %v3254 = vpack.c.b16 %v3246, %v3245
  %3263 = vmatpush.bf16.msra.mxu0 %v3254
  %3264 = vmatpush.bf16.msra.mxu0 %v3253
  %3265 = vmatpush.bf16.msra.mxu0 %v3252
  %3266 = vmatpush.bf16.msra.mxu0 %v3251
  %3267 = vmatpush.bf16.msra.mxu0 %v3250
  %3268 = vmatpush.bf16.msra.mxu0 %v3249
  %3269 = vmatpush.bf16.msra.mxu0 %v3248
  %3270 = vmatpush.bf16.msra.mxu0 %v3247
  %3271 = vmatmul.bf16.gmra.mxu0 %v3194
  %v3272 = vpop.f32.mrf.mxu0
  %v3273 = vadd.f32 %v3213, %v3272
  %v3274 = vpop.f32.mrf.mxu0
  %3275 = vdwg.mxu0
  %v3276 = vmax.f32 %v3273, 0.0
  %v3277 = vpack.c.bf16 %v3276, %v3276
  %v3278 = vld [vmem:[%s11] sm:$0xf]
  %v3279 = vld [vmem:[%s11 + $0x4] sm:$0xf]
  %v3280 = vld [vmem:[%s11 + $0x8] sm:$0xf]
  %v3281 = vld [vmem:[%s11 + $0xc] sm:$0xf]
  %v3282 = vld [vmem:[%s11 + $0x10] sm:$0xf]
  %v3283 = vld [vmem:[%s11 + $0x14] sm:$0xf]
  %v3284 = vld [vmem:[%s11 + $0x18] sm:$0xf]
  %v3285 = vld [vmem:[%s11 + $0x1c] sm:$0xf]
  %v3286 = vld [vmem:[%s11 + $0x20] sm:$0xf]
  %v3287 = vld [vmem:[%s11 + $0x24] sm:$0xf]
  %v3288 = vld [vmem:[%s11 + $0x28] sm:$0xf]
  %v3289 = vld [vmem:[%s11 + $0x2c] sm:$0xf]
  %v3290 = vld [vmem:[%s11 + $0x30] sm:$0xf]
  %v3291 = vld [vmem:[%s11 + $0x34] sm:$0xf]
  %v3292 = vld [vmem:[%s11 + $0x38] sm:$0xf]
  %v3293 = vld [vmem:[%s11 + $0x3c] sm:$0xf]
  %v3294 = vld [vmem:[%s12] sm:$0x1]
  %v3296 = vperm.slane %v3294, 0
  %v3314 = vunpack.c.l.b16 %v3278
  %v3315 = vunpack.c.l.b16 %v3279
  %v3316 = vunpack.c.l.b16 %v3280
  %v3317 = vunpack.c.l.b16 %v3281
  %v3318 = vunpack.c.l.b16 %v3282
  %v3319 = vunpack.c.l.b16 %v3283
  %v3320 = vunpack.c.l.b16 %v3284
  %v3321 = vunpack.c.l.b16 %v3285
  %v3322 = vunpack.c.l.b16 %v3286
  %v3323 = vunpack.c.l.b16 %v3287
  %v3324 = vunpack.c.l.b16 %v3288
  %v3325 = vunpack.c.l.b16 %v3289
  %v3326 = vunpack.c.l.b16 %v3290
  %v3327 = vunpack.c.l.b16 %v3291
  %v3328 = vunpack.c.l.b16 %v3292
  %v3329 = vunpack.c.l.b16 %v3293
  %v3330 = vpack.c.b16 %v3315, %v3314
  %v3331 = vpack.c.b16 %v3317, %v3316
  %v3332 = vpack.c.b16 %v3319, %v3318
  %v3333 = vpack.c.b16 %v3321, %v3320
  %v3334 = vpack.c.b16 %v3323, %v3322
  %v3335 = vpack.c.b16 %v3325, %v3324
  %v3336 = vpack.c.b16 %v3327, %v3326
  %v3337 = vpack.c.b16 %v3329, %v3328
  %3346 = vmatpush.bf16.msra.mxu0 %v3337
  %3347 = vmatpush.bf16.msra.mxu0 %v3336
  %3348 = vmatpush.bf16.msra.mxu0 %v3335
  %3349 = vmatpush.bf16.msra.mxu0 %v3334
  %3350 = vmatpush.bf16.msra.mxu0 %v3333
  %3351 = vmatpush.bf16.msra.mxu0 %v3332
  %3352 = vmatpush.bf16.msra.mxu0 %v3331
  %3353 = vmatpush.bf16.msra.mxu0 %v3330
  %3354 = vmatmul.bf16.gmra.mxu0 %v3277
  %v3355 = vpop.f32.mrf.mxu0
  %v3356 = vadd.f32 %v3296, %v3355
  %v3357 = vpop.f32.mrf.mxu0
  %3358 = vdwg.mxu0
  %3359 = vst [vmem:[%s13] sm:$0xff] %v3356
  // Predicated region
  $region54: #{_forward_impl.1} parent=0 // pred_check
    _
  $region55: #{_forward_impl.1} parent=0 // pred_check_branch
    %3361 = sbr.rel (0) target = $region57
  $region56: #{_forward_impl.1} parent=0 // pred_region
    _
  $region57: #{_forward_impl.1} parent=0 // pred_fallthru
    _
  // Predicated region
  $region58: #{_forward_impl.1} parent=0 // pred_check
    _
  $region59: #{_forward_impl.1} parent=0 // pred_check_branch
    %3363 = sbr.rel (0) target = $region61
  $region60: #{_forward_impl.1} parent=0 // pred_region
    _
  $region61: #{_forward_impl.1} parent=0 // pred_fallthru
    _

// kernel: _forward_impl.1
$region0: #{_forward_impl.1}
  #allocation0 [shape = 'u32[]', space=smem, size = 0x4, offset = 0x4, fixed_abs, tag = 'smem constant byte address 0x4 - core index']
  #allocation1 [shape = 'u32[72,128]{1,0:T(1,128)}', space=vmem, size = 0x9000, scoped, tag = 'internal scratch']
  %s0 = inlined_call_operand.vmem [shape: bf16[8,128], index: 0, kind: input, shape index: {}]
  %s1 = inlined_call_operand.vmem [shape: bf16[128,1024], index: 1, kind: input, shape index: {}]
  %s2 = inlined_call_operand.vmem [shape: f32[1,1024], index: 2, kind: input, shape index: {}]
  %s3 = inlined_call_operand.vmem [shape: bf16[1024,512], index: 3, kind: input, shape index: {}]
  %s4 = inlined_call_operand.vmem [shape: f32[1,512], index: 4, kind: input, shape index: {}]
  %s5 = inlined_call_operand.vmem [shape: bf16[512,256], index: 5, kind: input, shape index: {}]
  %s6 = inlined_call_operand.vmem [shape: f32[1,256], index: 6, kind: input, shape index: {}]
  %s7 = inlined_call_operand.vmem [shape: bf16[256,128], index: 7, kind: input, shape index: {}]
  %s8 = inlined_call_operand.vmem [shape: f32[1,128], index: 8, kind: input, shape index: {}]
  %s9 = inlined_call_operand.vmem [shape: bf16[128,128], index: 9, kind: input, shape index: {}]
  %s10 = inlined_call_operand.vmem [shape: f32[1,128], index: 10, kind: input, shape index: {}]
  %s11 = inlined_call_operand.vmem [shape: bf16[128,128], index: 11, kind: input, shape index: {}]
  %s12 = inlined_call_operand.vmem [shape: f32[1,128], index: 12, kind: input, shape index: {}]
  %s13 = inlined_call_operand.vmem [shape: f32[8,128], index: 13, kind: output, shape index: {}]
  %s14 = sld [smem:[#allocation0]]
  $region62: #{_forward_impl.1} parent=0
    _
  %s16 = ssub.s32 1, %s14
  %s17 = scalar_select 0, %s16, %s14
  // Predicated region
  $region2: #{_forward_impl.1} parent=0 // pred_check
    _
  $region3: #{_forward_impl.1} parent=0 // pred_check_branch
    %19 = sbr.rel (0) target = $region5
  $region4: #{_forward_impl.1} parent=0 // pred_region
    _
  $region5: #{_forward_impl.1} parent=0 // pred_fallthru
    _
  // Predicated region
  $region6: #{_forward_impl.1} parent=0 // pred_check
    _
  $region7: #{_forward_impl.1} parent=0 // pred_check_branch
    %21 = sbr.rel (0) target = $region9
  $region8: #{_forward_impl.1} parent=0 // pred_region
    _
  $region9: #{_forward_impl.1} parent=0 // pred_fallthru
    _
  // Predicated region
  $region10: #{_forward_impl.1} parent=0 // pred_check
    _
  $region11: #{_forward_impl.1} parent=0 // pred_check_branch
    %23 = sbr.rel (0) target = $region13
  $region12: #{_forward_impl.1} parent=0 // pred_region
    _
  $region13: #{_forward_impl.1} parent=0 // pred_fallthru
    _
  // Predicated region
  $region14: #{_forward_impl.1} parent=0 // pred_check
    _
  $region15: #{_forward_impl.1} parent=0 // pred_check_branch
    %25 = sbr.rel (0) target = $region17
  $region16: #{_forward_impl.1} parent=0 // pred_region
    _
  $region17: #{_forward_impl.1} parent=0 // pred_fallthru
    _
  // Predicated region
  $region18: #{_forward_impl.1} parent=0 // pred_check
    _
  $region19: #{_forward_impl.1} parent=0 // pred_check_branch
    %27 = sbr.rel (0) target = $region21
  $region20: #{_forward_impl.1} parent=0 // pred_region
    _
  $region21: #{_forward_impl.1} parent=0 // pred_fallthru
    _
  // Predicated region
  $region22: #{_forward_impl.1} parent=0 // pred_check
    _
  $region23: #{_forward_impl.1} parent=0 // pred_check_branch
    %29 = sbr.rel (0) target = $region25
  $region24: #{_forward_impl.1} parent=0 // pred_region
    _
  $region25: #{_forward_impl.1} parent=0 // pred_fallthru
    _
  // Predicated region
  $region26: #{_forward_impl.1} parent=0 // pred_check
    _
  $region27: #{_forward_impl.1} parent=0 // pred_check_branch
    %31 = sbr.rel (0) target = $region29
  $region28: #{_forward_impl.1} parent=0 // pred_region
    _
  $region29: #{_forward_impl.1} parent=0 // pred_fallthru
    _
  // Predicated region
  $region30: #{_forward_impl.1} parent=0 // pred_check
    _
  $region31: #{_forward_impl.1} parent=0 // pred_check_branch
    %33 = sbr.rel (0) target = $region33
  $region32: #{_forward_impl.1} parent=0 // pred_region
    _
  $region33: #{_forward_impl.1} parent=0 // pred_fallthru
    _
  // Predicated region
  $region34: #{_forward_impl.1} parent=0 // pred_check
    _
  $region35: #{_forward_impl.1} parent=0 // pred_check_branch
    %35 = sbr.rel (0) target = $region37
  $region36: #{_forward_impl.1} parent=0 // pred_region
    _
  $region37: #{_forward_impl.1} parent=0 // pred_fallthru
    _
  // Predicated region
  $region38: #{_forward_impl.1} parent=0 // pred_check
    _
  $region39: #{_forward_impl.1} parent=0 // pred_check_branch
    %37 = sbr.rel (0) target = $region41
  $region40: #{_forward_impl.1} parent=0 // pred_region
    _
  $region41: #{_forward_impl.1} parent=0 // pred_fallthru
    _
  // Predicated region
  $region42: #{_forward_impl.1} parent=0 // pred_check
    _
  $region43: #{_forward_impl.1} parent=0 // pred_check_branch
    %39 = sbr.rel (0) target = $region45
  $region44: #{_forward_impl.1} parent=0 // pred_region
    _
  $region45: #{_forward_impl.1} parent=0 // pred_fallthru
    _
  // Predicated region
  $region46: #{_forward_impl.1} parent=0 // pred_check
    _
  $region47: #{_forward_impl.1} parent=0 // pred_check_branch
    %41 = sbr.rel (0) target = $region49
  $region48: #{_forward_impl.1} parent=0 // pred_region
    _
  $region49: #{_forward_impl.1} parent=0 // pred_fallthru
    _
  // Predicated region
  $region50: #{_forward_impl.1} parent=0 // pred_check
    _
  $region51: #{_forward_impl.1} parent=0 // pred_check_branch
    %43 = sbr.rel (0) target = $region53
  $region52: #{_forward_impl.1} parent=0 // pred_region
    _
  $region53: #{_forward_impl.1} parent=0 // pred_fallthru
    _
  %v44 = vld [vmem:[%s0] sm:$0xf]
  %v45 = vld [vmem:[%s1] sm:$0xff]
  %v46 = vld [vmem:[%s1 + $0x8] sm:$0xff]
  %v47 = vld [vmem:[%s1 + $0x10] sm:$0xff]
  %v48 = vld [vmem:[%s1 + $0x18] sm:$0xff]
  %v49 = vld [vmem:[%s1 + $0x20] sm:$0xff]
  %v50 = vld [vmem:[%s1 + $0x28] sm:$0xff]
  %v51 = vld [vmem:[%s1 + $0x30] sm:$0xff]
  %v52 = vld [vmem:[%s1 + $0x38] sm:$0xff]
  %v53 = vld [vmem:[%s1 + $0x40] sm:$0xff]
  %v54 = vld [vmem:[%s1 + $0x48] sm:$0xff]
  %v55 = vld [vmem:[%s1 + $0x50] sm:$0xff]
  %v56 = vld [vmem:[%s1 + $0x58] sm:$0xff]
  %v57 = vld [vmem:[%s1 + $0x60] sm:$0xff]
  %v58 = vld [vmem:[%s1 + $0x68] sm:$0xff]
  %v59 = vld [vmem:[%s1 + $0x70] sm:$0xff]
  %v60 = vld [vmem:[%s1 + $0x78] sm:$0xff]
  %v61 = vld [vmem:[%s1 + $0x80] sm:$0xff]
  %v62 = vld [vmem:[%s1 + $0x88] sm:$0xff]
  %v63 = vld [vmem:[%s1 + $0x90] sm:$0xff]
  %v64 = vld [vmem:[%s1 + $0x98] sm:$0xff]
  %v65 = vld [vmem:[%s1 + $0xa0] sm:$0xff]
  %v66 = vld [vmem:[%s1 + $0xa8] sm:$0xff]
  %v67 = vld [vmem:[%s1 + $0xb0] sm:$0xff]
  %v68 = vld [vmem:[%s1 + $0xb8] sm:$0xff]
  %v69 = vld [vmem:[%s1 + $0xc0] sm:$0xff]
  %v70 = vld [vmem:[%s1 + $0xc8] sm:$0xff]
  %v71 = vld [vmem:[%s1 + $0xd0] sm:$0xff]
  %v72 = vld [vmem:[%s1 + $0xd8] sm:$0xff]
  %v73 = vld [vmem:[%s1 + $0xe0] sm:$0xff]
  %v74 = vld [vmem:[%s1 + $0xe8] sm:$0xff]
  %v75 = vld [vmem:[%s1 + $0xf0] sm:$0xff]
  %v76 = vld [vmem:[%s1 + $0xf8] sm:$0xff]
  %v77 = vld [vmem:[%s1 + $0x100] sm:$0xff]
  %v78 = vld [vmem:[%s1 + $0x108] sm:$0xff]
  %v79 = vld [vmem:[%s1 + $0x110] sm:$0xff]
  %v80 = vld [vmem:[%s1 + $0x118] sm:$0xff]
  %v81 = vld [vmem:[%s1 + $0x120] sm:$0xff]
  %v82 = vld [vmem:[%s1 + $0x128] sm:$0xff]
  %v83 = vld [vmem:[%s1 + $0x130] sm:$0xff]
  %v84 = vld [vmem:[%s1 + $0x138] sm:$0xff]
  %v85 = vld [vmem:[%s1 + $0x140] sm:$0xff]
  %v86 = vld [vmem:[%s1 + $0x148] sm:$0xff]
  %v87 = vld [vmem:[%s1 + $0x150] sm:$0xff]
  %v88 = vld [vmem:[%s1 + $0x158] sm:$0xff]
  %v89 = vld [vmem:[%s1 + $0x160] sm:$0xff]
  %v90 = vld [vmem:[%s1 + $0x168] sm:$0xff]
  %v91 = vld [vmem:[%s1 + $0x170] sm:$0xff]
  %v92 = vld [vmem:[%s1 + $0x178] sm:$0xff]
  %v93 = vld [vmem:[%s1 + $0x180] sm:$0xff]
  %v94 = vld [vmem:[%s1 + $0x188] sm:$0xff]
  %v95 = vld [vmem:[%s1 + $0x190] sm:$0xff]
  %v96 = vld [vmem:[%s1 + $0x198] sm:$0xff]
  %v97 = vld [vmem:[%s1 + $0x1a0] sm:$0xff]
  %v98 = vld [vmem:[%s1 + $0x1a8] sm:$0xff]
  %v99 = vld [vmem:[%s1 + $0x1b0] sm:$0xff]
  %v100 = vld [vmem:[%s1 + $0x1b8] sm:$0xff]
  %v101 = vld [vmem:[%s1 + $0x1c0] sm:$0xff]
  %v102 = vld [vmem:[%s1 + $0x1c8] sm:$0xff]
  %v103 = vld [vmem:[%s1 + $0x1d0] sm:$0xff]
  %v104 = vld [vmem:[%s1 + $0x1d8] sm:$0xff]
  %v105 = vld [vmem:[%s1 + $0x1e0] sm:$0xff]
  %v106 = vld [vmem:[%s1 + $0x1e8] sm:$0xff]
  %v107 = vld [vmem:[%s1 + $0x1f0] sm:$0xff]
  %v108 = vld [vmem:[%s1 + $0x1f8] sm:$0xff]
  %v109 = vld [vmem:[%s2] sm:$0xff]
  %v111 = vperm.slane %v109, 0
  %v112 = vperm.slane %v109, 1
  %v113 = vperm.slane %v109, 2
  %v114 = vperm.slane %v109, 3
  %v115 = vperm.slane %v109, 4
  %v116 = vperm.slane %v109, 5
  %v117 = vperm.slane %v109, 6
  %v118 = vperm.slane %v109, 7
  %v191 = vunpack.c.l.b16 %v45
  %v192 = vunpack.c.h.b16 %v45
  %v193 = vunpack.c.l.b16 %v46
  %v194 = vunpack.c.h.b16 %v46
  %v195 = vunpack.c.l.b16 %v47
  %v196 = vunpack.c.h.b16 %v47
  %v197 = vunpack.c.l.b16 %v48
  %v198 = vunpack.c.h.b16 %v48
  %v199 = vunpack.c.l.b16 %v49
  %v200 = vunpack.c.h.b16 %v49
  %v201 = vunpack.c.l.b16 %v50
  %v202 = vunpack.c.h.b16 %v50
  %v203 = vunpack.c.l.b16 %v51
  %v204 = vunpack.c.h.b16 %v51
  %v205 = vunpack.c.l.b16 %v52
  %v206 = vunpack.c.h.b16 %v52
  %v207 = vunpack.c.l.b16 %v53
  %v208 = vunpack.c.h.b16 %v53
  %v209 = vunpack.c.l.b16 %v54
  %v210 = vunpack.c.h.b16 %v54
  %v211 = vunpack.c.l.b16 %v55
  %v212 = vunpack.c.h.b16 %v55
  %v213 = vunpack.c.l.b16 %v56
  %v214 = vunpack.c.h.b16 %v56
  %v215 = vunpack.c.l.b16 %v57
  %v216 = vunpack.c.h.b16 %v57
  %v217 = vunpack.c.l.b16 %v58
  %v218 = vunpack.c.h.b16 %v58
  %v219 = vunpack.c.l.b16 %v59
  %v220 = vunpack.c.h.b16 %v59
  %v221 = vunpack.c.l.b16 %v60
  %v222 = vunpack.c.h.b16 %v60
  %v223 = vunpack.c.l.b16 %v61
  %v224 = vunpack.c.h.b16 %v61
  %v225 = vunpack.c.l.b16 %v62
  %v226 = vunpack.c.h.b16 %v62
  %v227 = vunpack.c.l.b16 %v63
  %v228 = vunpack.c.h.b16 %v63
  %v229 = vunpack.c.l.b16 %v64
  %v230 = vunpack.c.h.b16 %v64
  %v231 = vunpack.c.l.b16 %v65
  %v232 = vunpack.c.h.b16 %v65
  %v233 = vunpack.c.l.b16 %v66
  %v234 = vunpack.c.h.b16 %v66
  %v235 = vunpack.c.l.b16 %v67
  %v236 = vunpack.c.h.b16 %v67
  %v237 = vunpack.c.l.b16 %v68
  %v238 = vunpack.c.h.b16 %v68
  %v239 = vunpack.c.l.b16 %v69
  %v240 = vunpack.c.h.b16 %v69
  %v241 = vunpack.c.l.b16 %v70
  %v242 = vunpack.c.h.b16 %v70
  %v243 = vunpack.c.l.b16 %v71
  %v244 = vunpack.c.h.b16 %v71
  %v245 = vunpack.c.l.b16 %v72
  %v246 = vunpack.c.h.b16 %v72
  %v247 = vunpack.c.l.b16 %v73
  %v248 = vunpack.c.h.b16 %v73
  %v249 = vunpack.c.l.b16 %v74
  %v250 = vunpack.c.h.b16 %v74
  %v251 = vunpack.c.l.b16 %v75
  %v252 = vunpack.c.h.b16 %v75
  %v253 = vunpack.c.l.b16 %v76
  %v254 = vunpack.c.h.b16 %v76
  %v255 = vunpack.c.l.b16 %v77
  %v256 = vunpack.c.h.b16 %v77
  %v257 = vunpack.c.l.b16 %v78
  %v258 = vunpack.c.h.b16 %v78
  %v259 = vunpack.c.l.b16 %v79
  %v260 = vunpack.c.h.b16 %v79
  %v261 = vunpack.c.l.b16 %v80
  %v262 = vunpack.c.h.b16 %v80
  %v263 = vunpack.c.l.b16 %v81
  %v264 = vunpack.c.h.b16 %v81
  %v265 = vunpack.c.l.b16 %v82
  %v266 = vunpack.c.h.b16 %v82
  %v267 = vunpack.c.l.b16 %v83
  %v268 = vunpack.c.h.b16 %v83
  %v269 = vunpack.c.l.b16 %v84
  %v270 = vunpack.c.h.b16 %v84
  %v271 = vunpack.c.l.b16 %v85
  %v272 = vunpack.c.h.b16 %v85
  %v273 = vunpack.c.l.b16 %v86
  %v274 = vunpack.c.h.b16 %v86
  %v275 = vunpack.c.l.b16 %v87
  %v276 = vunpack.c.h.b16 %v87
  %v277 = vunpack.c.l.b16 %v88
  %v278 = vunpack.c.h.b16 %v88
  %v279 = vunpack.c.l.b16 %v89
  %v280 = vunpack.c.h.b16 %v89
  %v281 = vunpack.c.l.b16 %v90
  %v282 = vunpack.c.h.b16 %v90
  %v283 = vunpack.c.l.b16 %v91
  %v284 = vunpack.c.h.b16 %v91
  %v285 = vunpack.c.l.b16 %v92
  %v286 = vunpack.c.h.b16 %v92
  %v287 = vunpack.c.l.b16 %v93
  %v288 = vunpack.c.h.b16 %v93
  %v289 = vunpack.c.l.b16 %v94
  %v290 = vunpack.c.h.b16 %v94
  %v291 = vunpack.c.l.b16 %v95
  %v292 = vunpack.c.h.b16 %v95
  %v293 = vunpack.c.l.b16 %v96
  %v294 = vunpack.c.h.b16 %v96
  %v295 = vunpack.c.l.b16 %v97
  %v296 = vunpack.c.h.b16 %v97
  %v297 = vunpack.c.l.b16 %v98
  %v298 = vunpack.c.h.b16 %v98
  %v299 = vunpack.c.l.b16 %v99
  %v300 = vunpack.c.h.b16 %v99
  %v301 = vunpack.c.l.b16 %v100
  %v302 = vunpack.c.h.b16 %v100
  %v303 = vunpack.c.l.b16 %v101
  %v304 = vunpack.c.h.b16 %v101
  %v305 = vunpack.c.l.b16 %v102
  %v306 = vunpack.c.h.b16 %v102
  %v307 = vunpack.c.l.b16 %v103
  %v308 = vunpack.c.h.b16 %v103
  %v309 = vunpack.c.l.b16 %v104
  %v310 = vunpack.c.h.b16 %v104
  %v311 = vunpack.c.l.b16 %v105
  %v312 = vunpack.c.h.b16 %v105
  %v313 = vunpack.c.l.b16 %v106
  %v314 = vunpack.c.h.b16 %v106
  %v315 = vunpack.c.l.b16 %v107
  %v316 = vunpack.c.h.b16 %v107
  %v317 = vunpack.c.l.b16 %v108
  %v318 = vunpack.c.h.b16 %v108
  %v319 = vpack.c.b16 %v199, %v191
  %v320 = vpack.c.b16 %v200, %v192
  %v321 = vpack.c.b16 %v201, %v193
  %v322 = vpack.c.b16 %v202, %v194
  %v323 = vpack.c.b16 %v203, %v195
  %v324 = vpack.c.b16 %v204, %v196
  %v325 = vpack.c.b16 %v205, %v197
  %v326 = vpack.c.b16 %v206, %v198
  %v327 = vpack.c.b16 %v215, %v207
  %v328 = vpack.c.b16 %v216, %v208
  %v329 = vpack.c.b16 %v217, %v209
  %v330 = vpack.c.b16 %v218, %v210
  %v331 = vpack.c.b16 %v219, %v211
  %v332 = vpack.c.b16 %v220, %v212
  %v333 = vpack.c.b16 %v221, %v213
  %v334 = vpack.c.b16 %v222, %v214
  %v335 = vpack.c.b16 %v231, %v223
  %v336 = vpack.c.b16 %v232, %v224
  %v337 = vpack.c.b16 %v233, %v225
  %v338 = vpack.c.b16 %v234, %v226
  %v339 = vpack.c.b16 %v235, %v227
  %v340 = vpack.c.b16 %v236, %v228
  %v341 = vpack.c.b16 %v237, %v229
  %v342 = vpack.c.b16 %v238, %v230
  %v343 = vpack.c.b16 %v247, %v239
  %v344 = vpack.c.b16 %v248, %v240
  %v345 = vpack.c.b16 %v249, %v241
  %v346 = vpack.c.b16 %v250, %v242
  %v347 = vpack.c.b16 %v251, %v243
  %v348 = vpack.c.b16 %v252, %v244
  %v349 = vpack.c.b16 %v253, %v245
  %v350 = vpack.c.b16 %v254, %v246
  %v351 = vpack.c.b16 %v263, %v255
  %v352 = vpack.c.b16 %v264, %v256
  %v353 = vpack.c.b16 %v265, %v257
  %v354 = vpack.c.b16 %v266, %v258
  %v355 = vpack.c.b16 %v267, %v259
  %v356 = vpack.c.b16 %v268, %v260
  %v357 = vpack.c.b16 %v269, %v261
  %v358 = vpack.c.b16 %v270, %v262
  %v359 = vpack.c.b16 %v279, %v271
  %v360 = vpack.c.b16 %v280, %v272
  %v361 = vpack.c.b16 %v281, %v273
  %v362 = vpack.c.b16 %v282, %v274
  %v363 = vpack.c.b16 %v283, %v275
  %v364 = vpack.c.b16 %v284, %v276
  %v365 = vpack.c.b16 %v285, %v277
  %v366 = vpack.c.b16 %v286, %v278
  %v367 = vpack.c.b16 %v295, %v287
  %v368 = vpack.c.b16 %v296, %v288
  %v369 = vpack.c.b16 %v297, %v289
  %v370 = vpack.c.b16 %v298, %v290
  %v371 = vpack.c.b16 %v299, %v291
  %v372 = vpack.c.b16 %v300, %v292
  %v373 = vpack.c.b16 %v301, %v293
  %v374 = vpack.c.b16 %v302, %v294
  %v375 = vpack.c.b16 %v311, %v303
  %v376 = vpack.c.b16 %v312, %v304
  %v377 = vpack.c.b16 %v313, %v305
  %v378 = vpack.c.b16 %v314, %v306
  %v379 = vpack.c.b16 %v315, %v307
  %v380 = vpack.c.b16 %v316, %v308
  %v381 = vpack.c.b16 %v317, %v309
  %v382 = vpack.c.b16 %v318, %v310
  %447 = vmatpush.bf16.msra.mxu0 %v375
  %448 = vmatpush.bf16.msra.mxu0 %v367
  %449 = vmatpush.bf16.msra.mxu0 %v359
  %450 = vmatpush.bf16.msra.mxu0 %v351
  %451 = vmatpush.bf16.msra.mxu0 %v343
  %452 = vmatpush.bf16.msra.mxu0 %v335
  %453 = vmatpush.bf16.msra.mxu0 %v327
  %454 = vmatpush.bf16.msra.mxu0 %v319
  %455 = vmatmul.bf16.gmra.mxu0 %v44
  %v456 = vpop.f32.mrf.mxu0
  %v457 = vadd.f32 %v111, %v456
  %v458 = vpop.f32.mrf.mxu0
  %459 = vdwg.mxu0
  %460 = vmatpush.bf16.msra.mxu0 %v376
  %461 = vmatpush.bf16.msra.mxu0 %v368
  %462 = vmatpush.bf16.msra.mxu0 %v360
  %463 = vmatpush.bf16.msra.mxu0 %v352
  %464 = vmatpush.bf16.msra.mxu0 %v344
  %465 = vmatpush.bf16.msra.mxu0 %v336
  %466 = vmatpush.bf16.msra.mxu0 %v328
  %467 = vmatpush.bf16.msra.mxu0 %v320
  %468 = vmatmul.bf16.gmra.mxu0 %v44
  %v469 = vpop.f32.mrf.mxu0
  %v470 = vadd.f32 %v112, %v469
  %v471 = vpop.f32.mrf.mxu0
  %472 = vdwg.mxu0
  %473 = vmatpush.bf16.msra.mxu0 %v377
  %474 = vmatpush.bf16.msra.mxu0 %v369
  %475 = vmatpush.bf16.msra.mxu0 %v361
  %476 = vmatpush.bf16.msra.mxu0 %v353
  %477 = vmatpush.bf16.msra.mxu0 %v345
  %478 = vmatpush.bf16.msra.mxu0 %v337
  %479 = vmatpush.bf16.msra.mxu0 %v329
  %480 = vmatpush.bf16.msra.mxu0 %v321
  %481 = vmatmul.bf16.gmra.mxu0 %v44
  %v482 = vpop.f32.mrf.mxu0
  %v483 = vadd.f32 %v113, %v482
  %v484 = vpop.f32.mrf.mxu0
  %485 = vdwg.mxu0
  %486 = vmatpush.bf16.msra.mxu0 %v378
  %487 = vmatpush.bf16.msra.mxu0 %v370
  %488 = vmatpush.bf16.msra.mxu0 %v362
  %489 = vmatpush.bf16.msra.mxu0 %v354
  %490 = vmatpush.bf16.msra.mxu0 %v346
  %491 = vmatpush.bf16.msra.mxu0 %v338
  %492 = vmatpush.bf16.msra.mxu0 %v330
  %493 = vmatpush.bf16.msra.mxu0 %v322
  %494 = vmatmul.bf16.gmra.mxu0 %v44
  %v495 = vpop.f32.mrf.mxu0
  %v496 = vadd.f32 %v114, %v495
  %v497 = vpop.f32.mrf.mxu0
  %498 = vdwg.mxu0
  %499 = vmatpush.bf16.msra.mxu0 %v379
  %500 = vmatpush.bf16.msra.mxu0 %v371
  %501 = vmatpush.bf16.msra.mxu0 %v363
  %502 = vmatpush.bf16.msra.mxu0 %v355
  %503 = vmatpush.bf16.msra.mxu0 %v347
  %504 = vmatpush.bf16.msra.mxu0 %v339
  %505 = vmatpush.bf16.msra.mxu0 %v331
  %506 = vmatpush.bf16.msra.mxu0 %v323
  %507 = vmatmul.bf16.gmra.mxu0 %v44
  %v508 = vpop.f32.mrf.mxu0
  %v509 = vadd.f32 %v115, %v508
  %v510 = vpop.f32.mrf.mxu0
  %511 = vdwg.mxu0
  %512 = vmatpush.bf16.msra.mxu0 %v380
  %513 = vmatpush.bf16.msra.mxu0 %v372
  %514 = vmatpush.bf16.msra.mxu0 %v364
  %515 = vmatpush.bf16.msra.mxu0 %v356
  %516 = vmatpush.bf16.msra.mxu0 %v348
  %517 = vmatpush.bf16.msra.mxu0 %v340
  %518 = vmatpush.bf16.msra.mxu0 %v332
  %519 = vmatpush.bf16.msra.mxu0 %v324
  %520 = vmatmul.bf16.gmra.mxu0 %v44
  %v521 = vpop.f32.mrf.mxu0
  %v522 = vadd.f32 %v116, %v521
  %v523 = vpop.f32.mrf.mxu0
  %524 = vdwg.mxu0
  %525 = vmatpush.bf16.msra.mxu0 %v381
  %526 = vmatpush.bf16.msra.mxu0 %v373
  %527 = vmatpush.bf16.msra.mxu0 %v365
  %528 = vmatpush.bf16.msra.mxu0 %v357
  %529 = vmatpush.bf16.msra.mxu0 %v349
  %530 = vmatpush.bf16.msra.mxu0 %v341
  %531 = vmatpush.bf16.msra.mxu0 %v333
  %532 = vmatpush.bf16.msra.mxu0 %v325
  %533 = vmatmul.bf16.gmra.mxu0 %v44
  %v534 = vpop.f32.mrf.mxu0
  %v535 = vadd.f32 %v117, %v534
  %v536 = vpop.f32.mrf.mxu0
  %537 = vdwg.mxu0
  %538 = vmatpush.bf16.msra.mxu0 %v382
  %539 = vmatpush.bf16.msra.mxu0 %v374
  %540 = vmatpush.bf16.msra.mxu0 %v366
  %541 = vmatpush.bf16.msra.mxu0 %v358
  %542 = vmatpush.bf16.msra.mxu0 %v350
  %543 = vmatpush.bf16.msra.mxu0 %v342
  %544 = vmatpush.bf16.msra.mxu0 %v334
  %545 = vmatpush.bf16.msra.mxu0 %v326
  %546 = vmatmul.bf16.gmra.mxu0 %v44
  %v547 = vpop.f32.mrf.mxu0
  %v548 = vadd.f32 %v118, %v547
  %v549 = vpop.f32.mrf.mxu0
  %550 = vdwg.mxu0
  %v551 = vmax.f32 %v457, 0.0
  %v552 = vmax.f32 %v470, 0.0
  %v553 = vmax.f32 %v483, 0.0
  %v554 = vmax.f32 %v496, 0.0
  %v555 = vmax.f32 %v509, 0.0
  %v556 = vmax.f32 %v522, 0.0
  %v557 = vmax.f32 %v535, 0.0
  %v558 = vmax.f32 %v548, 0.0
  %v559 = vpack.c.bf16 %v551, %v551
  %v560 = vpack.c.bf16 %v552, %v552
  %v561 = vpack.c.bf16 %v553, %v553
  %v562 = vpack.c.bf16 %v554, %v554
  %v563 = vpack.c.bf16 %v555, %v555
  %v564 = vpack.c.bf16 %v556, %v556
  %v565 = vpack.c.bf16 %v557, %v557
  %v566 = vpack.c.bf16 %v558, %v558
  %v567 = vld [vmem:[%s3] sm:$0xff]
  %v568 = vld [vmem:[%s3 + $0x8] sm:$0xff]
  %v569 = vld [vmem:[%s3 + $0x10] sm:$0xff]
  %v570 = vld [vmem:[%s3 + $0x18] sm:$0xff]
  %v571 = vld [vmem:[%s3 + $0x20] sm:$0xff]
  %v572 = vld [vmem:[%s3 + $0x28] sm:$0xff]
  %v573 = vld [vmem:[%s3 + $0x30] sm:$0xff]
  %v574 = vld [vmem:[%s3 + $0x38] sm:$0xff]
  %v575 = vld [vmem:[%s3 + $0x40] sm:$0xff]
  %v576 = vld [vmem:[%s3 + $0x48] sm:$0xff]
  %v577 = vld [vmem:[%s3 + $0x50] sm:$0xff]
  %v578 = vld [vmem:[%s3 + $0x58] sm:$0xff]
  %v579 = vld [vmem:[%s3 + $0x60] sm:$0xff]
  %v580 = vld [vmem:[%s3 + $0x68] sm:$0xff]
  %v581 = vld [vmem:[%s3 + $0x70] sm:$0xff]
  %v582 = vld [vmem:[%s3 + $0x78] sm:$0xff]
  %v583 = vld [vmem:[%s3 + $0x80] sm:$0xff]
  %v584 = vld [vmem:[%s3 + $0x88] sm:$0xff]
  %v585 = vld [vmem:[%s3 + $0x90] sm:$0xff]
  %v586 = vld [vmem:[%s3 + $0x98] sm:$0xff]
  %v587 = vld [vmem:[%s3 + $0xa0] sm:$0xff]
  %v588 = vld [vmem:[%s3 + $0xa8] sm:$0xff]
  %v589 = vld [vmem:[%s3 + $0xb0] sm:$0xff]
  %v590 = vld [vmem:[%s3 + $0xb8] sm:$0xff]
  %v591 = vld [vmem:[%s3 + $0xc0] sm:$0xff]
  %v592 = vld [vmem:[%s3 + $0xc8] sm:$0xff]
  %v593 = vld [vmem:[%s3 + $0xd0] sm:$0xff]
  %v594 = vld [vmem:[%s3 + $0xd8] sm:$0xff]
  %v595 = vld [vmem:[%s3 + $0xe0] sm:$0xff]
  %v596 = vld [vmem:[%s3 + $0xe8] sm:$0xff]
  %v597 = vld [vmem:[%s3 + $0xf0] sm:$0xff]
  %v598 = vld [vmem:[%s3 + $0xf8] sm:$0xff]
  %v599 = vld [vmem:[%s3 + $0x100] sm:$0xff]
  %v600 = vld [vmem:[%s3 + $0x108] sm:$0xff]
  %v601 = vld [vmem:[%s3 + $0x110] sm:$0xff]
  %v602 = vld [vmem:[%s3 + $0x118] sm:$0xff]
  %v603 = vld [vmem:[%s3 + $0x120] sm:$0xff]
  %v604 = vld [vmem:[%s3 + $0x128] sm:$0xff]
  %v605 = vld [vmem:[%s3 + $0x130] sm:$0xff]
  %v606 = vld [vmem:[%s3 + $0x138] sm:$0xff]
  %v607 = vld [vmem:[%s3 + $0x140] sm:$0xff]
  %v608 = vld [vmem:[%s3 + $0x148] sm:$0xff]
  %v609 = vld [vmem:[%s3 + $0x150] sm:$0xff]
  %v610 = vld [vmem:[%s3 + $0x158] sm:$0xff]
  %v611 = vld [vmem:[%s3 + $0x160] sm:$0xff]
  %v612 = vld [vmem:[%s3 + $0x168] sm:$0xff]
  %v613 = vld [vmem:[%s3 + $0x170] sm:$0xff]
  %v614 = vld [vmem:[%s3 + $0x178] sm:$0xff]
  %v615 = vld [vmem:[%s3 + $0x180] sm:$0xff]
  %v616 = vld [vmem:[%s3 + $0x188] sm:$0xff]
  %v617 = vld [vmem:[%s3 + $0x190] sm:$0xff]
  %v618 = vld [vmem:[%s3 + $0x198] sm:$0xff]
  %v619 = vld [vmem:[%s3 + $0x1a0] sm:$0xff]
  %v620 = vld [vmem:[%s3 + $0x1a8] sm:$0xff]
  %v621 = vld [vmem:[%s3 + $0x1b0] sm:$0xff]
  %v622 = vld [vmem:[%s3 + $0x1b8] sm:$0xff]
  %v623 = vld [vmem:[%s3 + $0x1c0] sm:$0xff]
  %v624 = vld [vmem:[%s3 + $0x1c8] sm:$0xff]
  %v625 = vld [vmem:[%s3 + $0x1d0] sm:$0xff]
  %v626 = vld [vmem:[%s3 + $0x1d8] sm:$0xff]
  %v627 = vld [vmem:[%s3 + $0x1e0] sm:$0xff]
  %v628 = vld [vmem:[%s3 + $0x1e8] sm:$0xff]
  %v629 = vld [vmem:[%s3 + $0x1f0] sm:$0xff]
  %v630 = vld [vmem:[%s3 + $0x1f8] sm:$0xff]
  %v631 = vld [vmem:[%s3 + $0x200] sm:$0xff]
  %v632 = vld [vmem:[%s3 + $0x208] sm:$0xff]
  %v633 = vld [vmem:[%s3 + $0x210] sm:$0xff]
  %v634 = vld [vmem:[%s3 + $0x218] sm:$0xff]
  %v635 = vld [vmem:[%s3 + $0x220] sm:$0xff]
  %v636 = vld [vmem:[%s3 + $0x228] sm:$0xff]
  %v637 = vld [vmem:[%s3 + $0x230] sm:$0xff]
  %v638 = vld [vmem:[%s3 + $0x238] sm:$0xff]
  %v639 = vld [vmem:[%s3 + $0x240] sm:$0xff]
  %v640 = vld [vmem:[%s3 + $0x248] sm:$0xff]
  %v641 = vld [vmem:[%s3 + $0x250] sm:$0xff]
  %v642 = vld [vmem:[%s3 + $0x258] sm:$0xff]
  %v643 = vld [vmem:[%s3 + $0x260] sm:$0xff]
  %v644 = vld [vmem:[%s3 + $0x268] sm:$0xff]
  %v645 = vld [vmem:[%s3 + $0x270] sm:$0xff]
  %v646 = vld [vmem:[%s3 + $0x278] sm:$0xff]
  %v647 = vld [vmem:[%s3 + $0x280] sm:$0xff]
  %v648 = vld [vmem:[%s3 + $0x288] sm:$0xff]
  %v649 = vld [vmem:[%s3 + $0x290] sm:$0xff]
  %v650 = vld [vmem:[%s3 + $0x298] sm:$0xff]
  %v651 = vld [vmem:[%s3 + $0x2a0] sm:$0xff]
  %v652 = vld [vmem:[%s3 + $0x2a8] sm:$0xff]
  %v653 = vld [vmem:[%s3 + $0x2b0] sm:$0xff]
  %v654 = vld [vmem:[%s3 + $0x2b8] sm:$0xff]
  %v655 = vld [vmem:[%s3 + $0x2c0] sm:$0xff]
  %v656 = vld [vmem:[%s3 + $0x2c8] sm:$0xff]
  %v657 = vld [vmem:[%s3 + $0x2d0] sm:$0xff]
  %v658 = vld [vmem:[%s3 + $0x2d8] sm:$0xff]
  %v659 = vld [vmem:[%s3 + $0x2e0] sm:$0xff]
  %v660 = vld [vmem:[%s3 + $0x2e8] sm:$0xff]
  %v661 = vld [vmem:[%s3 + $0x2f0] sm:$0xff]
  %v662 = vld [vmem:[%s3 + $0x2f8] sm:$0xff]
  %v663 = vld [vmem:[%s3 + $0x300] sm:$0xff]
  %v664 = vld [vmem:[%s3 + $0x308] sm:$0xff]
  %v665 = vld [vmem:[%s3 + $0x310] sm:$0xff]
  %v666 = vld [vmem:[%s3 + $0x318] sm:$0xff]
  %v667 = vld [vmem:[%s3 + $0x320] sm:$0xff]
  %v668 = vld [vmem:[%s3 + $0x328] sm:$0xff]
  %v669 = vld [vmem:[%s3 + $0x330] sm:$0xff]
  %v670 = vld [vmem:[%s3 + $0x338] sm:$0xff]
  %v671 = vld [vmem:[%s3 + $0x340] sm:$0xff]
  %v672 = vld [vmem:[%s3 + $0x348] sm:$0xff]
  %v673 = vld [vmem:[%s3 + $0x350] sm:$0xff]
  %v674 = vld [vmem:[%s3 + $0x358] sm:$0xff]
  %v675 = vld [vmem:[%s3 + $0x360] sm:$0xff]
  %v676 = vld [vmem:[%s3 + $0x368] sm:$0xff]
  %v677 = vld [vmem:[%s3 + $0x370] sm:$0xff]
  %v678 = vld [vmem:[%s3 + $0x378] sm:$0xff]
  %v679 = vld [vmem:[%s3 + $0x380] sm:$0xff]
  %v680 = vld [vmem:[%s3 + $0x388] sm:$0xff]
  %v681 = vld [vmem:[%s3 + $0x390] sm:$0xff]
  %v682 = vld [vmem:[%s3 + $0x398] sm:$0xff]
  %v683 = vld [vmem:[%s3 + $0x3a0] sm:$0xff]
  %v684 = vld [vmem:[%s3 + $0x3a8] sm:$0xff]
  %v685 = vld [vmem:[%s3 + $0x3b0] sm:$0xff]
  %v686 = vld [vmem:[%s3 + $0x3b8] sm:$0xff]
  %v687 = vld [vmem:[%s3 + $0x3c0] sm:$0xff]
  %v688 = vld [vmem:[%s3 + $0x3c8] sm:$0xff]
  %v689 = vld [vmem:[%s3 + $0x3d0] sm:$0xff]
  %v690 = vld [vmem:[%s3 + $0x3d8] sm:$0xff]
  %v691 = vld [vmem:[%s3 + $0x3e0] sm:$0xff]
  %v692 = vld [vmem:[%s3 + $0x3e8] sm:$0xff]
  %v693 = vld [vmem:[%s3 + $0x3f0] sm:$0xff]
  %v694 = vld [vmem:[%s3 + $0x3f8] sm:$0xff]
  %v695 = vld [vmem:[%s3 + $0x400] sm:$0xff]
  %v696 = vld [vmem:[%s3 + $0x408] sm:$0xff]
  %v697 = vld [vmem:[%s3 + $0x410] sm:$0xff]
  %v698 = vld [vmem:[%s3 + $0x418] sm:$0xff]
  %v699 = vld [vmem:[%s3 + $0x420] sm:$0xff]
  %v700 = vld [vmem:[%s3 + $0x428] sm:$0xff]
  %v701 = vld [vmem:[%s3 + $0x430] sm:$0xff]
  %v702 = vld [vmem:[%s3 + $0x438] sm:$0xff]
  %v703 = vld [vmem:[%s3 + $0x440] sm:$0xff]
  %v704 = vld [vmem:[%s3 + $0x448] sm:$0xff]
  %v705 = vld [vmem:[%s3 + $0x450] sm:$0xff]
  %v706 = vld [vmem:[%s3 + $0x458] sm:$0xff]
  %v707 = vld [vmem:[%s3 + $0x460] sm:$0xff]
  %v708 = vld [vmem:[%s3 + $0x468] sm:$0xff]
  %v709 = vld [vmem:[%s3 + $0x470] sm:$0xff]
  %v710 = vld [vmem:[%s3 + $0x478] sm:$0xff]
  %v711 = vld [vmem:[%s3 + $0x480] sm:$0xff]
  %v712 = vld [vmem:[%s3 + $0x488] sm:$0xff]
  %v713 = vld [vmem:[%s3 + $0x490] sm:$0xff]
  %v714 = vld [vmem:[%s3 + $0x498] sm:$0xff]
  %v715 = vld [vmem:[%s3 + $0x4a0] sm:$0xff]
  %v716 = vld [vmem:[%s3 + $0x4a8] sm:$0xff]
  %v717 = vld [vmem:[%s3 + $0x4b0] sm:$0xff]
  %v718 = vld [vmem:[%s3 + $0x4b8] sm:$0xff]
  %v719 = vld [vmem:[%s3 + $0x4c0] sm:$0xff]
  %v720 = vld [vmem:[%s3 + $0x4c8] sm:$0xff]
  %v721 = vld [vmem:[%s3 + $0x4d0] sm:$0xff]
  %v722 = vld [vmem:[%s3 + $0x4d8] sm:$0xff]
  %v723 = vld [vmem:[%s3 + $0x4e0] sm:$0xff]
  %v724 = vld [vmem:[%s3 + $0x4e8] sm:$0xff]
  %v725 = vld [vmem:[%s3 + $0x4f0] sm:$0xff]
  %v726 = vld [vmem:[%s3 + $0x4f8] sm:$0xff]
  %v727 = vld [vmem:[%s3 + $0x500] sm:$0xff]
  %v728 = vld [vmem:[%s3 + $0x508] sm:$0xff]
  %v729 = vld [vmem:[%s3 + $0x510] sm:$0xff]
  %v730 = vld [vmem:[%s3 + $0x518] sm:$0xff]
  %v731 = vld [vmem:[%s3 + $0x520] sm:$0xff]
  %v732 = vld [vmem:[%s3 + $0x528] sm:$0xff]
  %v733 = vld [vmem:[%s3 + $0x530] sm:$0xff]
  %v734 = vld [vmem:[%s3 + $0x538] sm:$0xff]
  %v735 = vld [vmem:[%s3 + $0x540] sm:$0xff]
  %v736 = vld [vmem:[%s3 + $0x548] sm:$0xff]
  %v737 = vld [vmem:[%s3 + $0x550] sm:$0xff]
  %v738 = vld [vmem:[%s3 + $0x558] sm:$0xff]
  %v739 = vld [vmem:[%s3 + $0x560] sm:$0xff]
  %v740 = vld [vmem:[%s3 + $0x568] sm:$0xff]
  %v741 = vld [vmem:[%s3 + $0x570] sm:$0xff]
  %v742 = vld [vmem:[%s3 + $0x578] sm:$0xff]
  %v743 = vld [vmem:[%s3 + $0x580] sm:$0xff]
  %v744 = vld [vmem:[%s3 + $0x588] sm:$0xff]
  %v745 = vld [vmem:[%s3 + $0x590] sm:$0xff]
  %v746 = vld [vmem:[%s3 + $0x598] sm:$0xff]
  %v747 = vld [vmem:[%s3 + $0x5a0] sm:$0xff]
  %v748 = vld [vmem:[%s3 + $0x5a8] sm:$0xff]
  %v749 = vld [vmem:[%s3 + $0x5b0] sm:$0xff]
  %v750 = vld [vmem:[%s3 + $0x5b8] sm:$0xff]
  %v751 = vld [vmem:[%s3 + $0x5c0] sm:$0xff]
  %v752 = vld [vmem:[%s3 + $0x5c8] sm:$0xff]
  %v753 = vld [vmem:[%s3 + $0x5d0] sm:$0xff]
  %v754 = vld [vmem:[%s3 + $0x5d8] sm:$0xff]
  %v755 = vld [vmem:[%s3 + $0x5e0] sm:$0xff]
  %v756 = vld [vmem:[%s3 + $0x5e8] sm:$0xff]
  %v757 = vld [vmem:[%s3 + $0x5f0] sm:$0xff]
  %v758 = vld [vmem:[%s3 + $0x5f8] sm:$0xff]
  %v759 = vld [vmem:[%s3 + $0x600] sm:$0xff]
  %v760 = vld [vmem:[%s3 + $0x608] sm:$0xff]
  %v761 = vld [vmem:[%s3 + $0x610] sm:$0xff]
  %v762 = vld [vmem:[%s3 + $0x618] sm:$0xff]
  %v763 = vld [vmem:[%s3 + $0x620] sm:$0xff]
  %v764 = vld [vmem:[%s3 + $0x628] sm:$0xff]
  %v765 = vld [vmem:[%s3 + $0x630] sm:$0xff]
  %v766 = vld [vmem:[%s3 + $0x638] sm:$0xff]
  %v767 = vld [vmem:[%s3 + $0x640] sm:$0xff]
  %v768 = vld [vmem:[%s3 + $0x648] sm:$0xff]
  %v769 = vld [vmem:[%s3 + $0x650] sm:$0xff]
  %v770 = vld [vmem:[%s3 + $0x658] sm:$0xff]
  %v771 = vld [vmem:[%s3 + $0x660] sm:$0xff]
  %v772 = vld [vmem:[%s3 + $0x668] sm:$0xff]
  %v773 = vld [vmem:[%s3 + $0x670] sm:$0xff]
  %v774 = vld [vmem:[%s3 + $0x678] sm:$0xff]
  %v775 = vld [vmem:[%s3 + $0x680] sm:$0xff]
  %v776 = vld [vmem:[%s3 + $0x688] sm:$0xff]
  %v777 = vld [vmem:[%s3 + $0x690] sm:$0xff]
  %v778 = vld [vmem:[%s3 + $0x698] sm:$0xff]
  %v779 = vld [vmem:[%s3 + $0x6a0] sm:$0xff]
  %v780 = vld [vmem:[%s3 + $0x6a8] sm:$0xff]
  %v781 = vld [vmem:[%s3 + $0x6b0] sm:$0xff]
  %v782 = vld [vmem:[%s3 + $0x6b8] sm:$0xff]
  %v783 = vld [vmem:[%s3 + $0x6c0] sm:$0xff]
  %v784 = vld [vmem:[%s3 + $0x6c8] sm:$0xff]
  %v785 = vld [vmem:[%s3 + $0x6d0] sm:$0xff]
  %v786 = vld [vmem:[%s3 + $0x6d8] sm:$0xff]
  %v787 = vld [vmem:[%s3 + $0x6e0] sm:$0xff]
  %v788 = vld [vmem:[%s3 + $0x6e8] sm:$0xff]
  %v789 = vld [vmem:[%s3 + $0x6f0] sm:$0xff]
  %v790 = vld [vmem:[%s3 + $0x6f8] sm:$0xff]
  %v791 = vld [vmem:[%s3 + $0x700] sm:$0xff]
  %v792 = vld [vmem:[%s3 + $0x708] sm:$0xff]
  %v793 = vld [vmem:[%s3 + $0x710] sm:$0xff]
  %v794 = vld [vmem:[%s3 + $0x718] sm:$0xff]
  %v795 = vld [vmem:[%s3 + $0x720] sm:$0xff]
  %v796 = vld [vmem:[%s3 + $0x728] sm:$0xff]
  %v797 = vld [vmem:[%s3 + $0x730] sm:$0xff]
  %v798 = vld [vmem:[%s3 + $0x738] sm:$0xff]
  %v799 = vld [vmem:[%s3 + $0x740] sm:$0xff]
  %v800 = vld [vmem:[%s3 + $0x748] sm:$0xff]
  %v801 = vld [vmem:[%s3 + $0x750] sm:$0xff]
  %v802 = vld [vmem:[%s3 + $0x758] sm:$0xff]
  %v803 = vld [vmem:[%s3 + $0x760] sm:$0xff]
  %v804 = vld [vmem:[%s3 + $0x768] sm:$0xff]
  %v805 = vld [vmem:[%s3 + $0x770] sm:$0xff]
  %v806 = vld [vmem:[%s3 + $0x778] sm:$0xff]
  %v807 = vld [vmem:[%s3 + $0x780] sm:$0xff]
  %v808 = vld [vmem:[%s3 + $0x788] sm:$0xff]
  %v809 = vld [vmem:[%s3 + $0x790] sm:$0xff]
  %v810 = vld [vmem:[%s3 + $0x798] sm:$0xff]
  %v811 = vld [vmem:[%s3 + $0x7a0] sm:$0xff]
  %v812 = vld [vmem:[%s3 + $0x7a8] sm:$0xff]
  %v813 = vld [vmem:[%s3 + $0x7b0] sm:$0xff]
  %v814 = vld [vmem:[%s3 + $0x7b8] sm:$0xff]
  %v815 = vld [vmem:[%s3 + $0x7c0] sm:$0xff]
  %v816 = vld [vmem:[%s3 + $0x7c8] sm:$0xff]
  %v817 = vld [vmem:[%s3 + $0x7d0] sm:$0xff]
  %v818 = vld [vmem:[%s3 + $0x7d8] sm:$0xff]
  %v819 = vld [vmem:[%s3 + $0x7e0] sm:$0xff]
  %v820 = vld [vmem:[%s3 + $0x7e8] sm:$0xff]
  %v821 = vld [vmem:[%s3 + $0x7f0] sm:$0xff]
  %v822 = vld [vmem:[%s3 + $0x7f8] sm:$0xff]
  %v823 = vld [vmem:[%s4] sm:$0xf]
  %v825 = vperm.slane %v823, 0
  %v826 = vperm.slane %v823, 1
  %v827 = vperm.slane %v823, 2
  %v828 = vperm.slane %v823, 3
  %v1089 = vunpack.c.l.b16 %v567
  %v1090 = vunpack.c.h.b16 %v567
  %v1091 = vunpack.c.l.b16 %v568
  %v1092 = vunpack.c.h.b16 %v568
  %v1093 = vunpack.c.l.b16 %v569
  %v1094 = vunpack.c.h.b16 %v569
  %v1095 = vunpack.c.l.b16 %v570
  %v1096 = vunpack.c.h.b16 %v570
  %v1097 = vunpack.c.l.b16 %v571
  %v1098 = vunpack.c.h.b16 %v571
  %v1099 = vunpack.c.l.b16 %v572
  %v1100 = vunpack.c.h.b16 %v572
  %v1101 = vunpack.c.l.b16 %v573
  %v1102 = vunpack.c.h.b16 %v573
  %v1103 = vunpack.c.l.b16 %v574
  %v1104 = vunpack.c.h.b16 %v574
  %v1105 = vunpack.c.l.b16 %v575
  %v1106 = vunpack.c.h.b16 %v575
  %v1107 = vunpack.c.l.b16 %v576
  %v1108 = vunpack.c.h.b16 %v576
  %v1109 = vunpack.c.l.b16 %v577
  %v1110 = vunpack.c.h.b16 %v577
  %v1111 = vunpack.c.l.b16 %v578
  %v1112 = vunpack.c.h.b16 %v578
  %v1113 = vunpack.c.l.b16 %v579
  %v1114 = vunpack.c.h.b16 %v579
  %v1115 = vunpack.c.l.b16 %v580
  %v1116 = vunpack.c.h.b16 %v580
  %v1117 = vunpack.c.l.b16 %v581
  %v1118 = vunpack.c.h.b16 %v581
  %v1119 = vunpack.c.l.b16 %v582
  %v1120 = vunpack.c.h.b16 %v582
  %v1121 = vunpack.c.l.b16 %v583
  %v1122 = vunpack.c.h.b16 %v583
  %v1123 = vunpack.c.l.b16 %v584
  %v1124 = vunpack.c.h.b16 %v584
  %v1125 = vunpack.c.l.b16 %v585
  %v1126 = vunpack.c.h.b16 %v585
  %v1127 = vunpack.c.l.b16 %v586
  %v1128 = vunpack.c.h.b16 %v586
  %v1129 = vunpack.c.l.b16 %v587
  %v1130 = vunpack.c.h.b16 %v587
  %v1131 = vunpack.c.l.b16 %v588
  %v1132 = vunpack.c.h.b16 %v588
  %v1133 = vunpack.c.l.b16 %v589
  %v1134 = vunpack.c.h.b16 %v589
  %v1135 = vunpack.c.l.b16 %v590
  %v1136 = vunpack.c.h.b16 %v590
  %v1137 = vunpack.c.l.b16 %v591
  %v1138 = vunpack.c.h.b16 %v591
  %v1139 = vunpack.c.l.b16 %v592
  %v1140 = vunpack.c.h.b16 %v592
  %v1141 = vunpack.c.l.b16 %v593
  %v1142 = vunpack.c.h.b16 %v593
  %v1143 = vunpack.c.l.b16 %v594
  %v1144 = vunpack.c.h.b16 %v594
  %v1145 = vunpack.c.l.b16 %v595
  %v1146 = vunpack.c.h.b16 %v595
  %v1147 = vunpack.c.l.b16 %v596
  %v1148 = vunpack.c.h.b16 %v596
  %v1149 = vunpack.c.l.b16 %v597
  %v1150 = vunpack.c.h.b16 %v597
  %v1151 = vunpack.c.l.b16 %v598
  %v1152 = vunpack.c.h.b16 %v598
  %v1153 = vunpack.c.l.b16 %v599
  %v1154 = vunpack.c.h.b16 %v599
  %v1155 = vunpack.c.l.b16 %v600
  %v1156 = vunpack.c.h.b16 %v600
  %v1157 = vunpack.c.l.b16 %v601
  %v1158 = vunpack.c.h.b16 %v601
  %v1159 = vunpack.c.l.b16 %v602
  %v1160 = vunpack.c.h.b16 %v602
  %v1161 = vunpack.c.l.b16 %v603
  %v1162 = vunpack.c.h.b16 %v603
  %v1163 = vunpack.c.l.b16 %v604
  %v1164 = vunpack.c.h.b16 %v604
  %v1165 = vunpack.c.l.b16 %v605
  %v1166 = vunpack.c.h.b16 %v605
  %v1167 = vunpack.c.l.b16 %v606
  %v1168 = vunpack.c.h.b16 %v606
  %v1169 = vunpack.c.l.b16 %v607
  %v1170 = vunpack.c.h.b16 %v607
  %v1171 = vunpack.c.l.b16 %v608
  %v1172 = vunpack.c.h.b16 %v608
  %v1173 = vunpack.c.l.b16 %v609
  %v1174 = vunpack.c.h.b16 %v609
  %v1175 = vunpack.c.l.b16 %v610
  %v1176 = vunpack.c.h.b16 %v610
  %v1177 = vunpack.c.l.b16 %v611
  %v1178 = vunpack.c.h.b16 %v611
  %v1179 = vunpack.c.l.b16 %v612
  %v1180 = vunpack.c.h.b16 %v612
  %v1181 = vunpack.c.l.b16 %v613
  %v1182 = vunpack.c.h.b16 %v613
  %v1183 = vunpack.c.l.b16 %v614
  %v1184 = vunpack.c.h.b16 %v614
  %v1185 = vunpack.c.l.b16 %v615
  %v1186 = vunpack.c.h.b16 %v615
  %v1187 = vunpack.c.l.b16 %v616
  %v1188 = vunpack.c.h.b16 %v616
  %v1189 = vunpack.c.l.b16 %v617
  %v1190 = vunpack.c.h.b16 %v617
  %v1191 = vunpack.c.l.b16 %v618
  %v1192 = vunpack.c.h.b16 %v618
  %v1193 = vunpack.c.l.b16 %v619
  %v1194 = vunpack.c.h.b16 %v619
  %v1195 = vunpack.c.l.b16 %v620
  %v1196 = vunpack.c.h.b16 %v620
  %v1197 = vunpack.c.l.b16 %v621
  %v1198 = vunpack.c.h.b16 %v621
  %v1199 = vunpack.c.l.b16 %v622
  %v1200 = vunpack.c.h.b16 %v622
  %v1201 = vunpack.c.l.b16 %v623
  %v1202 = vunpack.c.h.b16 %v623
  %v1203 = vunpack.c.l.b16 %v624
  %v1204 = vunpack.c.h.b16 %v624
  %v1205 = vunpack.c.l.b16 %v625
  %v1206 = vunpack.c.h.b16 %v625
  %v1207 = vunpack.c.l.b16 %v626
  %v1208 = vunpack.c.h.b16 %v626
  %v1209 = vunpack.c.l.b16 %v627
  %v1210 = vunpack.c.h.b16 %v627
  %v1211 = vunpack.c.l.b16 %v628
  %v1212 = vunpack.c.h.b16 %v628
  %v1213 = vunpack.c.l.b16 %v629
  %v1214 = vunpack.c.h.b16 %v629
  %v1215 = vunpack.c.l.b16 %v630
  %v1216 = vunpack.c.h.b16 %v630
  %v1217 = vunpack.c.l.b16 %v631
  %v1218 = vunpack.c.h.b16 %v631
  %v1219 = vunpack.c.l.b16 %v632
  %v1220 = vunpack.c.h.b16 %v632
  %v1221 = vunpack.c.l.b16 %v633
  %v1222 = vunpack.c.h.b16 %v633
  %v1223 = vunpack.c.l.b16 %v634
  %v1224 = vunpack.c.h.b16 %v634
  %v1225 = vunpack.c.l.b16 %v635
  %v1226 = vunpack.c.h.b16 %v635
  %v1227 = vunpack.c.l.b16 %v636
  %v1228 = vunpack.c.h.b16 %v636
  %v1229 = vunpack.c.l.b16 %v637
  %v1230 = vunpack.c.h.b16 %v637
  %v1231 = vunpack.c.l.b16 %v638
  %v1232 = vunpack.c.h.b16 %v638
  %v1233 = vunpack.c.l.b16 %v639
  %v1234 = vunpack.c.h.b16 %v639
  %v1235 = vunpack.c.l.b16 %v640
  %v1236 = vunpack.c.h.b16 %v640
  %v1237 = vunpack.c.l.b16 %v641
  %v1238 = vunpack.c.h.b16 %v641
  %v1239 = vunpack.c.l.b16 %v642
  %v1240 = vunpack.c.h.b16 %v642
  %v1241 = vunpack.c.l.b16 %v643
  %v1242 = vunpack.c.h.b16 %v643
  %v1243 = vunpack.c.l.b16 %v644
  %v1244 = vunpack.c.h.b16 %v644
  %v1245 = vunpack.c.l.b16 %v645
  %v1246 = vunpack.c.h.b16 %v645
  %v1247 = vunpack.c.l.b16 %v646
  %v1248 = vunpack.c.h.b16 %v646
  %v1249 = vunpack.c.l.b16 %v647
  %v1250 = vunpack.c.h.b16 %v647
  %v1251 = vunpack.c.l.b16 %v648
  %v1252 = vunpack.c.h.b16 %v648
  %v1253 = vunpack.c.l.b16 %v649
  %v1254 = vunpack.c.h.b16 %v649
  %v1255 = vunpack.c.l.b16 %v650
  %v1256 = vunpack.c.h.b16 %v650
  %v1257 = vunpack.c.l.b16 %v651
  %v1258 = vunpack.c.h.b16 %v651
  %v1259 = vunpack.c.l.b16 %v652
  %v1260 = vunpack.c.h.b16 %v652
  %v1261 = vunpack.c.l.b16 %v653
  %v1262 = vunpack.c.h.b16 %v653
  %v1263 = vunpack.c.l.b16 %v654
  %v1264 = vunpack.c.h.b16 %v654
  %v1265 = vunpack.c.l.b16 %v655
  %v1266 = vunpack.c.h.b16 %v655
  %v1267 = vunpack.c.l.b16 %v656
  %v1268 = vunpack.c.h.b16 %v656
  %v1269 = vunpack.c.l.b16 %v657
  %v1270 = vunpack.c.h.b16 %v657
  %v1271 = vunpack.c.l.b16 %v658
  %v1272 = vunpack.c.h.b16 %v658
  %v1273 = vunpack.c.l.b16 %v659
  %v1274 = vunpack.c.h.b16 %v659
  %v1275 = vunpack.c.l.b16 %v660
  %v1276 = vunpack.c.h.b16 %v660
  %v1277 = vunpack.c.l.b16 %v661
  %v1278 = vunpack.c.h.b16 %v661
  %v1279 = vunpack.c.l.b16 %v662
  %v1280 = vunpack.c.h.b16 %v662
  %v1281 = vunpack.c.l.b16 %v663
  %v1282 = vunpack.c.h.b16 %v663
  %v1283 = vunpack.c.l.b16 %v664
  %v1284 = vunpack.c.h.b16 %v664
  %v1285 = vunpack.c.l.b16 %v665
  %v1286 = vunpack.c.h.b16 %v665
  %v1287 = vunpack.c.l.b16 %v666
  %v1288 = vunpack.c.h.b16 %v666
  %v1289 = vunpack.c.l.b16 %v667
  %v1290 = vunpack.c.h.b16 %v667
  %v1291 = vunpack.c.l.b16 %v668
  %v1292 = vunpack.c.h.b16 %v668
  %v1293 = vunpack.c.l.b16 %v669
  %v1294 = vunpack.c.h.b16 %v669
  %v1295 = vunpack.c.l.b16 %v670
  %v1296 = vunpack.c.h.b16 %v670
  %v1297 = vunpack.c.l.b16 %v671
  %v1298 = vunpack.c.h.b16 %v671
  %v1299 = vunpack.c.l.b16 %v672
  %v1300 = vunpack.c.h.b16 %v672
  %v1301 = vunpack.c.l.b16 %v673
  %v1302 = vunpack.c.h.b16 %v673
  %v1303 = vunpack.c.l.b16 %v674
  %v1304 = vunpack.c.h.b16 %v674
  %v1305 = vunpack.c.l.b16 %v675
  %v1306 = vunpack.c.h.b16 %v675
  %v1307 = vunpack.c.l.b16 %v676
  %v1308 = vunpack.c.h.b16 %v676
  %v1309 = vunpack.c.l.b16 %v677
  %v1310 = vunpack.c.h.b16 %v677
  %v1311 = vunpack.c.l.b16 %v678
  %v1312 = vunpack.c.h.b16 %v678
  %v1313 = vunpack.c.l.b16 %v679
  %v1314 = vunpack.c.h.b16 %v679
  %v1315 = vunpack.c.l.b16 %v680
  %v1316 = vunpack.c.h.b16 %v680
  %v1317 = vunpack.c.l.b16 %v681
  %v1318 = vunpack.c.h.b16 %v681
  %v1319 = vunpack.c.l.b16 %v682
  %v1320 = vunpack.c.h.b16 %v682
  %v1321 = vunpack.c.l.b16 %v683
  %v1322 = vunpack.c.h.b16 %v683
  %v1323 = vunpack.c.l.b16 %v684
  %v1324 = vunpack.c.h.b16 %v684
  %v1325 = vunpack.c.l.b16 %v685
  %v1326 = vunpack.c.h.b16 %v685
  %v1327 = vunpack.c.l.b16 %v686
  %v1328 = vunpack.c.h.b16 %v686
  %v1329 = vunpack.c.l.b16 %v687
  %v1330 = vunpack.c.h.b16 %v687
  %v1331 = vunpack.c.l.b16 %v688
  %v1332 = vunpack.c.h.b16 %v688
  %v1333 = vunpack.c.l.b16 %v689
  %v1334 = vunpack.c.h.b16 %v689
  %v1335 = vunpack.c.l.b16 %v690
  %v1336 = vunpack.c.h.b16 %v690
  %v1337 = vunpack.c.l.b16 %v691
  %v1338 = vunpack.c.h.b16 %v691
  %v1339 = vunpack.c.l.b16 %v692
  %v1340 = vunpack.c.h.b16 %v692
  %v1341 = vunpack.c.l.b16 %v693
  %v1342 = vunpack.c.h.b16 %v693
  %v1343 = vunpack.c.l.b16 %v694
  %v1344 = vunpack.c.h.b16 %v694
  %v1345 = vunpack.c.l.b16 %v695
  %v1346 = vunpack.c.h.b16 %v695
  %v1347 = vunpack.c.l.b16 %v696
  %v1348 = vunpack.c.h.b16 %v696
  %v1349 = vunpack.c.l.b16 %v697
  %v1350 = vunpack.c.h.b16 %v697
  %v1351 = vunpack.c.l.b16 %v698
  %v1352 = vunpack.c.h.b16 %v698
  %v1353 = vunpack.c.l.b16 %v699
  %v1354 = vunpack.c.h.b16 %v699
  %v1355 = vunpack.c.l.b16 %v700
  %v1356 = vunpack.c.h.b16 %v700
  %v1357 = vunpack.c.l.b16 %v701
  %v1358 = vunpack.c.h.b16 %v701
  %v1359 = vunpack.c.l.b16 %v702
  %v1360 = vunpack.c.h.b16 %v702
  %v1361 = vunpack.c.l.b16 %v703
  %v1362 = vunpack.c.h.b16 %v703
  %v1363 = vunpack.c.l.b16 %v704
  %v1364 = vunpack.c.h.b16 %v704
  %v1365 = vunpack.c.l.b16 %v705
  %v1366 = vunpack.c.h.b16 %v705
  %v1367 = vunpack.c.l.b16 %v706
  %v1368 = vunpack.c.h.b16 %v706
  %v1369 = vunpack.c.l.b16 %v707
  %v1370 = vunpack.c.h.b16 %v707
  %v1371 = vunpack.c.l.b16 %v708
  %v1372 = vunpack.c.h.b16 %v708
  %v1373 = vunpack.c.l.b16 %v709
  %v1374 = vunpack.c.h.b16 %v709
  %v1375 = vunpack.c.l.b16 %v710
  %v1376 = vunpack.c.h.b16 %v710
  %v1377 = vunpack.c.l.b16 %v711
  %v1378 = vunpack.c.h.b16 %v711
  %v1379 = vunpack.c.l.b16 %v712
  %v1380 = vunpack.c.h.b16 %v712
  %v1381 = vunpack.c.l.b16 %v713
  %v1382 = vunpack.c.h.b16 %v713
  %v1383 = vunpack.c.l.b16 %v714
  %v1384 = vunpack.c.h.b16 %v714
  %v1385 = vunpack.c.l.b16 %v715
  %v1386 = vunpack.c.h.b16 %v715
  %v1387 = vunpack.c.l.b16 %v716
  %v1388 = vunpack.c.h.b16 %v716
  %v1389 = vunpack.c.l.b16 %v717
  %v1390 = vunpack.c.h.b16 %v717
  %v1391 = vunpack.c.l.b16 %v718
  %v1392 = vunpack.c.h.b16 %v718
  %v1393 = vunpack.c.l.b16 %v719
  %v1394 = vunpack.c.h.b16 %v719
  %v1395 = vunpack.c.l.b16 %v720
  %v1396 = vunpack.c.h.b16 %v720
  %v1397 = vunpack.c.l.b16 %v721
  %v1398 = vunpack.c.h.b16 %v721
  %v1399 = vunpack.c.l.b16 %v722
  %v1400 = vunpack.c.h.b16 %v722
  %v1401 = vunpack.c.l.b16 %v723
  %v1402 = vunpack.c.h.b16 %v723
  %v1403 = vunpack.c.l.b16 %v724
  %v1404 = vunpack.c.h.b16 %v724
  %v1405 = vunpack.c.l.b16 %v725
  %v1406 = vunpack.c.h.b16 %v725
  %v1407 = vunpack.c.l.b16 %v726
  %v1408 = vunpack.c.h.b16 %v726
  %v1409 = vunpack.c.l.b16 %v727
  %v1410 = vunpack.c.h.b16 %v727
  %v1411 = vunpack.c.l.b16 %v728
  %v1412 = vunpack.c.h.b16 %v728
  %v1413 = vunpack.c.l.b16 %v729
  %v1414 = vunpack.c.h.b16 %v729
  %v1415 = vunpack.c.l.b16 %v730
  %v1416 = vunpack.c.h.b16 %v730
  %v1417 = vunpack.c.l.b16 %v731
  %v1418 = vunpack.c.h.b16 %v731
  %v1419 = vunpack.c.l.b16 %v732
  %v1420 = vunpack.c.h.b16 %v732
  %v1421 = vunpack.c.l.b16 %v733
  %v1422 = vunpack.c.h.b16 %v733
  %v1423 = vunpack.c.l.b16 %v734
  %v1424 = vunpack.c.h.b16 %v734
  %v1425 = vunpack.c.l.b16 %v735
  %v1426 = vunpack.c.h.b16 %v735
  %v1427 = vunpack.c.l.b16 %v736
  %v1428 = vunpack.c.h.b16 %v736
  %v1429 = vunpack.c.l.b16 %v737
  %v1430 = vunpack.c.h.b16 %v737
  %v1431 = vunpack.c.l.b16 %v738
  %v1432 = vunpack.c.h.b16 %v738
  %v1433 = vunpack.c.l.b16 %v739
  %v1434 = vunpack.c.h.b16 %v739
  %v1435 = vunpack.c.l.b16 %v740
  %v1436 = vunpack.c.h.b16 %v740
  %v1437 = vunpack.c.l.b16 %v741
  %v1438 = vunpack.c.h.b16 %v741
  %v1439 = vunpack.c.l.b16 %v742
  %v1440 = vunpack.c.h.b16 %v742
  %v1441 = vunpack.c.l.b16 %v743
  %v1442 = vunpack.c.h.b16 %v743
  %v1443 = vunpack.c.l.b16 %v744
  %v1444 = vunpack.c.h.b16 %v744
  %v1445 = vunpack.c.l.b16 %v745
  %v1446 = vunpack.c.h.b16 %v745
  %v1447 = vunpack.c.l.b16 %v746
  %v1448 = vunpack.c.h.b16 %v746
  %v1449 = vunpack.c.l.b16 %v747
  %v1450 = vunpack.c.h.b16 %v747
  %v1451 = vunpack.c.l.b16 %v748
  %v1452 = vunpack.c.h.b16 %v748
  %v1453 = vunpack.c.l.b16 %v749
  %v1454 = vunpack.c.h.b16 %v749
  %v1455 = vunpack.c.l.b16 %v750
  %v1456 = vunpack.c.h.b16 %v750
  %v1457 = vunpack.c.l.b16 %v751
  %v1458 = vunpack.c.h.b16 %v751
  %v1459 = vunpack.c.l.b16 %v752
  %v1460 = vunpack.c.h.b16 %v752
  %v1461 = vunpack.c.l.b16 %v753
  %v1462 = vunpack.c.h.b16 %v753
  %v1463 = vunpack.c.l.b16 %v754
  %v1464 = vunpack.c.h.b16 %v754
  %v1465 = vunpack.c.l.b16 %v755
  %v1466 = vunpack.c.h.b16 %v755
  %v1467 = vunpack.c.l.b16 %v756
  %v1468 = vunpack.c.h.b16 %v756
  %v1469 = vunpack.c.l.b16 %v757
  %v1470 = vunpack.c.h.b16 %v757
  %v1471 = vunpack.c.l.b16 %v758
  %v1472 = vunpack.c.h.b16 %v758
  %v1473 = vunpack.c.l.b16 %v759
  %v1474 = vunpack.c.h.b16 %v759
  %v1475 = vunpack.c.l.b16 %v760
  %v1476 = vunpack.c.h.b16 %v760
  %v1477 = vunpack.c.l.b16 %v761
  %v1478 = vunpack.c.h.b16 %v761
  %v1479 = vunpack.c.l.b16 %v762
  %v1480 = vunpack.c.h.b16 %v762
  %v1481 = vunpack.c.l.b16 %v763
  %v1482 = vunpack.c.h.b16 %v763
  %v1483 = vunpack.c.l.b16 %v764
  %v1484 = vunpack.c.h.b16 %v764
  %v1485 = vunpack.c.l.b16 %v765
  %v1486 = vunpack.c.h.b16 %v765
  %v1487 = vunpack.c.l.b16 %v766
  %v1488 = vunpack.c.h.b16 %v766
  %v1489 = vunpack.c.l.b16 %v767
  %v1490 = vunpack.c.h.b16 %v767
  %v1491 = vunpack.c.l.b16 %v768
  %v1492 = vunpack.c.h.b16 %v768
  %v1493 = vunpack.c.l.b16 %v769
  %v1494 = vunpack.c.h.b16 %v769
  %v1495 = vunpack.c.l.b16 %v770
  %v1496 = vunpack.c.h.b16 %v770
  %v1497 = vunpack.c.l.b16 %v771
  %v1498 = vunpack.c.h.b16 %v771
  %v1499 = vunpack.c.l.b16 %v772
  %v1500 = vunpack.c.h.b16 %v772
  %v1501 = vunpack.c.l.b16 %v773
  %v1502 = vunpack.c.h.b16 %v773
  %v1503 = vunpack.c.l.b16 %v774
  %v1504 = vunpack.c.h.b16 %v774
  %v1505 = vunpack.c.l.b16 %v775
  %v1506 = vunpack.c.h.b16 %v775
  %v1507 = vunpack.c.l.b16 %v776
  %v1508 = vunpack.c.h.b16 %v776
  %v1509 = vunpack.c.l.b16 %v777
  %v1510 = vunpack.c.h.b16 %v777
  %v1511 = vunpack.c.l.b16 %v778
  %v1512 = vunpack.c.h.b16 %v778
  %v1513 = vunpack.c.l.b16 %v779
  %v1514 = vunpack.c.h.b16 %v779
  %v1515 = vunpack.c.l.b16 %v780
  %v1516 = vunpack.c.h.b16 %v780
  %v1517 = vunpack.c.l.b16 %v781
  %v1518 = vunpack.c.h.b16 %v781
  %v1519 = vunpack.c.l.b16 %v782
  %v1520 = vunpack.c.h.b16 %v782
  %v1521 = vunpack.c.l.b16 %v783
  %v1522 = vunpack.c.h.b16 %v783
  %v1523 = vunpack.c.l.b16 %v784
  %v1524 = vunpack.c.h.b16 %v784
  %v1525 = vunpack.c.l.b16 %v785
  %v1526 = vunpack.c.h.b16 %v785
  %v1527 = vunpack.c.l.b16 %v786
  %v1528 = vunpack.c.h.b16 %v786
  %v1529 = vunpack.c.l.b16 %v787
  %v1530 = vunpack.c.h.b16 %v787
  %v1531 = vunpack.c.l.b16 %v788
  %v1532 = vunpack.c.h.b16 %v788
  %v1533 = vunpack.c.l.b16 %v789
  %v1534 = vunpack.c.h.b16 %v789
  %v1535 = vunpack.c.l.b16 %v790
  %v1536 = vunpack.c.h.b16 %v790
  %v1537 = vunpack.c.l.b16 %v791
  %v1538 = vunpack.c.h.b16 %v791
  %v1539 = vunpack.c.l.b16 %v792
  %v1540 = vunpack.c.h.b16 %v792
  %v1541 = vunpack.c.l.b16 %v793
  %v1542 = vunpack.c.h.b16 %v793
  %v1543 = vunpack.c.l.b16 %v794
  %v1544 = vunpack.c.h.b16 %v794
  %v1545 = vunpack.c.l.b16 %v795
  %v1546 = vunpack.c.h.b16 %v795
  %v1547 = vunpack.c.l.b16 %v796
  %v1548 = vunpack.c.h.b16 %v796
  %v1549 = vunpack.c.l.b16 %v797
  %v1550 = vunpack.c.h.b16 %v797
  %v1551 = vunpack.c.l.b16 %v798
  %v1552 = vunpack.c.h.b16 %v798
  %v1553 = vunpack.c.l.b16 %v799
  %v1554 = vunpack.c.h.b16 %v799
  %v1555 = vunpack.c.l.b16 %v800
  %v1556 = vunpack.c.h.b16 %v800
  %v1557 = vunpack.c.l.b16 %v801
  %v1558 = vunpack.c.h.b16 %v801
  %v1559 = vunpack.c.l.b16 %v802
  %v1560 = vunpack.c.h.b16 %v802
  %v1561 = vunpack.c.l.b16 %v803
  %v1562 = vunpack.c.h.b16 %v803
  %v1563 = vunpack.c.l.b16 %v804
  %v1564 = vunpack.c.h.b16 %v804
  %v1565 = vunpack.c.l.b16 %v805
  %v1566 = vunpack.c.h.b16 %v805
  %v1567 = vunpack.c.l.b16 %v806
  %v1568 = vunpack.c.h.b16 %v806
  %v1569 = vunpack.c.l.b16 %v807
  %v1570 = vunpack.c.h.b16 %v807
  %v1571 = vunpack.c.l.b16 %v808
  %v1572 = vunpack.c.h.b16 %v808
  %v1573 = vunpack.c.l.b16 %v809
  %v1574 = vunpack.c.h.b16 %v809
  %v1575 = vunpack.c.l.b16 %v810
  %v1576 = vunpack.c.h.b16 %v810
  %v1577 = vunpack.c.l.b16 %v811
  %v1578 = vunpack.c.h.b16 %v811
  %v1579 = vunpack.c.l.b16 %v812
  %v1580 = vunpack.c.h.b16 %v812
  %v1581 = vunpack.c.l.b16 %v813
  %v1582 = vunpack.c.h.b16 %v813
  %v1583 = vunpack.c.l.b16 %v814
  %v1584 = vunpack.c.h.b16 %v814
  %v1585 = vunpack.c.l.b16 %v815
  %v1586 = vunpack.c.h.b16 %v815
  %v1587 = vunpack.c.l.b16 %v816
  %v1588 = vunpack.c.h.b16 %v816
  %v1589 = vunpack.c.l.b16 %v817
  %v1590 = vunpack.c.h.b16 %v817
  %v1591 = vunpack.c.l.b16 %v818
  %v1592 = vunpack.c.h.b16 %v818
  %v1593 = vunpack.c.l.b16 %v819
  %v1594 = vunpack.c.h.b16 %v819
  %v1595 = vunpack.c.l.b16 %v820
  %v1596 = vunpack.c.h.b16 %v820
  %v1597 = vunpack.c.l.b16 %v821
  %v1598 = vunpack.c.h.b16 %v821
  %v1599 = vunpack.c.l.b16 %v822
  %v1600 = vunpack.c.h.b16 %v822
  %v1601 = vpack.c.b16 %v1093, %v1089
  %v1602 = vpack.c.b16 %v1094, %v1090
  %v1603 = vpack.c.b16 %v1095, %v1091
  %v1604 = vpack.c.b16 %v1096, %v1092
  %v1605 = vpack.c.b16 %v1101, %v1097
  %v1606 = vpack.c.b16 %v1102, %v1098
  %v1607 = vpack.c.b16 %v1103, %v1099
  %v1608 = vpack.c.b16 %v1104, %v1100
  %v1609 = vpack.c.b16 %v1109, %v1105
  %v1610 = vpack.c.b16 %v1110, %v1106
  %v1611 = vpack.c.b16 %v1111, %v1107
  %v1612 = vpack.c.b16 %v1112, %v1108
  %v1613 = vpack.c.b16 %v1117, %v1113
  %v1614 = vpack.c.b16 %v1118, %v1114
  %v1615 = vpack.c.b16 %v1119, %v1115
  %v1616 = vpack.c.b16 %v1120, %v1116
  %v1617 = vpack.c.b16 %v1125, %v1121
  %v1618 = vpack.c.b16 %v1126, %v1122
  %v1619 = vpack.c.b16 %v1127, %v1123
  %v1620 = vpack.c.b16 %v1128, %v1124
  %v1621 = vpack.c.b16 %v1133, %v1129
  %v1622 = vpack.c.b16 %v1134, %v1130
  %v1623 = vpack.c.b16 %v1135, %v1131
  %v1624 = vpack.c.b16 %v1136, %v1132
  %v1625 = vpack.c.b16 %v1141, %v1137
  %v1626 = vpack.c.b16 %v1142, %v1138
  %v1627 = vpack.c.b16 %v1143, %v1139
  %v1628 = vpack.c.b16 %v1144, %v1140
  %v1629 = vpack.c.b16 %v1149, %v1145
  %v1630 = vpack.c.b16 %v1150, %v1146
  %v1631 = vpack.c.b16 %v1151, %v1147
  %v1632 = vpack.c.b16 %v1152, %v1148
  %v1633 = vpack.c.b16 %v1157, %v1153
  %v1634 = vpack.c.b16 %v1158, %v1154
  %v1635 = vpack.c.b16 %v1159, %v1155
  %v1636 = vpack.c.b16 %v1160, %v1156
  %v1637 = vpack.c.b16 %v1165, %v1161
  %v1638 = vpack.c.b16 %v1166, %v1162
  %v1639 = vpack.c.b16 %v1167, %v1163
  %v1640 = vpack.c.b16 %v1168, %v1164
  %v1641 = vpack.c.b16 %v1173, %v1169
  %v1642 = vpack.c.b16 %v1174, %v1170
  %v1643 = vpack.c.b16 %v1175, %v1171
  %v1644 = vpack.c.b16 %v1176, %v1172
  %v1645 = vpack.c.b16 %v1181, %v1177
  %v1646 = vpack.c.b16 %v1182, %v1178
  %v1647 = vpack.c.b16 %v1183, %v1179
  %v1648 = vpack.c.b16 %v1184, %v1180
  %v1649 = vpack.c.b16 %v1189, %v1185
  %v1650 = vpack.c.b16 %v1190, %v1186
  %v1651 = vpack.c.b16 %v1191, %v1187
  %v1652 = vpack.c.b16 %v1192, %v1188
  %v1653 = vpack.c.b16 %v1197, %v1193
  %v1654 = vpack.c.b16 %v1198, %v1194
  %v1655 = vpack.c.b16 %v1199, %v1195
  %v1656 = vpack.c.b16 %v1200, %v1196
  %v1657 = vpack.c.b16 %v1205, %v1201
  %v1658 = vpack.c.b16 %v1206, %v1202
  %v1659 = vpack.c.b16 %v1207, %v1203
  %v1660 = vpack.c.b16 %v1208, %v1204
  %v1661 = vpack.c.b16 %v1213, %v1209
  %v1662 = vpack.c.b16 %v1214, %v1210
  %v1663 = vpack.c.b16 %v1215, %v1211
  %v1664 = vpack.c.b16 %v1216, %v1212
  %v1665 = vpack.c.b16 %v1221, %v1217
  %v1666 = vpack.c.b16 %v1222, %v1218
  %v1667 = vpack.c.b16 %v1223, %v1219
  %v1668 = vpack.c.b16 %v1224, %v1220
  %v1669 = vpack.c.b16 %v1229, %v1225
  %v1670 = vpack.c.b16 %v1230, %v1226
  %v1671 = vpack.c.b16 %v1231, %v1227
  %v1672 = vpack.c.b16 %v1232, %v1228
  %v1673 = vpack.c.b16 %v1237, %v1233
  %v1674 = vpack.c.b16 %v1238, %v1234
  %v1675 = vpack.c.b16 %v1239, %v1235
  %v1676 = vpack.c.b16 %v1240, %v1236
  %v1677 = vpack.c.b16 %v1245, %v1241
  %v1678 = vpack.c.b16 %v1246, %v1242
  %v1679 = vpack.c.b16 %v1247, %v1243
  %v1680 = vpack.c.b16 %v1248, %v1244
  %v1681 = vpack.c.b16 %v1253, %v1249
  %v1682 = vpack.c.b16 %v1254, %v1250
  %v1683 = vpack.c.b16 %v1255, %v1251
  %v1684 = vpack.c.b16 %v1256, %v1252
  %v1685 = vpack.c.b16 %v1261, %v1257
  %v1686 = vpack.c.b16 %v1262, %v1258
  %v1687 = vpack.c.b16 %v1263, %v1259
  %v1688 = vpack.c.b16 %v1264, %v1260
  %v1689 = vpack.c.b16 %v1269, %v1265
  %v1690 = vpack.c.b16 %v1270, %v1266
  %v1691 = vpack.c.b16 %v1271, %v1267
  %v1692 = vpack.c.b16 %v1272, %v1268
  %v1693 = vpack.c.b16 %v1277, %v1273
  %v1694 = vpack.c.b16 %v1278, %v1274
  %v1695 = vpack.c.b16 %v1279, %v1275
  %v1696 = vpack.c.b16 %v1280, %v1276
  %v1697 = vpack.c.b16 %v1285, %v1281
  %v1698 = vpack.c.b16 %v1286, %v1282
  %v1699 = vpack.c.b16 %v1287, %v1283
  %v1700 = vpack.c.b16 %v1288, %v1284
  %v1701 = vpack.c.b16 %v1293, %v1289
  %v1702 = vpack.c.b16 %v1294, %v1290
  %v1703 = vpack.c.b16 %v1295, %v1291
  %v1704 = vpack.c.b16 %v1296, %v1292
  %v1705 = vpack.c.b16 %v1301, %v1297
  %v1706 = vpack.c.b16 %v1302, %v1298
  %v1707 = vpack.c.b16 %v1303, %v1299
  %v1708 = vpack.c.b16 %v1304, %v1300
  %v1709 = vpack.c.b16 %v1309, %v1305
  %v1710 = vpack.c.b16 %v1310, %v1306
  %v1711 = vpack.c.b16 %v1311, %v1307
  %v1712 = vpack.c.b16 %v1312, %v1308
  %v1713 = vpack.c.b16 %v1317, %v1313
  %v1714 = vpack.c.b16 %v1318, %v1314
  %v1715 = vpack.c.b16 %v1319, %v1315
  %v1716 = vpack.c.b16 %v1320, %v1316
  %v1717 = vpack.c.b16 %v1325, %v1321
  %v1718 = vpack.c.b16 %v1326, %v1322
  %v1719 = vpack.c.b16 %v1327, %v1323
  %v1720 = vpack.c.b16 %v1328, %v1324
  %v1721 = vpack.c.b16 %v1333, %v1329
  %v1722 = vpack.c.b16 %v1334, %v1330
  %v1723 = vpack.c.b16 %v1335, %v1331
  %v1724 = vpack.c.b16 %v1336, %v1332
  %v1725 = vpack.c.b16 %v1341, %v1337
  %v1726 = vpack.c.b16 %v1342, %v1338
  %v1727 = vpack.c.b16 %v1343, %v1339
  %v1728 = vpack.c.b16 %v1344, %v1340
  %v1729 = vpack.c.b16 %v1349, %v1345
  %v1730 = vpack.c.b16 %v1350, %v1346
  %v1731 = vpack.c.b16 %v1351, %v1347
  %v1732 = vpack.c.b16 %v1352, %v1348
  %v1733 = vpack.c.b16 %v1357, %v1353
  %v1734 = vpack.c.b16 %v1358, %v1354
  %v1735 = vpack.c.b16 %v1359, %v1355
  %v1736 = vpack.c.b16 %v1360, %v1356
  %v1737 = vpack.c.b16 %v1365, %v1361
  %v1738 = vpack.c.b16 %v1366, %v1362
  %v1739 = vpack.c.b16 %v1367, %v1363
  %v1740 = vpack.c.b16 %v1368, %v1364
  %v1741 = vpack.c.b16 %v1373, %v1369
  %v1742 = vpack.c.b16 %v1374, %v1370
  %v1743 = vpack.c.b16 %v1375, %v1371
  %v1744 = vpack.c.b16 %v1376, %v1372
  %v1745 = vpack.c.b16 %v1381, %v1377
  %v1746 = vpack.c.b16 %v1382, %v1378
  %v1747 = vpack.c.b16 %v1383, %v1379
  %v1748 = vpack.c.b16 %v1384, %v1380
  %v1749 = vpack.c.b16 %v1389, %v1385
  %v1750 = vpack.c.b16 %v1390, %v1386
  %v1751 = vpack.c.b16 %v1391, %v1387
  %v1752 = vpack.c.b16 %v1392, %v1388
  %v1753 = vpack.c.b16 %v1397, %v1393
  %v1754 = vpack.c.b16 %v1398, %v1394
  %v1755 = vpack.c.b16 %v1399, %v1395
  %v1756 = vpack.c.b16 %v1400, %v1396
  %v1757 = vpack.c.b16 %v1405, %v1401
  %v1758 = vpack.c.b16 %v1406, %v1402
  %v1759 = vpack.c.b16 %v1407, %v1403
  %v1760 = vpack.c.b16 %v1408, %v1404
  %v1761 = vpack.c.b16 %v1413, %v1409
  %v1762 = vpack.c.b16 %v1414, %v1410
  %v1763 = vpack.c.b16 %v1415, %v1411
  %v1764 = vpack.c.b16 %v1416, %v1412
  %v1765 = vpack.c.b16 %v1421, %v1417
  %v1766 = vpack.c.b16 %v1422, %v1418
  %v1767 = vpack.c.b16 %v1423, %v1419
  %v1768 = vpack.c.b16 %v1424, %v1420
  %v1769 = vpack.c.b16 %v1429, %v1425
  %v1770 = vpack.c.b16 %v1430, %v1426
  %v1771 = vpack.c.b16 %v1431, %v1427
  %v1772 = vpack.c.b16 %v1432, %v1428
  %v1773 = vpack.c.b16 %v1437, %v1433
  %v1774 = vpack.c.b16 %v1438, %v1434
  %v1775 = vpack.c.b16 %v1439, %v1435
  %v1776 = vpack.c.b16 %v1440, %v1436
  %v1777 = vpack.c.b16 %v1445, %v1441
  %v1778 = vpack.c.b16 %v1446, %v1442
  %v1779 = vpack.c.b16 %v1447, %v1443
  %v1780 = vpack.c.b16 %v1448, %v1444
  %v1781 = vpack.c.b16 %v1453, %v1449
  %v1782 = vpack.c.b16 %v1454, %v1450
  %v1783 = vpack.c.b16 %v1455, %v1451
  %v1784 = vpack.c.b16 %v1456, %v1452
  %v1785 = vpack.c.b16 %v1461, %v1457
  %v1786 = vpack.c.b16 %v1462, %v1458
  %v1787 = vpack.c.b16 %v1463, %v1459
  %v1788 = vpack.c.b16 %v1464, %v1460
  %v1789 = vpack.c.b16 %v1469, %v1465
  %v1790 = vpack.c.b16 %v1470, %v1466
  %v1791 = vpack.c.b16 %v1471, %v1467
  %v1792 = vpack.c.b16 %v1472, %v1468
  %v1793 = vpack.c.b16 %v1477, %v1473
  %v1794 = vpack.c.b16 %v1478, %v1474
  %v1795 = vpack.c.b16 %v1479, %v1475
  %v1796 = vpack.c.b16 %v1480, %v1476
  %v1797 = vpack.c.b16 %v1485, %v1481
  %v1798 = vpack.c.b16 %v1486, %v1482
  %v1799 = vpack.c.b16 %v1487, %v1483
  %v1800 = vpack.c.b16 %v1488, %v1484
  %v1801 = vpack.c.b16 %v1493, %v1489
  %v1802 = vpack.c.b16 %v1494, %v1490
  %v1803 = vpack.c.b16 %v1495, %v1491
  %v1804 = vpack.c.b16 %v1496, %v1492
  %v1805 = vpack.c.b16 %v1501, %v1497
  %v1806 = vpack.c.b16 %v1502, %v1498
  %v1807 = vpack.c.b16 %v1503, %v1499
  %v1808 = vpack.c.b16 %v1504, %v1500
  %v1809 = vpack.c.b16 %v1509, %v1505
  %v1810 = vpack.c.b16 %v1510, %v1506
  %v1811 = vpack.c.b16 %v1511, %v1507
  %v1812 = vpack.c.b16 %v1512, %v1508
  %v1813 = vpack.c.b16 %v1517, %v1513
  %v1814 = vpack.c.b16 %v1518, %v1514
  %v1815 = vpack.c.b16 %v1519, %v1515
  %v1816 = vpack.c.b16 %v1520, %v1516
  %v1817 = vpack.c.b16 %v1525, %v1521
  %v1818 = vpack.c.b16 %v1526, %v1522
  %v1819 = vpack.c.b16 %v1527, %v1523
  %v1820 = vpack.c.b16 %v1528, %v1524
  %v1821 = vpack.c.b16 %v1533, %v1529
  %v1822 = vpack.c.b16 %v1534, %v1530
  %v1823 = vpack.c.b16 %v1535, %v1531
  %v1824 = vpack.c.b16 %v1536, %v1532
  %v1825 = vpack.c.b16 %v1541, %v1537
  %v1826 = vpack.c.b16 %v1542, %v1538
  %v1827 = vpack.c.b16 %v1543, %v1539
  %v1828 = vpack.c.b16 %v1544, %v1540
  %v1829 = vpack.c.b16 %v1549, %v1545
  %v1830 = vpack.c.b16 %v1550, %v1546
  %v1831 = vpack.c.b16 %v1551, %v1547
  %v1832 = vpack.c.b16 %v1552, %v1548
  %v1833 = vpack.c.b16 %v1557, %v1553
  %v1834 = vpack.c.b16 %v1558, %v1554
  %v1835 = vpack.c.b16 %v1559, %v1555
  %v1836 = vpack.c.b16 %v1560, %v1556
  %v1837 = vpack.c.b16 %v1565, %v1561
  %v1838 = vpack.c.b16 %v1566, %v1562
  %v1839 = vpack.c.b16 %v1567, %v1563
  %v1840 = vpack.c.b16 %v1568, %v1564
  %v1841 = vpack.c.b16 %v1573, %v1569
  %v1842 = vpack.c.b16 %v1574, %v1570
  %v1843 = vpack.c.b16 %v1575, %v1571
  %v1844 = vpack.c.b16 %v1576, %v1572
  %v1845 = vpack.c.b16 %v1581, %v1577
  %v1846 = vpack.c.b16 %v1582, %v1578
  %v1847 = vpack.c.b16 %v1583, %v1579
  %v1848 = vpack.c.b16 %v1584, %v1580
  %v1849 = vpack.c.b16 %v1589, %v1585
  %v1850 = vpack.c.b16 %v1590, %v1586
  %v1851 = vpack.c.b16 %v1591, %v1587
  %v1852 = vpack.c.b16 %v1592, %v1588
  %v1853 = vpack.c.b16 %v1597, %v1593
  %v1854 = vpack.c.b16 %v1598, %v1594
  %v1855 = vpack.c.b16 %v1599, %v1595
  %v1856 = vpack.c.b16 %v1600, %v1596
  %2113 = vmatpush.bf16.msra.mxu0 %v1629
  %2114 = vmatpush.bf16.msra.mxu0 %v1625
  %2115 = vmatpush.bf16.msra.mxu0 %v1621
  %2116 = vmatpush.bf16.msra.mxu0 %v1617
  %2117 = vmatpush.bf16.msra.mxu0 %v1613
  %2118 = vmatpush.bf16.msra.mxu0 %v1609
  %2119 = vmatpush.bf16.msra.mxu0 %v1605
  %2120 = vmatpush.bf16.msra.mxu0 %v1601
  %2121 = vmatmul.bf16.gmra.mxu0 %v559
  %v2122 = vpop.f32.mrf.mxu0
  %v2123 = vadd.f32 %v825, %v2122
  %v2124 = vpop.f32.mrf.mxu0
  %2125 = vdwg.mxu0
  %2126 = vmatpush.bf16.msra.mxu0 %v1661
  %2127 = vmatpush.bf16.msra.mxu0 %v1657
  %2128 = vmatpush.bf16.msra.mxu0 %v1653
  %2129 = vmatpush.bf16.msra.mxu0 %v1649
  %2130 = vmatpush.bf16.msra.mxu0 %v1645
  %2131 = vmatpush.bf16.msra.mxu0 %v1641
  %2132 = vmatpush.bf16.msra.mxu0 %v1637
  %2133 = vmatpush.bf16.msra.mxu0 %v1633
  %2134 = vmatmul.bf16.gmra.mxu0 %v560
  %v2135 = vpop.f32.mrf.mxu0
  %v2136 = vadd.f32 %v2123, %v2135
  %v2137 = vpop.f32.mrf.mxu0
  %2138 = vdwg.mxu0
  %2139 = vmatpush.bf16.msra.mxu0 %v1693
  %2140 = vmatpush.bf16.msra.mxu0 %v1689
  %2141 = vmatpush.bf16.msra.mxu0 %v1685
  %2142 = vmatpush.bf16.msra.mxu0 %v1681
  %2143 = vmatpush.bf16.msra.mxu0 %v1677
  %2144 = vmatpush.bf16.msra.mxu0 %v1673
  %2145 = vmatpush.bf16.msra.mxu0 %v1669
  %2146 = vmatpush.bf16.msra.mxu0 %v1665
  %2147 = vmatmul.bf16.gmra.mxu0 %v561
  %v2148 = vpop.f32.mrf.mxu0
  %v2149 = vadd.f32 %v2136, %v2148
  %v2150 = vpop.f32.mrf.mxu0
  %2151 = vdwg.mxu0
  %2152 = vmatpush.bf16.msra.mxu0 %v1725
  %2153 = vmatpush.bf16.msra.mxu0 %v1721
  %2154 = vmatpush.bf16.msra.mxu0 %v1717
  %2155 = vmatpush.bf16.msra.mxu0 %v1713
  %2156 = vmatpush.bf16.msra.mxu0 %v1709
  %2157 = vmatpush.bf16.msra.mxu0 %v1705
  %2158 = vmatpush.bf16.msra.mxu0 %v1701
  %2159 = vmatpush.bf16.msra.mxu0 %v1697
  %2160 = vmatmul.bf16.gmra.mxu0 %v562
  %v2161 = vpop.f32.mrf.mxu0
  %v2162 = vadd.f32 %v2149, %v2161
  %v2163 = vpop.f32.mrf.mxu0
  %2164 = vdwg.mxu0
  %2165 = vmatpush.bf16.msra.mxu0 %v1757
  %2166 = vmatpush.bf16.msra.mxu0 %v1753
  %2167 = vmatpush.bf16.msra.mxu0 %v1749
  %2168 = vmatpush.bf16.msra.mxu0 %v1745
  %2169 = vmatpush.bf16.msra.mxu0 %v1741
  %2170 = vmatpush.bf16.msra.mxu0 %v1737
  %2171 = vmatpush.bf16.msra.mxu0 %v1733
  %2172 = vmatpush.bf16.msra.mxu0 %v1729
  %2173 = vmatmul.bf16.gmra.mxu0 %v563
  %v2174 = vpop.f32.mrf.mxu0
  %v2175 = vadd.f32 %v2162, %v2174
  %v2176 = vpop.f32.mrf.mxu0
  %2177 = vdwg.mxu0
  %2178 = vmatpush.bf16.msra.mxu0 %v1789
  %2179 = vmatpush.bf16.msra.mxu0 %v1785
  %2180 = vmatpush.bf16.msra.mxu0 %v1781
  %2181 = vmatpush.bf16.msra.mxu0 %v1777
  %2182 = vmatpush.bf16.msra.mxu0 %v1773
  %2183 = vmatpush.bf16.msra.mxu0 %v1769
  %2184 = vmatpush.bf16.msra.mxu0 %v1765
  %2185 = vmatpush.bf16.msra.mxu0 %v1761
  %2186 = vmatmul.bf16.gmra.mxu0 %v564
  %v2187 = vpop.f32.mrf.mxu0
  %v2188 = vadd.f32 %v2175, %v2187
  %v2189 = vpop.f32.mrf.mxu0
  %2190 = vdwg.mxu0
  %2191 = vmatpush.bf16.msra.mxu0 %v1821
  %2192 = vmatpush.bf16.msra.mxu0 %v1817
  %2193 = vmatpush.bf16.msra.mxu0 %v1813
  %2194 = vmatpush.bf16.msra.mxu0 %v1809
  %2195 = vmatpush.bf16.msra.mxu0 %v1805
  %2196 = vmatpush.bf16.msra.mxu0 %v1801
  %2197 = vmatpush.bf16.msra.mxu0 %v1797
  %2198 = vmatpush.bf16.msra.mxu0 %v1793
  %2199 = vmatmul.bf16.gmra.mxu0 %v565
  %v2200 = vpop.f32.mrf.mxu0
  %v2201 = vadd.f32 %v2188, %v2200
  %v2202 = vpop.f32.mrf.mxu0
  %2203 = vdwg.mxu0
  %2204 = vmatpush.bf16.msra.mxu0 %v1853
  %2205 = vmatpush.bf16.msra.mxu0 %v1849
  %2206 = vmatpush.bf16.msra.mxu0 %v1845
  %2207 = vmatpush.bf16.msra.mxu0 %v1841
  %2208 = vmatpush.bf16.msra.mxu0 %v1837
  %2209 = vmatpush.bf16.msra.mxu0 %v1833
  %2210 = vmatpush.bf16.msra.mxu0 %v1829
  %2211 = vmatpush.bf16.msra.mxu0 %v1825
  %2212 = vmatmul.bf16.gmra.mxu0 %v566
  %v2213 = vpop.f32.mrf.mxu0
  %v2214 = vadd.f32 %v2201, %v2213
  %v2215 = vpop.f32.mrf.mxu0
  %2216 = vdwg.mxu0
  %2217 = vmatpush.bf16.msra.mxu0 %v1630
  %2218 = vmatpush.bf16.msra.mxu0 %v1626
  %2219 = vmatpush.bf16.msra.mxu0 %v1622
  %2220 = vmatpush.bf16.msra.mxu0 %v1618
  %2221 = vmatpush.bf16.msra.mxu0 %v1614
  %2222 = vmatpush.bf16.msra.mxu0 %v1610
  %2223 = vmatpush.bf16.msra.mxu0 %v1606
  %2224 = vmatpush.bf16.msra.mxu0 %v1602
  %2225 = vmatmul.bf16.gmra.mxu0 %v559
  %v2226 = vpop.f32.mrf.mxu0
  %v2227 = vadd.f32 %v826, %v2226
  %v2228 = vpop.f32.mrf.mxu0
  %2229 = vdwg.mxu0
  %2230 = vmatpush.bf16.msra.mxu0 %v1662
  %2231 = vmatpush.bf16.msra.mxu0 %v1658
  %2232 = vmatpush.bf16.msra.mxu0 %v1654
  %2233 = vmatpush.bf16.msra.mxu0 %v1650
  %2234 = vmatpush.bf16.msra.mxu0 %v1646
  %2235 = vmatpush.bf16.msra.mxu0 %v1642
  %2236 = vmatpush.bf16.msra.mxu0 %v1638
  %2237 = vmatpush.bf16.msra.mxu0 %v1634
  %2238 = vmatmul.bf16.gmra.mxu0 %v560
  %v2239 = vpop.f32.mrf.mxu0
  %v2240 = vadd.f32 %v2227, %v2239
  %v2241 = vpop.f32.mrf.mxu0
  %2242 = vdwg.mxu0
  %2243 = vmatpush.bf16.msra.mxu0 %v1694
  %2244 = vmatpush.bf16.msra.mxu0 %v1690
  %2245 = vmatpush.bf16.msra.mxu0 %v1686
  %2246 = vmatpush.bf16.msra.mxu0 %v1682
  %2247 = vmatpush.bf16.msra.mxu0 %v1678
  %2248 = vmatpush.bf16.msra.mxu0 %v1674
  %2249 = vmatpush.bf16.msra.mxu0 %v1670
  %2250 = vmatpush.bf16.msra.mxu0 %v1666
  %2251 = vmatmul.bf16.gmra.mxu0 %v561
  %v2252 = vpop.f32.mrf.mxu0
  %v2253 = vadd.f32 %v2240, %v2252
  %v2254 = vpop.f32.mrf.mxu0
  %2255 = vdwg.mxu0
  %2256 = vmatpush.bf16.msra.mxu0 %v1726
  %2257 = vmatpush.bf16.msra.mxu0 %v1722
  %2258 = vmatpush.bf16.msra.mxu0 %v1718
  %2259 = vmatpush.bf16.msra.mxu0 %v1714
  %2260 = vmatpush.bf16.msra.mxu0 %v1710
  %2261 = vmatpush.bf16.msra.mxu0 %v1706
  %2262 = vmatpush.bf16.msra.mxu0 %v1702
  %2263 = vmatpush.bf16.msra.mxu0 %v1698
  %2264 = vmatmul.bf16.gmra.mxu0 %v562
  %v2265 = vpop.f32.mrf.mxu0
  %v2266 = vadd.f32 %v2253, %v2265
  %v2267 = vpop.f32.mrf.mxu0
  %2268 = vdwg.mxu0
  %2269 = vmatpush.bf16.msra.mxu0 %v1758
  %2270 = vmatpush.bf16.msra.mxu0 %v1754
  %2271 = vmatpush.bf16.msra.mxu0 %v1750
  %2272 = vmatpush.bf16.msra.mxu0 %v1746
  %2273 = vmatpush.bf16.msra.mxu0 %v1742
  %2274 = vmatpush.bf16.msra.mxu0 %v1738
  %2275 = vmatpush.bf16.msra.mxu0 %v1734
  %2276 = vmatpush.bf16.msra.mxu0 %v1730
  %2277 = vmatmul.bf16.gmra.mxu0 %v563
  %v2278 = vpop.f32.mrf.mxu0
  %v2279 = vadd.f32 %v2266, %v2278
  %v2280 = vpop.f32.mrf.mxu0
  %2281 = vdwg.mxu0
  %2282 = vmatpush.bf16.msra.mxu0 %v1790
  %2283 = vmatpush.bf16.msra.mxu0 %v1786
  %2284 = vmatpush.bf16.msra.mxu0 %v1782
  %2285 = vmatpush.bf16.msra.mxu0 %v1778
  %2286 = vmatpush.bf16.msra.mxu0 %v1774
  %2287 = vmatpush.bf16.msra.mxu0 %v1770
  %2288 = vmatpush.bf16.msra.mxu0 %v1766
  %2289 = vmatpush.bf16.msra.mxu0 %v1762
  %2290 = vmatmul.bf16.gmra.mxu0 %v564
  %v2291 = vpop.f32.mrf.mxu0
  %v2292 = vadd.f32 %v2279, %v2291
  %v2293 = vpop.f32.mrf.mxu0
  %2294 = vdwg.mxu0
  %2295 = vmatpush.bf16.msra.mxu0 %v1822
  %2296 = vmatpush.bf16.msra.mxu0 %v1818
  %2297 = vmatpush.bf16.msra.mxu0 %v1814
  %2298 = vmatpush.bf16.msra.mxu0 %v1810
  %2299 = vmatpush.bf16.msra.mxu0 %v1806
  %2300 = vmatpush.bf16.msra.mxu0 %v1802
  %2301 = vmatpush.bf16.msra.mxu0 %v1798
  %2302 = vmatpush.bf16.msra.mxu0 %v1794
  %2303 = vmatmul.bf16.gmra.mxu0 %v565
  %v2304 = vpop.f32.mrf.mxu0
  %v2305 = vadd.f32 %v2292, %v2304
  %v2306 = vpop.f32.mrf.mxu0
  %2307 = vdwg.mxu0
  %2308 = vmatpush.bf16.msra.mxu0 %v1854
  %2309 = vmatpush.bf16.msra.mxu0 %v1850
  %2310 = vmatpush.bf16.msra.mxu0 %v1846
  %2311 = vmatpush.bf16.msra.mxu0 %v1842
  %2312 = vmatpush.bf16.msra.mxu0 %v1838
  %2313 = vmatpush.bf16.msra.mxu0 %v1834
  %2314 = vmatpush.bf16.msra.mxu0 %v1830
  %2315 = vmatpush.bf16.msra.mxu0 %v1826
  %2316 = vmatmul.bf16.gmra.mxu0 %v566
  %v2317 = vpop.f32.mrf.mxu0
  %v2318 = vadd.f32 %v2305, %v2317
  %v2319 = vpop.f32.mrf.mxu0
  %2320 = vdwg.mxu0
  %2321 = vmatpush.bf16.msra.mxu0 %v1631
  %2322 = vmatpush.bf16.msra.mxu0 %v1627
  %2323 = vmatpush.bf16.msra.mxu0 %v1623
  %2324 = vmatpush.bf16.msra.mxu0 %v1619
  %2325 = vmatpush.bf16.msra.mxu0 %v1615
  %2326 = vmatpush.bf16.msra.mxu0 %v1611
  %2327 = vmatpush.bf16.msra.mxu0 %v1607
  %2328 = vmatpush.bf16.msra.mxu0 %v1603
  %2329 = vmatmul.bf16.gmra.mxu0 %v559
  %v2330 = vpop.f32.mrf.mxu0
  %v2331 = vadd.f32 %v827, %v2330
  %v2332 = vpop.f32.mrf.mxu0
  %2333 = vdwg.mxu0
  %2334 = vmatpush.bf16.msra.mxu0 %v1663
  %2335 = vmatpush.bf16.msra.mxu0 %v1659
  %2336 = vmatpush.bf16.msra.mxu0 %v1655
  %2337 = vmatpush.bf16.msra.mxu0 %v1651
  %2338 = vmatpush.bf16.msra.mxu0 %v1647
  %2339 = vmatpush.bf16.msra.mxu0 %v1643
  %2340 = vmatpush.bf16.msra.mxu0 %v1639
  %2341 = vmatpush.bf16.msra.mxu0 %v1635
  %2342 = vmatmul.bf16.gmra.mxu0 %v560
  %v2343 = vpop.f32.mrf.mxu0
  %v2344 = vadd.f32 %v2331, %v2343
  %v2345 = vpop.f32.mrf.mxu0
  %2346 = vdwg.mxu0
  %2347 = vmatpush.bf16.msra.mxu0 %v1695
  %2348 = vmatpush.bf16.msra.mxu0 %v1691
  %2349 = vmatpush.bf16.msra.mxu0 %v1687
  %2350 = vmatpush.bf16.msra.mxu0 %v1683
  %2351 = vmatpush.bf16.msra.mxu0 %v1679
  %2352 = vmatpush.bf16.msra.mxu0 %v1675
  %2353 = vmatpush.bf16.msra.mxu0 %v1671
  %2354 = vmatpush.bf16.msra.mxu0 %v1667
  %2355 = vmatmul.bf16.gmra.mxu0 %v561
  %v2356 = vpop.f32.mrf.mxu0
  %v2357 = vadd.f32 %v2344, %v2356
  %v2358 = vpop.f32.mrf.mxu0
  %2359 = vdwg.mxu0
  %2360 = vmatpush.bf16.msra.mxu0 %v1727
  %2361 = vmatpush.bf16.msra.mxu0 %v1723
  %2362 = vmatpush.bf16.msra.mxu0 %v1719
  %2363 = vmatpush.bf16.msra.mxu0 %v1715
  %2364 = vmatpush.bf16.msra.mxu0 %v1711
  %2365 = vmatpush.bf16.msra.mxu0 %v1707
  %2366 = vmatpush.bf16.msra.mxu0 %v1703
  %2367 = vmatpush.bf16.msra.mxu0 %v1699
  %2368 = vmatmul.bf16.gmra.mxu0 %v562
  %v2369 = vpop.f32.mrf.mxu0
  %v2370 = vadd.f32 %v2357, %v2369
  %v2371 = vpop.f32.mrf.mxu0
  %2372 = vdwg.mxu0
  %2373 = vmatpush.bf16.msra.mxu0 %v1759
  %2374 = vmatpush.bf16.msra.mxu0 %v1755
  %2375 = vmatpush.bf16.msra.mxu0 %v1751
  %2376 = vmatpush.bf16.msra.mxu0 %v1747
  %2377 = vmatpush.bf16.msra.mxu0 %v1743
  %2378 = vmatpush.bf16.msra.mxu0 %v1739
  %2379 = vmatpush.bf16.msra.mxu0 %v1735
  %2380 = vmatpush.bf16.msra.mxu0 %v1731
  %2381 = vmatmul.bf16.gmra.mxu0 %v563
  %v2382 = vpop.f32.mrf.mxu0
  %v2383 = vadd.f32 %v2370, %v2382
  %v2384 = vpop.f32.mrf.mxu0
  %2385 = vdwg.mxu0
  %2386 = vmatpush.bf16.msra.mxu0 %v1791
  %2387 = vmatpush.bf16.msra.mxu0 %v1787
  %2388 = vmatpush.bf16.msra.mxu0 %v1783
  %2389 = vmatpush.bf16.msra.mxu0 %v1779
  %2390 = vmatpush.bf16.msra.mxu0 %v1775
  %2391 = vmatpush.bf16.msra.mxu0 %v1771
  %2392 = vmatpush.bf16.msra.mxu0 %v1767
  %2393 = vmatpush.bf16.msra.mxu0 %v1763
  %2394 = vmatmul.bf16.gmra.mxu0 %v564
  %v2395 = vpop.f32.mrf.mxu0
  %v2396 = vadd.f32 %v2383, %v2395
  %v2397 = vpop.f32.mrf.mxu0
  %2398 = vdwg.mxu0
  %2399 = vmatpush.bf16.msra.mxu0 %v1823
  %2400 = vmatpush.bf16.msra.mxu0 %v1819
  %2401 = vmatpush.bf16.msra.mxu0 %v1815
  %2402 = vmatpush.bf16.msra.mxu0 %v1811
  %2403 = vmatpush.bf16.msra.mxu0 %v1807
  %2404 = vmatpush.bf16.msra.mxu0 %v1803
  %2405 = vmatpush.bf16.msra.mxu0 %v1799
  %2406 = vmatpush.bf16.msra.mxu0 %v1795
  %2407 = vmatmul.bf16.gmra.mxu0 %v565
  %v2408 = vpop.f32.mrf.mxu0
  %v2409 = vadd.f32 %v2396, %v2408
  %v2410 = vpop.f32.mrf.mxu0
  %2411 = vdwg.mxu0
  %2412 = vmatpush.bf16.msra.mxu0 %v1855
  %2413 = vmatpush.bf16.msra.mxu0 %v1851
  %2414 = vmatpush.bf16.msra.mxu0 %v1847
  %2415 = vmatpush.bf16.msra.mxu0 %v1843
  %2416 = vmatpush.bf16.msra.mxu0 %v1839
  %2417 = vmatpush.bf16.msra.mxu0 %v1835
  %2418 = vmatpush.bf16.msra.mxu0 %v1831
  %2419 = vmatpush.bf16.msra.mxu0 %v1827
  %2420 = vmatmul.bf16.gmra.mxu0 %v566
  %v2421 = vpop.f32.mrf.mxu0
  %v2422 = vadd.f32 %v2409, %v2421
  %v2423 = vpop.f32.mrf.mxu0
  %2424 = vdwg.mxu0
  %2425 = vmatpush.bf16.msra.mxu0 %v1632
  %2426 = vmatpush.bf16.msra.mxu0 %v1628
  %2427 = vmatpush.bf16.msra.mxu0 %v1624
  %2428 = vmatpush.bf16.msra.mxu0 %v1620
  %2429 = vmatpush.bf16.msra.mxu0 %v1616
  %2430 = vmatpush.bf16.msra.mxu0 %v1612
  %2431 = vmatpush.bf16.msra.mxu0 %v1608
  %2432 = vmatpush.bf16.msra.mxu0 %v1604
  %2433 = vmatmul.bf16.gmra.mxu0 %v559
  %v2434 = vpop.f32.mrf.mxu0
  %v2435 = vadd.f32 %v828, %v2434
  %v2436 = vpop.f32.mrf.mxu0
  %2437 = vdwg.mxu0
  %2438 = vmatpush.bf16.msra.mxu0 %v1664
  %2439 = vmatpush.bf16.msra.mxu0 %v1660
  %2440 = vmatpush.bf16.msra.mxu0 %v1656
  %2441 = vmatpush.bf16.msra.mxu0 %v1652
  %2442 = vmatpush.bf16.msra.mxu0 %v1648
  %2443 = vmatpush.bf16.msra.mxu0 %v1644
  %2444 = vmatpush.bf16.msra.mxu0 %v1640
  %2445 = vmatpush.bf16.msra.mxu0 %v1636
  %2446 = vmatmul.bf16.gmra.mxu0 %v560
  %v2447 = vpop.f32.mrf.mxu0
  %v2448 = vadd.f32 %v2435, %v2447
  %v2449 = vpop.f32.mrf.mxu0
  %2450 = vdwg.mxu0
  %2451 = vmatpush.bf16.msra.mxu0 %v1696
  %2452 = vmatpush.bf16.msra.mxu0 %v1692
  %2453 = vmatpush.bf16.msra.mxu0 %v1688
  %2454 = vmatpush.bf16.msra.mxu0 %v1684
  %2455 = vmatpush.bf16.msra.mxu0 %v1680
  %2456 = vmatpush.bf16.msra.mxu0 %v1676
  %2457 = vmatpush.bf16.msra.mxu0 %v1672
  %2458 = vmatpush.bf16.msra.mxu0 %v1668
  %2459 = vmatmul.bf16.gmra.mxu0 %v561
  %v2460 = vpop.f32.mrf.mxu0
  %v2461 = vadd.f32 %v2448, %v2460
  %v2462 = vpop.f32.mrf.mxu0
  %2463 = vdwg.mxu0
  %2464 = vmatpush.bf16.msra.mxu0 %v1728
  %2465 = vmatpush.bf16.msra.mxu0 %v1724
  %2466 = vmatpush.bf16.msra.mxu0 %v1720
  %2467 = vmatpush.bf16.msra.mxu0 %v1716
  %2468 = vmatpush.bf16.msra.mxu0 %v1712
  %2469 = vmatpush.bf16.msra.mxu0 %v1708
  %2470 = vmatpush.bf16.msra.mxu0 %v1704
  %2471 = vmatpush.bf16.msra.mxu0 %v1700
  %2472 = vmatmul.bf16.gmra.mxu0 %v562
  %v2473 = vpop.f32.mrf.mxu0
  %v2474 = vadd.f32 %v2461, %v2473
  %v2475 = vpop.f32.mrf.mxu0
  %2476 = vdwg.mxu0
  %2477 = vmatpush.bf16.msra.mxu0 %v1760
  %2478 = vmatpush.bf16.msra.mxu0 %v1756
  %2479 = vmatpush.bf16.msra.mxu0 %v1752
  %2480 = vmatpush.bf16.msra.mxu0 %v1748
  %2481 = vmatpush.bf16.msra.mxu0 %v1744
  %2482 = vmatpush.bf16.msra.mxu0 %v1740
  %2483 = vmatpush.bf16.msra.mxu0 %v1736
  %2484 = vmatpush.bf16.msra.mxu0 %v1732
  %2485 = vmatmul.bf16.gmra.mxu0 %v563
  %v2486 = vpop.f32.mrf.mxu0
  %v2487 = vadd.f32 %v2474, %v2486
  %v2488 = vpop.f32.mrf.mxu0
  %2489 = vdwg.mxu0
  %2490 = vmatpush.bf16.msra.mxu0 %v1792
  %2491 = vmatpush.bf16.msra.mxu0 %v1788
  %2492 = vmatpush.bf16.msra.mxu0 %v1784
  %2493 = vmatpush.bf16.msra.mxu0 %v1780
  %2494 = vmatpush.bf16.msra.mxu0 %v1776
  %2495 = vmatpush.bf16.msra.mxu0 %v1772
  %2496 = vmatpush.bf16.msra.mxu0 %v1768
  %2497 = vmatpush.bf16.msra.mxu0 %v1764
  %2498 = vmatmul.bf16.gmra.mxu0 %v564
  %v2499 = vpop.f32.mrf.mxu0
  %v2500 = vadd.f32 %v2487, %v2499
  %v2501 = vpop.f32.mrf.mxu0
  %2502 = vdwg.mxu0
  %2503 = vmatpush.bf16.msra.mxu0 %v1824
  %2504 = vmatpush.bf16.msra.mxu0 %v1820
  %2505 = vmatpush.bf16.msra.mxu0 %v1816
  %2506 = vmatpush.bf16.msra.mxu0 %v1812
  %2507 = vmatpush.bf16.msra.mxu0 %v1808
  %2508 = vmatpush.bf16.msra.mxu0 %v1804
  %2509 = vmatpush.bf16.msra.mxu0 %v1800
  %2510 = vmatpush.bf16.msra.mxu0 %v1796
  %2511 = vmatmul.bf16.gmra.mxu0 %v565
  %v2512 = vpop.f32.mrf.mxu0
  %v2513 = vadd.f32 %v2500, %v2512
  %v2514 = vpop.f32.mrf.mxu0
  %2515 = vdwg.mxu0
  %2516 = vmatpush.bf16.msra.mxu0 %v1856
  %2517 = vmatpush.bf16.msra.mxu0 %v1852
  %2518 = vmatpush.bf16.msra.mxu0 %v1848
  %2519 = vmatpush.bf16.msra.mxu0 %v1844
  %2520 = vmatpush.bf16.msra.mxu0 %v1840
  %2521 = vmatpush.bf16.msra.mxu0 %v1836
  %2522 = vmatpush.bf16.msra.mxu0 %v1832
  %2523 = vmatpush.bf16.msra.mxu0 %v1828
  %2524 = vmatmul.bf16.gmra.mxu0 %v566
  %v2525 = vpop.f32.mrf.mxu0
  %v2526 = vadd.f32 %v2513, %v2525
  %v2527 = vpop.f32.mrf.mxu0
  %2528 = vdwg.mxu0
  %v2529 = vmax.f32 %v2214, 0.0
  %v2530 = vmax.f32 %v2318, 0.0
  %v2531 = vmax.f32 %v2422, 0.0
  %v2532 = vmax.f32 %v2526, 0.0
  %v2533 = vpack.c.bf16 %v2529, %v2529
  %v2534 = vpack.c.bf16 %v2530, %v2530
  %v2535 = vpack.c.bf16 %v2531, %v2531
  %v2536 = vpack.c.bf16 %v2532, %v2532
  %v2537 = vld [vmem:[%s5] sm:$0xff]
  %v2538 = vld [vmem:[%s5 + $0x8] sm:$0xff]
  %v2539 = vld [vmem:[%s5 + $0x10] sm:$0xff]
  %v2540 = vld [vmem:[%s5 + $0x18] sm:$0xff]
  %v2541 = vld [vmem:[%s5 + $0x20] sm:$0xff]
  %v2542 = vld [vmem:[%s5 + $0x28] sm:$0xff]
  %v2543 = vld [vmem:[%s5 + $0x30] sm:$0xff]
  %v2544 = vld [vmem:[%s5 + $0x38] sm:$0xff]
  %v2545 = vld [vmem:[%s5 + $0x40] sm:$0xff]
  %v2546 = vld [vmem:[%s5 + $0x48] sm:$0xff]
  %v2547 = vld [vmem:[%s5 + $0x50] sm:$0xff]
  %v2548 = vld [vmem:[%s5 + $0x58] sm:$0xff]
  %v2549 = vld [vmem:[%s5 + $0x60] sm:$0xff]
  %v2550 = vld [vmem:[%s5 + $0x68] sm:$0xff]
  %v2551 = vld [vmem:[%s5 + $0x70] sm:$0xff]
  %v2552 = vld [vmem:[%s5 + $0x78] sm:$0xff]
  %v2553 = vld [vmem:[%s5 + $0x80] sm:$0xff]
  %v2554 = vld [vmem:[%s5 + $0x88] sm:$0xff]
  %v2555 = vld [vmem:[%s5 + $0x90] sm:$0xff]
  %v2556 = vld [vmem:[%s5 + $0x98] sm:$0xff]
  %v2557 = vld [vmem:[%s5 + $0xa0] sm:$0xff]
  %v2558 = vld [vmem:[%s5 + $0xa8] sm:$0xff]
  %v2559 = vld [vmem:[%s5 + $0xb0] sm:$0xff]
  %v2560 = vld [vmem:[%s5 + $0xb8] sm:$0xff]
  %v2561 = vld [vmem:[%s5 + $0xc0] sm:$0xff]
  %v2562 = vld [vmem:[%s5 + $0xc8] sm:$0xff]
  %v2563 = vld [vmem:[%s5 + $0xd0] sm:$0xff]
  %v2564 = vld [vmem:[%s5 + $0xd8] sm:$0xff]
  %v2565 = vld [vmem:[%s5 + $0xe0] sm:$0xff]
  %v2566 = vld [vmem:[%s5 + $0xe8] sm:$0xff]
  %v2567 = vld [vmem:[%s5 + $0xf0] sm:$0xff]
  %v2568 = vld [vmem:[%s5 + $0xf8] sm:$0xff]
  %v2569 = vld [vmem:[%s5 + $0x100] sm:$0xff]
  %v2570 = vld [vmem:[%s5 + $0x108] sm:$0xff]
  %v2571 = vld [vmem:[%s5 + $0x110] sm:$0xff]
  %v2572 = vld [vmem:[%s5 + $0x118] sm:$0xff]
  %v2573 = vld [vmem:[%s5 + $0x120] sm:$0xff]
  %v2574 = vld [vmem:[%s5 + $0x128] sm:$0xff]
  %v2575 = vld [vmem:[%s5 + $0x130] sm:$0xff]
  %v2576 = vld [vmem:[%s5 + $0x138] sm:$0xff]
  %v2577 = vld [vmem:[%s5 + $0x140] sm:$0xff]
  %v2578 = vld [vmem:[%s5 + $0x148] sm:$0xff]
  %v2579 = vld [vmem:[%s5 + $0x150] sm:$0xff]
  %v2580 = vld [vmem:[%s5 + $0x158] sm:$0xff]
  %v2581 = vld [vmem:[%s5 + $0x160] sm:$0xff]
  %v2582 = vld [vmem:[%s5 + $0x168] sm:$0xff]
  %v2583 = vld [vmem:[%s5 + $0x170] sm:$0xff]
  %v2584 = vld [vmem:[%s5 + $0x178] sm:$0xff]
  %v2585 = vld [vmem:[%s5 + $0x180] sm:$0xff]
  %v2586 = vld [vmem:[%s5 + $0x188] sm:$0xff]
  %v2587 = vld [vmem:[%s5 + $0x190] sm:$0xff]
  %v2588 = vld [vmem:[%s5 + $0x198] sm:$0xff]
  %v2589 = vld [vmem:[%s5 + $0x1a0] sm:$0xff]
  %v2590 = vld [vmem:[%s5 + $0x1a8] sm:$0xff]
  %v2591 = vld [vmem:[%s5 + $0x1b0] sm:$0xff]
  %v2592 = vld [vmem:[%s5 + $0x1b8] sm:$0xff]
  %v2593 = vld [vmem:[%s5 + $0x1c0] sm:$0xff]
  %v2594 = vld [vmem:[%s5 + $0x1c8] sm:$0xff]
  %v2595 = vld [vmem:[%s5 + $0x1d0] sm:$0xff]
  %v2596 = vld [vmem:[%s5 + $0x1d8] sm:$0xff]
  %v2597 = vld [vmem:[%s5 + $0x1e0] sm:$0xff]
  %v2598 = vld [vmem:[%s5 + $0x1e8] sm:$0xff]
  %v2599 = vld [vmem:[%s5 + $0x1f0] sm:$0xff]
  %v2600 = vld [vmem:[%s5 + $0x1f8] sm:$0xff]
  %v2601 = vld [vmem:[%s6] sm:$0x3]
  %v2603 = vperm.slane %v2601, 0
  %v2604 = vperm.slane %v2601, 1
  %v2671 = vunpack.c.l.b16 %v2537
  %v2672 = vunpack.c.h.b16 %v2537
  %v2673 = vunpack.c.l.b16 %v2538
  %v2674 = vunpack.c.h.b16 %v2538
  %v2675 = vunpack.c.l.b16 %v2539
  %v2676 = vunpack.c.h.b16 %v2539
  %v2677 = vunpack.c.l.b16 %v2540
  %v2678 = vunpack.c.h.b16 %v2540
  %v2679 = vunpack.c.l.b16 %v2541
  %v2680 = vunpack.c.h.b16 %v2541
  %v2681 = vunpack.c.l.b16 %v2542
  %v2682 = vunpack.c.h.b16 %v2542
  %v2683 = vunpack.c.l.b16 %v2543
  %v2684 = vunpack.c.h.b16 %v2543
  %v2685 = vunpack.c.l.b16 %v2544
  %v2686 = vunpack.c.h.b16 %v2544
  %v2687 = vunpack.c.l.b16 %v2545
  %v2688 = vunpack.c.h.b16 %v2545
  %v2689 = vunpack.c.l.b16 %v2546
  %v2690 = vunpack.c.h.b16 %v2546
  %v2691 = vunpack.c.l.b16 %v2547
  %v2692 = vunpack.c.h.b16 %v2547
  %v2693 = vunpack.c.l.b16 %v2548
  %v2694 = vunpack.c.h.b16 %v2548
  %v2695 = vunpack.c.l.b16 %v2549
  %v2696 = vunpack.c.h.b16 %v2549
  %v2697 = vunpack.c.l.b16 %v2550
  %v2698 = vunpack.c.h.b16 %v2550
  %v2699 = vunpack.c.l.b16 %v2551
  %v2700 = vunpack.c.h.b16 %v2551
  %v2701 = vunpack.c.l.b16 %v2552
  %v2702 = vunpack.c.h.b16 %v2552
  %v2703 = vunpack.c.l.b16 %v2553
  %v2704 = vunpack.c.h.b16 %v2553
  %v2705 = vunpack.c.l.b16 %v2554
  %v2706 = vunpack.c.h.b16 %v2554
  %v2707 = vunpack.c.l.b16 %v2555
  %v2708 = vunpack.c.h.b16 %v2555
  %v2709 = vunpack.c.l.b16 %v2556
  %v2710 = vunpack.c.h.b16 %v2556
  %v2711 = vunpack.c.l.b16 %v2557
  %v2712 = vunpack.c.h.b16 %v2557
  %v2713 = vunpack.c.l.b16 %v2558
  %v2714 = vunpack.c.h.b16 %v2558
  %v2715 = vunpack.c.l.b16 %v2559
  %v2716 = vunpack.c.h.b16 %v2559
  %v2717 = vunpack.c.l.b16 %v2560
  %v2718 = vunpack.c.h.b16 %v2560
  %v2719 = vunpack.c.l.b16 %v2561
  %v2720 = vunpack.c.h.b16 %v2561
  %v2721 = vunpack.c.l.b16 %v2562
  %v2722 = vunpack.c.h.b16 %v2562
  %v2723 = vunpack.c.l.b16 %v2563
  %v2724 = vunpack.c.h.b16 %v2563
  %v2725 = vunpack.c.l.b16 %v2564
  %v2726 = vunpack.c.h.b16 %v2564
  %v2727 = vunpack.c.l.b16 %v2565
  %v2728 = vunpack.c.h.b16 %v2565
  %v2729 = vunpack.c.l.b16 %v2566
  %v2730 = vunpack.c.h.b16 %v2566
  %v2731 = vunpack.c.l.b16 %v2567
  %v2732 = vunpack.c.h.b16 %v2567
  %v2733 = vunpack.c.l.b16 %v2568
  %v2734 = vunpack.c.h.b16 %v2568
  %v2735 = vunpack.c.l.b16 %v2569
  %v2736 = vunpack.c.h.b16 %v2569
  %v2737 = vunpack.c.l.b16 %v2570
  %v2738 = vunpack.c.h.b16 %v2570
  %v2739 = vunpack.c.l.b16 %v2571
  %v2740 = vunpack.c.h.b16 %v2571
  %v2741 = vunpack.c.l.b16 %v2572
  %v2742 = vunpack.c.h.b16 %v2572
  %v2743 = vunpack.c.l.b16 %v2573
  %v2744 = vunpack.c.h.b16 %v2573
  %v2745 = vunpack.c.l.b16 %v2574
  %v2746 = vunpack.c.h.b16 %v2574
  %v2747 = vunpack.c.l.b16 %v2575
  %v2748 = vunpack.c.h.b16 %v2575
  %v2749 = vunpack.c.l.b16 %v2576
  %v2750 = vunpack.c.h.b16 %v2576
  %v2751 = vunpack.c.l.b16 %v2577
  %v2752 = vunpack.c.h.b16 %v2577
  %v2753 = vunpack.c.l.b16 %v2578
  %v2754 = vunpack.c.h.b16 %v2578
  %v2755 = vunpack.c.l.b16 %v2579
  %v2756 = vunpack.c.h.b16 %v2579
  %v2757 = vunpack.c.l.b16 %v2580
  %v2758 = vunpack.c.h.b16 %v2580
  %v2759 = vunpack.c.l.b16 %v2581
  %v2760 = vunpack.c.h.b16 %v2581
  %v2761 = vunpack.c.l.b16 %v2582
  %v2762 = vunpack.c.h.b16 %v2582
  %v2763 = vunpack.c.l.b16 %v2583
  %v2764 = vunpack.c.h.b16 %v2583
  %v2765 = vunpack.c.l.b16 %v2584
  %v2766 = vunpack.c.h.b16 %v2584
  %v2767 = vunpack.c.l.b16 %v2585
  %v2768 = vunpack.c.h.b16 %v2585
  %v2769 = vunpack.c.l.b16 %v2586
  %v2770 = vunpack.c.h.b16 %v2586
  %v2771 = vunpack.c.l.b16 %v2587
  %v2772 = vunpack.c.h.b16 %v2587
  %v2773 = vunpack.c.l.b16 %v2588
  %v2774 = vunpack.c.h.b16 %v2588
  %v2775 = vunpack.c.l.b16 %v2589
  %v2776 = vunpack.c.h.b16 %v2589
  %v2777 = vunpack.c.l.b16 %v2590
  %v2778 = vunpack.c.h.b16 %v2590
  %v2779 = vunpack.c.l.b16 %v2591
  %v2780 = vunpack.c.h.b16 %v2591
  %v2781 = vunpack.c.l.b16 %v2592
  %v2782 = vunpack.c.h.b16 %v2592
  %v2783 = vunpack.c.l.b16 %v2593
  %v2784 = vunpack.c.h.b16 %v2593
  %v2785 = vunpack.c.l.b16 %v2594
  %v2786 = vunpack.c.h.b16 %v2594
  %v2787 = vunpack.c.l.b16 %v2595
  %v2788 = vunpack.c.h.b16 %v2595
  %v2789 = vunpack.c.l.b16 %v2596
  %v2790 = vunpack.c.h.b16 %v2596
  %v2791 = vunpack.c.l.b16 %v2597
  %v2792 = vunpack.c.h.b16 %v2597
  %v2793 = vunpack.c.l.b16 %v2598
  %v2794 = vunpack.c.h.b16 %v2598
  %v2795 = vunpack.c.l.b16 %v2599
  %v2796 = vunpack.c.h.b16 %v2599
  %v2797 = vunpack.c.l.b16 %v2600
  %v2798 = vunpack.c.h.b16 %v2600
  %v2799 = vpack.c.b16 %v2673, %v2671
  %v2800 = vpack.c.b16 %v2674, %v2672
  %v2801 = vpack.c.b16 %v2677, %v2675
  %v2802 = vpack.c.b16 %v2678, %v2676
  %v2803 = vpack.c.b16 %v2681, %v2679
  %v2804 = vpack.c.b16 %v2682, %v2680
  %v2805 = vpack.c.b16 %v2685, %v2683
  %v2806 = vpack.c.b16 %v2686, %v2684
  %v2807 = vpack.c.b16 %v2689, %v2687
  %v2808 = vpack.c.b16 %v2690, %v2688
  %v2809 = vpack.c.b16 %v2693, %v2691
  %v2810 = vpack.c.b16 %v2694, %v2692
  %v2811 = vpack.c.b16 %v2697, %v2695
  %v2812 = vpack.c.b16 %v2698, %v2696
  %v2813 = vpack.c.b16 %v2701, %v2699
  %v2814 = vpack.c.b16 %v2702, %v2700
  %v2815 = vpack.c.b16 %v2705, %v2703
  %v2816 = vpack.c.b16 %v2706, %v2704
  %v2817 = vpack.c.b16 %v2709, %v2707
  %v2818 = vpack.c.b16 %v2710, %v2708
  %v2819 = vpack.c.b16 %v2713, %v2711
  %v2820 = vpack.c.b16 %v2714, %v2712
  %v2821 = vpack.c.b16 %v2717, %v2715
  %v2822 = vpack.c.b16 %v2718, %v2716
  %v2823 = vpack.c.b16 %v2721, %v2719
  %v2824 = vpack.c.b16 %v2722, %v2720
  %v2825 = vpack.c.b16 %v2725, %v2723
  %v2826 = vpack.c.b16 %v2726, %v2724
  %v2827 = vpack.c.b16 %v2729, %v2727
  %v2828 = vpack.c.b16 %v2730, %v2728
  %v2829 = vpack.c.b16 %v2733, %v2731
  %v2830 = vpack.c.b16 %v2734, %v2732
  %v2831 = vpack.c.b16 %v2737, %v2735
  %v2832 = vpack.c.b16 %v2738, %v2736
  %v2833 = vpack.c.b16 %v2741, %v2739
  %v2834 = vpack.c.b16 %v2742, %v2740
  %v2835 = vpack.c.b16 %v2745, %v2743
  %v2836 = vpack.c.b16 %v2746, %v2744
  %v2837 = vpack.c.b16 %v2749, %v2747
  %v2838 = vpack.c.b16 %v2750, %v2748
  %v2839 = vpack.c.b16 %v2753, %v2751
  %v2840 = vpack.c.b16 %v2754, %v2752
  %v2841 = vpack.c.b16 %v2757, %v2755
  %v2842 = vpack.c.b16 %v2758, %v2756
  %v2843 = vpack.c.b16 %v2761, %v2759
  %v2844 = vpack.c.b16 %v2762, %v2760
  %v2845 = vpack.c.b16 %v2765, %v2763
  %v2846 = vpack.c.b16 %v2766, %v2764
  %v2847 = vpack.c.b16 %v2769, %v2767
  %v2848 = vpack.c.b16 %v2770, %v2768
  %v2849 = vpack.c.b16 %v2773, %v2771
  %v2850 = vpack.c.b16 %v2774, %v2772
  %v2851 = vpack.c.b16 %v2777, %v2775
  %v2852 = vpack.c.b16 %v2778, %v2776
  %v2853 = vpack.c.b16 %v2781, %v2779
  %v2854 = vpack.c.b16 %v2782, %v2780
  %v2855 = vpack.c.b16 %v2785, %v2783
  %v2856 = vpack.c.b16 %v2786, %v2784
  %v2857 = vpack.c.b16 %v2789, %v2787
  %v2858 = vpack.c.b16 %v2790, %v2788
  %v2859 = vpack.c.b16 %v2793, %v2791
  %v2860 = vpack.c.b16 %v2794, %v2792
  %v2861 = vpack.c.b16 %v2797, %v2795
  %v2862 = vpack.c.b16 %v2798, %v2796
  %2927 = vmatpush.bf16.msra.mxu0 %v2813
  %2928 = vmatpush.bf16.msra.mxu0 %v2811
  %2929 = vmatpush.bf16.msra.mxu0 %v2809
  %2930 = vmatpush.bf16.msra.mxu0 %v2807
  %2931 = vmatpush.bf16.msra.mxu0 %v2805
  %2932 = vmatpush.bf16.msra.mxu0 %v2803
  %2933 = vmatpush.bf16.msra.mxu0 %v2801
  %2934 = vmatpush.bf16.msra.mxu0 %v2799
  %2935 = vmatmul.bf16.gmra.mxu0 %v2533
  %v2936 = vpop.f32.mrf.mxu0
  %v2937 = vadd.f32 %v2603, %v2936
  %v2938 = vpop.f32.mrf.mxu0
  %2939 = vdwg.mxu0
  %2940 = vmatpush.bf16.msra.mxu0 %v2829
  %2941 = vmatpush.bf16.msra.mxu0 %v2827
  %2942 = vmatpush.bf16.msra.mxu0 %v2825
  %2943 = vmatpush.bf16.msra.mxu0 %v2823
  %2944 = vmatpush.bf16.msra.mxu0 %v2821
  %2945 = vmatpush.bf16.msra.mxu0 %v2819
  %2946 = vmatpush.bf16.msra.mxu0 %v2817
  %2947 = vmatpush.bf16.msra.mxu0 %v2815
  %2948 = vmatmul.bf16.gmra.mxu0 %v2534
  %v2949 = vpop.f32.mrf.mxu0
  %v2950 = vadd.f32 %v2937, %v2949
  %v2951 = vpop.f32.mrf.mxu0
  %2952 = vdwg.mxu0
  %2953 = vmatpush.bf16.msra.mxu0 %v2845
  %2954 = vmatpush.bf16.msra.mxu0 %v2843
  %2955 = vmatpush.bf16.msra.mxu0 %v2841
  %2956 = vmatpush.bf16.msra.mxu0 %v2839
  %2957 = vmatpush.bf16.msra.mxu0 %v2837
  %2958 = vmatpush.bf16.msra.mxu0 %v2835
  %2959 = vmatpush.bf16.msra.mxu0 %v2833
  %2960 = vmatpush.bf16.msra.mxu0 %v2831
  %2961 = vmatmul.bf16.gmra.mxu0 %v2535
  %v2962 = vpop.f32.mrf.mxu0
  %v2963 = vadd.f32 %v2950, %v2962
  %v2964 = vpop.f32.mrf.mxu0
  %2965 = vdwg.mxu0
  %2966 = vmatpush.bf16.msra.mxu0 %v2861
  %2967 = vmatpush.bf16.msra.mxu0 %v2859
  %2968 = vmatpush.bf16.msra.mxu0 %v2857
  %2969 = vmatpush.bf16.msra.mxu0 %v2855
  %2970 = vmatpush.bf16.msra.mxu0 %v2853
  %2971 = vmatpush.bf16.msra.mxu0 %v2851
  %2972 = vmatpush.bf16.msra.mxu0 %v2849
  %2973 = vmatpush.bf16.msra.mxu0 %v2847
  %2974 = vmatmul.bf16.gmra.mxu0 %v2536
  %v2975 = vpop.f32.mrf.mxu0
  %v2976 = vadd.f32 %v2963, %v2975
  %v2977 = vpop.f32.mrf.mxu0
  %2978 = vdwg.mxu0
  %2979 = vmatpush.bf16.msra.mxu0 %v2814
  %2980 = vmatpush.bf16.msra.mxu0 %v2812
  %2981 = vmatpush.bf16.msra.mxu0 %v2810
  %2982 = vmatpush.bf16.msra.mxu0 %v2808
  %2983 = vmatpush.bf16.msra.mxu0 %v2806
  %2984 = vmatpush.bf16.msra.mxu0 %v2804
  %2985 = vmatpush.bf16.msra.mxu0 %v2802
  %2986 = vmatpush.bf16.msra.mxu0 %v2800
  %2987 = vmatmul.bf16.gmra.mxu0 %v2533
  %v2988 = vpop.f32.mrf.mxu0
  %v2989 = vadd.f32 %v2604, %v2988
  %v2990 = vpop.f32.mrf.mxu0
  %2991 = vdwg.mxu0
  %2992 = vmatpush.bf16.msra.mxu0 %v2830
  %2993 = vmatpush.bf16.msra.mxu0 %v2828
  %2994 = vmatpush.bf16.msra.mxu0 %v2826
  %2995 = vmatpush.bf16.msra.mxu0 %v2824
  %2996 = vmatpush.bf16.msra.mxu0 %v2822
  %2997 = vmatpush.bf16.msra.mxu0 %v2820
  %2998 = vmatpush.bf16.msra.mxu0 %v2818
  %2999 = vmatpush.bf16.msra.mxu0 %v2816
  %3000 = vmatmul.bf16.gmra.mxu0 %v2534
  %v3001 = vpop.f32.mrf.mxu0
  %v3002 = vadd.f32 %v2989, %v3001
  %v3003 = vpop.f32.mrf.mxu0
  %3004 = vdwg.mxu0
  %3005 = vmatpush.bf16.msra.mxu0 %v2846
  %3006 = vmatpush.bf16.msra.mxu0 %v2844
  %3007 = vmatpush.bf16.msra.mxu0 %v2842
  %3008 = vmatpush.bf16.msra.mxu0 %v2840
  %3009 = vmatpush.bf16.msra.mxu0 %v2838
  %3010 = vmatpush.bf16.msra.mxu0 %v2836
  %3011 = vmatpush.bf16.msra.mxu0 %v2834
  %3012 = vmatpush.bf16.msra.mxu0 %v2832
  %3013 = vmatmul.bf16.gmra.mxu0 %v2535
  %v3014 = vpop.f32.mrf.mxu0
  %v3015 = vadd.f32 %v3002, %v3014
  %v3016 = vpop.f32.mrf.mxu0
  %3017 = vdwg.mxu0
  %3018 = vmatpush.bf16.msra.mxu0 %v2862
  %3019 = vmatpush.bf16.msra.mxu0 %v2860
  %3020 = vmatpush.bf16.msra.mxu0 %v2858
  %3021 = vmatpush.bf16.msra.mxu0 %v2856
  %3022 = vmatpush.bf16.msra.mxu0 %v2854
  %3023 = vmatpush.bf16.msra.mxu0 %v2852
  %3024 = vmatpush.bf16.msra.mxu0 %v2850
  %3025 = vmatpush.bf16.msra.mxu0 %v2848
  %3026 = vmatmul.bf16.gmra.mxu0 %v2536
  %v3027 = vpop.f32.mrf.mxu0
  %v3028 = vadd.f32 %v3015, %v3027
  %v3029 = vpop.f32.mrf.mxu0
  %3030 = vdwg.mxu0
  %v3031 = vmax.f32 %v2976, 0.0
  %v3032 = vmax.f32 %v3028, 0.0
  %v3033 = vpack.c.bf16 %v3031, %v3031
  %v3034 = vpack.c.bf16 %v3032, %v3032
  %v3035 = vld [vmem:[%s7] sm:$0xf]
  %v3036 = vld [vmem:[%s7 + $0x4] sm:$0xf]
  %v3037 = vld [vmem:[%s7 + $0x8] sm:$0xf]
  %v3038 = vld [vmem:[%s7 + $0xc] sm:$0xf]
  %v3039 = vld [vmem:[%s7 + $0x10] sm:$0xf]
  %v3040 = vld [vmem:[%s7 + $0x14] sm:$0xf]
  %v3041 = vld [vmem:[%s7 + $0x18] sm:$0xf]
  %v3042 = vld [vmem:[%s7 + $0x1c] sm:$0xf]
  %v3043 = vld [vmem:[%s7 + $0x20] sm:$0xf]
  %v3044 = vld [vmem:[%s7 + $0x24] sm:$0xf]
  %v3045 = vld [vmem:[%s7 + $0x28] sm:$0xf]
  %v3046 = vld [vmem:[%s7 + $0x2c] sm:$0xf]
  %v3047 = vld [vmem:[%s7 + $0x30] sm:$0xf]
  %v3048 = vld [vmem:[%s7 + $0x34] sm:$0xf]
  %v3049 = vld [vmem:[%s7 + $0x38] sm:$0xf]
  %v3050 = vld [vmem:[%s7 + $0x3c] sm:$0xf]
  %v3051 = vld [vmem:[%s7 + $0x40] sm:$0xf]
  %v3052 = vld [vmem:[%s7 + $0x44] sm:$0xf]
  %v3053 = vld [vmem:[%s7 + $0x48] sm:$0xf]
  %v3054 = vld [vmem:[%s7 + $0x4c] sm:$0xf]
  %v3055 = vld [vmem:[%s7 + $0x50] sm:$0xf]
  %v3056 = vld [vmem:[%s7 + $0x54] sm:$0xf]
  %v3057 = vld [vmem:[%s7 + $0x58] sm:$0xf]
  %v3058 = vld [vmem:[%s7 + $0x5c] sm:$0xf]
  %v3059 = vld [vmem:[%s7 + $0x60] sm:$0xf]
  %v3060 = vld [vmem:[%s7 + $0x64] sm:$0xf]
  %v3061 = vld [vmem:[%s7 + $0x68] sm:$0xf]
  %v3062 = vld [vmem:[%s7 + $0x6c] sm:$0xf]
  %v3063 = vld [vmem:[%s7 + $0x70] sm:$0xf]
  %v3064 = vld [vmem:[%s7 + $0x74] sm:$0xf]
  %v3065 = vld [vmem:[%s7 + $0x78] sm:$0xf]
  %v3066 = vld [vmem:[%s7 + $0x7c] sm:$0xf]
  %v3067 = vld [vmem:[%s8] sm:$0x1]
  %v3069 = vperm.slane %v3067, 0
  %v3103 = vunpack.c.l.b16 %v3035
  %v3104 = vunpack.c.l.b16 %v3036
  %v3105 = vunpack.c.l.b16 %v3037
  %v3106 = vunpack.c.l.b16 %v3038
  %v3107 = vunpack.c.l.b16 %v3039
  %v3108 = vunpack.c.l.b16 %v3040
  %v3109 = vunpack.c.l.b16 %v3041
  %v3110 = vunpack.c.l.b16 %v3042
  %v3111 = vunpack.c.l.b16 %v3043
  %v3112 = vunpack.c.l.b16 %v3044
  %v3113 = vunpack.c.l.b16 %v3045
  %v3114 = vunpack.c.l.b16 %v3046
  %v3115 = vunpack.c.l.b16 %v3047
  %v3116 = vunpack.c.l.b16 %v3048
  %v3117 = vunpack.c.l.b16 %v3049
  %v3118 = vunpack.c.l.b16 %v3050
  %v3119 = vunpack.c.l.b16 %v3051
  %v3120 = vunpack.c.l.b16 %v3052
  %v3121 = vunpack.c.l.b16 %v3053
  %v3122 = vunpack.c.l.b16 %v3054
  %v3123 = vunpack.c.l.b16 %v3055
  %v3124 = vunpack.c.l.b16 %v3056
  %v3125 = vunpack.c.l.b16 %v3057
  %v3126 = vunpack.c.l.b16 %v3058
  %v3127 = vunpack.c.l.b16 %v3059
  %v3128 = vunpack.c.l.b16 %v3060
  %v3129 = vunpack.c.l.b16 %v3061
  %v3130 = vunpack.c.l.b16 %v3062
  %v3131 = vunpack.c.l.b16 %v3063
  %v3132 = vunpack.c.l.b16 %v3064
  %v3133 = vunpack.c.l.b16 %v3065
  %v3134 = vunpack.c.l.b16 %v3066
  %v3135 = vpack.c.b16 %v3104, %v3103
  %v3136 = vpack.c.b16 %v3106, %v3105
  %v3137 = vpack.c.b16 %v3108, %v3107
  %v3138 = vpack.c.b16 %v3110, %v3109
  %v3139 = vpack.c.b16 %v3112, %v3111
  %v3140 = vpack.c.b16 %v3114, %v3113
  %v3141 = vpack.c.b16 %v3116, %v3115
  %v3142 = vpack.c.b16 %v3118, %v3117
  %v3143 = vpack.c.b16 %v3120, %v3119
  %v3144 = vpack.c.b16 %v3122, %v3121
  %v3145 = vpack.c.b16 %v3124, %v3123
  %v3146 = vpack.c.b16 %v3126, %v3125
  %v3147 = vpack.c.b16 %v3128, %v3127
  %v3148 = vpack.c.b16 %v3130, %v3129
  %v3149 = vpack.c.b16 %v3132, %v3131
  %v3150 = vpack.c.b16 %v3134, %v3133
  %3167 = vmatpush.bf16.msra.mxu0 %v3142
  %3168 = vmatpush.bf16.msra.mxu0 %v3141
  %3169 = vmatpush.bf16.msra.mxu0 %v3140
  %3170 = vmatpush.bf16.msra.mxu0 %v3139
  %3171 = vmatpush.bf16.msra.mxu0 %v3138
  %3172 = vmatpush.bf16.msra.mxu0 %v3137
  %3173 = vmatpush.bf16.msra.mxu0 %v3136
  %3174 = vmatpush.bf16.msra.mxu0 %v3135
  %3175 = vmatmul.bf16.gmra.mxu0 %v3033
  %v3176 = vpop.f32.mrf.mxu0
  %v3177 = vadd.f32 %v3069, %v3176
  %v3178 = vpop.f32.mrf.mxu0
  %3179 = vdwg.mxu0
  %3180 = vmatpush.bf16.msra.mxu0 %v3150
  %3181 = vmatpush.bf16.msra.mxu0 %v3149
  %3182 = vmatpush.bf16.msra.mxu0 %v3148
  %3183 = vmatpush.bf16.msra.mxu0 %v3147
  %3184 = vmatpush.bf16.msra.mxu0 %v3146
  %3185 = vmatpush.bf16.msra.mxu0 %v3145
  %3186 = vmatpush.bf16.msra.mxu0 %v3144
  %3187 = vmatpush.bf16.msra.mxu0 %v3143
  %3188 = vmatmul.bf16.gmra.mxu0 %v3034
  %v3189 = vpop.f32.mrf.mxu0
  %v3190 = vadd.f32 %v3177, %v3189
  %v3191 = vpop.f32.mrf.mxu0
  %3192 = vdwg.mxu0
  %v3193 = vmax.f32 %v3190, 0.0
  %v3194 = vpack.c.bf16 %v3193, %v3193
  %v3195 = vld [vmem:[%s9] sm:$0xf]
  %v3196 = vld [vmem:[%s9 + $0x4] sm:$0xf]
  %v3197 = vld [vmem:[%s9 + $0x8] sm:$0xf]
  %v3198 = vld [vmem:[%s9 + $0xc] sm:$0xf]
  %v3199 = vld [vmem:[%s9 + $0x10] sm:$0xf]
  %v3200 = vld [vmem:[%s9 + $0x14] sm:$0xf]
  %v3201 = vld [vmem:[%s9 + $0x18] sm:$0xf]
  %v3202 = vld [vmem:[%s9 + $0x1c] sm:$0xf]
  %v3203 = vld [vmem:[%s9 + $0x20] sm:$0xf]
  %v3204 = vld [vmem:[%s9 + $0x24] sm:$0xf]
  %v3205 = vld [vmem:[%s9 + $0x28] sm:$0xf]
  %v3206 = vld [vmem:[%s9 + $0x2c] sm:$0xf]
  %v3207 = vld [vmem:[%s9 + $0x30] sm:$0xf]
  %v3208 = vld [vmem:[%s9 + $0x34] sm:$0xf]
  %v3209 = vld [vmem:[%s9 + $0x38] sm:$0xf]
  %v3210 = vld [vmem:[%s9 + $0x3c] sm:$0xf]
  %v3211 = vld [vmem:[%s10] sm:$0x1]
  %v3213 = vperm.slane %v3211, 0
  %v3231 = vunpack.c.l.b16 %v3195
  %v3232 = vunpack.c.l.b16 %v3196
  %v3233 = vunpack.c.l.b16 %v3197
  %v3234 = vunpack.c.l.b16 %v3198
  %v3235 = vunpack.c.l.b16 %v3199
  %v3236 = vunpack.c.l.b16 %v3200
  %v3237 = vunpack.c.l.b16 %v3201
  %v3238 = vunpack.c.l.b16 %v3202
  %v3239 = vunpack.c.l.b16 %v3203
  %v3240 = vunpack.c.l.b16 %v3204
  %v3241 = vunpack.c.l.b16 %v3205
  %v3242 = vunpack.c.l.b16 %v3206
  %v3243 = vunpack.c.l.b16 %v3207
  %v3244 = vunpack.c.l.b16 %v3208
  %v3245 = vunpack.c.l.b16 %v3209
  %v3246 = vunpack.c.l.b16 %v3210
  %v3247 = vpack.c.b16 %v3232, %v3231
  %v3248 = vpack.c.b16 %v3234, %v3233
  %v3249 = vpack.c.b16 %v3236, %v3235
  %v3250 = vpack.c.b16 %v3238, %v3237
  %v3251 = vpack.c.b16 %v3240, %v3239
  %v3252 = vpack.c.b16 %v3242, %v3241
  %v3253 = vpack.c.b16 %v3244, %v3243
  %v3254 = vpack.c.b16 %v3246, %v3245
  %3263 = vmatpush.bf16.msra.mxu0 %v3254
  %3264 = vmatpush.bf16.msra.mxu0 %v3253
  %3265 = vmatpush.bf16.msra.mxu0 %v3252
  %3266 = vmatpush.bf16.msra.mxu0 %v3251
  %3267 = vmatpush.bf16.msra.mxu0 %v3250
  %3268 = vmatpush.bf16.msra.mxu0 %v3249
  %3269 = vmatpush.bf16.msra.mxu0 %v3248
  %3270 = vmatpush.bf16.msra.mxu0 %v3247
  %3271 = vmatmul.bf16.gmra.mxu0 %v3194
  %v3272 = vpop.f32.mrf.mxu0
  %v3273 = vadd.f32 %v3213, %v3272
  %v3274 = vpop.f32.mrf.mxu0
  %3275 = vdwg.mxu0
  %v3276 = vmax.f32 %v3273, 0.0
  %v3277 = vpack.c.bf16 %v3276, %v3276
  %v3278 = vld [vmem:[%s11] sm:$0xf]
  %v3279 = vld [vmem:[%s11 + $0x4] sm:$0xf]
  %v3280 = vld [vmem:[%s11 + $0x8] sm:$0xf]
  %v3281 = vld [vmem:[%s11 + $0xc] sm:$0xf]
  %v3282 = vld [vmem:[%s11 + $0x10] sm:$0xf]
  %v3283 = vld [vmem:[%s11 + $0x14] sm:$0xf]
  %v3284 = vld [vmem:[%s11 + $0x18] sm:$0xf]
  %v3285 = vld [vmem:[%s11 + $0x1c] sm:$0xf]
  %v3286 = vld [vmem:[%s11 + $0x20] sm:$0xf]
  %v3287 = vld [vmem:[%s11 + $0x24] sm:$0xf]
  %v3288 = vld [vmem:[%s11 + $0x28] sm:$0xf]
  %v3289 = vld [vmem:[%s11 + $0x2c] sm:$0xf]
  %v3290 = vld [vmem:[%s11 + $0x30] sm:$0xf]
  %v3291 = vld [vmem:[%s11 + $0x34] sm:$0xf]
  %v3292 = vld [vmem:[%s11 + $0x38] sm:$0xf]
  %v3293 = vld [vmem:[%s11 + $0x3c] sm:$0xf]
  %v3294 = vld [vmem:[%s12] sm:$0x1]
  %v3296 = vperm.slane %v3294, 0
  %v3314 = vunpack.c.l.b16 %v3278
  %v3315 = vunpack.c.l.b16 %v3279
  %v3316 = vunpack.c.l.b16 %v3280
  %v3317 = vunpack.c.l.b16 %v3281
  %v3318 = vunpack.c.l.b16 %v3282
  %v3319 = vunpack.c.l.b16 %v3283
  %v3320 = vunpack.c.l.b16 %v3284
  %v3321 = vunpack.c.l.b16 %v3285
  %v3322 = vunpack.c.l.b16 %v3286
  %v3323 = vunpack.c.l.b16 %v3287
  %v3324 = vunpack.c.l.b16 %v3288
  %v3325 = vunpack.c.l.b16 %v3289
  %v3326 = vunpack.c.l.b16 %v3290
  %v3327 = vunpack.c.l.b16 %v3291
  %v3328 = vunpack.c.l.b16 %v3292
  %v3329 = vunpack.c.l.b16 %v3293
  %v3330 = vpack.c.b16 %v3315, %v3314
  %v3331 = vpack.c.b16 %v3317, %v3316
  %v3332 = vpack.c.b16 %v3319, %v3318
  %v3333 = vpack.c.b16 %v3321, %v3320
  %v3334 = vpack.c.b16 %v3323, %v3322
  %v3335 = vpack.c.b16 %v3325, %v3324
  %v3336 = vpack.c.b16 %v3327, %v3326
  %v3337 = vpack.c.b16 %v3329, %v3328
  %3346 = vmatpush.bf16.msra.mxu0 %v3337
  %3347 = vmatpush.bf16.msra.mxu0 %v3336
  %3348 = vmatpush.bf16.msra.mxu0 %v3335
  %3349 = vmatpush.bf16.msra.mxu0 %v3334
  %3350 = vmatpush.bf16.msra.mxu0 %v3333
  %3351 = vmatpush.bf16.msra.mxu0 %v3332
  %3352 = vmatpush.bf16.msra.mxu0 %v3331
  %3353 = vmatpush.bf16.msra.mxu0 %v3330
  %3354 = vmatmul.bf16.gmra.mxu0 %v3277
  %v3355 = vpop.f32.mrf.mxu0
  %v3356 = vadd.f32 %v3296, %v3355
  %v3357 = vpop.f32.mrf.mxu0
  %3358 = vdwg.mxu0
  %3359 = vst [vmem:[%s13] sm:$0xff] %v3356
  // Predicated region
  $region54: #{_forward_impl.1} parent=0 // pred_check
    _
  $region55: #{_forward_impl.1} parent=0 // pred_check_branch
    %3361 = sbr.rel (0) target = $region57
  $region56: #{_forward_impl.1} parent=0 // pred_region
    _
  $region57: #{_forward_impl.1} parent=0 // pred_fallthru
    _
  // Predicated region
  $region58: #{_forward_impl.1} parent=0 // pred_check
    _
  $region59: #{_forward_impl.1} parent=0 // pred_check_branch
    %3363 = sbr.rel (0) target = $region61
  $region60: #{_forward_impl.1} parent=0 // pred_region
    _
  $region61: #{_forward_impl.1} parent=0 // pred_fallthru
    _

</llo_original>
